<compile_context>
chip_gen: v7x
topology: tpu7x:2x2x1
jax: 0.10.0
libtpu: 0.0.40
codegen_flags: <defaults>
</compile_context>

<pallas_src>
import functools

import jax
import jax.numpy as jnp
from jax import lax
from jax.experimental import pallas as pl
from jax.experimental.pallas import tpu as pltpu

EPS = 1e-5


def _residual_block_kernel(x_ref, w1_ref, g1_ref, b1_ref, w2_ref, g2_ref, b2_ref, o_ref,
                           *, H, W, nb, compute_dtype):
    # x_ref : (nb, Cin, H*W)   batch block; channels on sublanes, flat spatial on lanes
    # w1_ref: (9, Cout, Cin)   per-tap conv1 weights (tap k = dy*3 + dx), in compute_dtype
    # g1_ref, b1_ref: (Cout,1) f32 InstanceNorm1 affine
    # w2_ref: (9, Cout, Cout)  per-tap conv2 weights, in compute_dtype
    # g2_ref, b2_ref: (Cout,1) f32 InstanceNorm2 affine
    # o_ref : (nb, Cout, H*W)  lane-dense output block
    HW = H * W

    # Lane masks for the conv boundary taps (computed once; shared by both convs & all samples).
    pos = lax.broadcasted_iota(jnp.int32, (1, HW), 1)
    col = pos % W
    row_lo = pos >= W              # reading row y-1 is valid
    row_hi = pos < (H - 1) * W     # reading row y+1 is valid
    col_lo = col >= 1              # reading col x-1 is valid
    col_hi = col <= W - 2          # reading col x+1 is valid
    masks = {}
    for dy in range(3):
        for dx in range(3):
            conds = []
            if dy == 0:
                conds.append(row_lo)
            if dy == 2:
                conds.append(row_hi)
            if dx == 0:
                conds.append(col_lo)
            if dx == 2:
                conds.append(col_hi)
            m = None
            for c in conds:
                m = c if m is None else jnp.logical_and(m, c)
            masks[(dy, dx)] = m

    def conv3x3(vb, w_ref):
        # vb: (C, HW) in compute_dtype.  Nine per-tap matmuls accumulated in f32; shifted taps
        # come from XLU lane rolls (overlap the MXU) + boundary masks.  No im2col slab.
        acc = None
        for dy in range(3):
            for dx in range(3):
                k = dy * 3 + dx
                off = (dy - 1) * W + (dx - 1)              # want tap[:, p] == vb[:, p + off]
                t = vb if off == 0 else pltpu.roll(vb, (-off) % HW, axis=1)
                m = masks[(dy, dx)]
                if m is not None:
                    t = jnp.where(m, t, jnp.zeros_like(t))  # zero positions that read padding
                p = jnp.dot(w_ref[k], t, preferred_element_type=jnp.float32)
                acc = p if acc is None else acc + p
        return acc                                          # (Cout, HW) f32

    def instance_norm(v, g, b):
        # Per-(sample, channel) stats, biased variance, fused affine scale/shift.  All f32.
        mean = jnp.mean(v, axis=1, keepdims=True)
        c = v - mean
        var = jnp.mean(c * c, axis=1, keepdims=True)
        scale = g * lax.rsqrt(var + EPS)                    # (Cout, 1); rsqrt lands on the EUP
        return c * scale + b

    g1 = g1_ref[...]
    b1 = b1_ref[...]
    g2 = g2_ref[...]
    b2 = b2_ref[...]

    for s in range(nb):                                     # static, unrolled batch sub-block
        x = x_ref[s].astype(jnp.float32)                    # (Cin, HW) f32 (skip path precision)
        h = instance_norm(conv3x3(x.astype(compute_dtype), w1_ref), g1, b1)
        h = jnp.maximum(h, 0.0)                             # ReLU
        y = instance_norm(conv3x3(h.astype(compute_dtype), w2_ref), g2, b2)
        o_ref[s] = (x + y).astype(o_ref.dtype)              # residual add; lane-dense store


def residual_block_pallas(x_nchw, w1_pt, g1, b1, w2_pt, g2, b2, *,
                          compute_dtype=jnp.bfloat16, samples_per_step=None):
    """x_nchw: (N, Cin, H, W); conv weights in PyTorch layout (Cout, Cin, 3, 3).

    compute_dtype: dtype of the conv matmul operands (MXU is bf16-native); accumulation and
    InstanceNorm statistics stay in f32.
    samples_per_step: batch samples per grid step.  Defaults to the largest divisor of N that
    still leaves >= 2 parallel grid steps (amortizes per-step overhead at small shapes while
    keeping both v7x TensorCores fed).
    """
    N, Cin, H, W = x_nchw.shape
    Cout = w1_pt.shape[0]
    if Cin != Cout:
        raise ValueError("ResidualBlock requires dim_in == dim_out for the skip connection")
    HW = H * W

    if samples_per_step is None:
        samples_per_step = max(
            (d for d in range(1, N + 1) if N % d == 0 and N // d >= 2), default=N)
    nb = samples_per_step
    if N % nb != 0:
        raise ValueError("samples_per_step must divide the batch size")

    # Flat NC(H*W) views in and out: free reshapes, no transposes of the activations.
    x_flat = x_nchw.reshape(N, Cin, HW)
    # (Cout, Cin, 3, 3) -> (9, Cout, Cin) per-tap weights (tap k = dy*3 + dx), pre-cast to the
    # MXU compute dtype.
    w1 = jnp.transpose(w1_pt, (2, 3, 0, 1)).reshape(9, Cout, Cin).astype(compute_dtype)
    w2 = jnp.transpose(w2_pt, (2, 3, 0, 1)).reshape(9, Cout, Cout).astype(compute_dtype)
    g1c = g1.reshape(Cout, 1).astype(jnp.float32)
    b1c = b1.reshape(Cout, 1).astype(jnp.float32)
    g2c = g2.reshape(Cout, 1).astype(jnp.float32)
    b2c = b2.reshape(Cout, 1).astype(jnp.float32)

    kernel = functools.partial(_residual_block_kernel, H=H, W=W, nb=nb,
                               compute_dtype=compute_dtype)

    out_flat = pl.pallas_call(
        kernel,
        out_shape=jax.ShapeDtypeStruct((N, Cout, HW), x_nchw.dtype),
        grid_spec=pltpu.PrefetchScalarGridSpec(
            num_scalar_prefetch=0,
            grid=(N // nb,),
            in_specs=[
                pl.BlockSpec((nb, Cin, HW), lambda n: (n, 0, 0)),
                pl.BlockSpec((9, Cout, Cin), lambda n: (0, 0, 0)),
                pl.BlockSpec((Cout, 1), lambda n: (0, 0)),
                pl.BlockSpec((Cout, 1), lambda n: (0, 0)),
                pl.BlockSpec((9, Cout, Cout), lambda n: (0, 0, 0)),
                pl.BlockSpec((Cout, 1), lambda n: (0, 0)),
                pl.BlockSpec((Cout, 1), lambda n: (0, 0)),
            ],
            out_specs=pl.BlockSpec((nb, Cout, HW), lambda n: (n, 0, 0)),
        ),
        compiler_params=pltpu.CompilerParams(dimension_semantics=("parallel",)),
    )(x_flat, w1, g1c, b1c, w2, g2c, b2c)

    return out_flat.reshape(N, Cout, H, W)


def residual_block_reference(x, w1, g1, b1, w2, g2, b2):
    """Pure-JAX reference matching PyTorch semantics (for validation)."""
    def conv(v, w):
        return lax.conv_general_dilated(
            v, w, window_strides=(1, 1), padding="SAME",
            dimension_numbers=("NCHW", "OIHW", "NCHW"))

    def inorm(v, g, b):
        m = jnp.mean(v, axis=(2, 3), keepdims=True)
        s = jnp.mean(jnp.square(v - m), axis=(2, 3), keepdims=True)
        return (v - m) * lax.rsqrt(s + EPS) * g.reshape(1, -1, 1, 1) + b.reshape(1, -1, 1, 1)

    h = jnp.maximum(inorm(conv(x, w1), g1, b1), 0.0)
    return x + inorm(conv(h, w2), g2, b2)


if __name__ == "__main__":
    # Small shapes consistent with the Generator's residual stage (dim_in == dim_out).
    N, C, H, W = 4, 8, 16, 16
    key = jax.random.PRNGKey(0)
    kx, kw1, kw2, kg1, kb1, kg2, kb2 = jax.random.split(key, 7)

    x = jax.random.normal(kx, (N, C, H, W), jnp.float32)
    w1 = 0.1 * jax.random.normal(kw1, (C, C, 3, 3), jnp.float32)
    w2 = 0.1 * jax.random.normal(kw2, (C, C, 3, 3), jnp.float32)
    g1 = 1.0 + 0.1 * jax.random.normal(kg1, (C,), jnp.float32)
    b1 = 0.1 * jax.random.normal(kb1, (C,), jnp.float32)
    g2 = 1.0 + 0.1 * jax.random.normal(kg2, (C,), jnp.float32)
    b2 = 0.1 * jax.random.normal(kb2, (C,), jnp.float32)

    ref = residual_block_reference(x, w1, g1, b1, w2, g2, b2)

    # 1) f32 compute path: tight check of the roll/mask/per-tap-accumulation structure.
    out_f32 = jax.block_until_ready(
        residual_block_pallas(x, w1, g1, b1, w2, g2, b2, compute_dtype=jnp.float32))
    assert out_f32.shape == (N, C, H, W), out_f32.shape
    err_f32 = float(jnp.max(jnp.abs(out_f32 - ref)))
    assert jnp.allclose(out_f32, ref, atol=2e-3, rtol=2e-3), f"f32 max abs err = {err_f32}"

    # 2) default bf16 MXU path (f32 accumulation + f32 InstanceNorm): bf16-level tolerance.
    out = jax.block_until_ready(residual_block_pallas(x, w1, g1, b1, w2, g2, b2))
    assert out.shape == (N, C, H, W), out.shape
    err_bf16 = float(jnp.max(jnp.abs(out - ref)))
    assert jnp.allclose(out, ref, atol=6e-2, rtol=6e-2), f"bf16 max abs err = {err_bf16}"

    print("KERNEL_OK")
</pallas_src>

<mosaic_0001>
module attributes {stable_mosaic.version = 11 : i64} {
  func.func @_residual_block_kernel(%arg0: i32, %arg1: memref<2x8x256xf32, #tpu.memory_space<vmem>>, %arg2: memref<9x8x8xf32, #tpu.memory_space<vmem>>, %arg3: memref<8x1xf32, #tpu.memory_space<vmem>>, %arg4: memref<8x1xf32, #tpu.memory_space<vmem>>, %arg5: memref<9x8x8xf32, #tpu.memory_space<vmem>>, %arg6: memref<8x1xf32, #tpu.memory_space<vmem>>, %arg7: memref<8x1xf32, #tpu.memory_space<vmem>>, %arg8: memref<2x8x256xf32, #tpu.memory_space<vmem>>) attributes {dimension_semantics = [#tpu.dimension_semantics<parallel>], iteration_bounds = array<i64: 2>, scalar_prefetch = 0 : i64, scratch_operands = 0 : i64, tpu.core_type = #tpu.core_type<tc>, window_params = [{transform_indices = @transform_0, window_bounds = array<i64: 2, 8, 256>}, {pipeline_mode = #tpu.pipeline_mode<synchronous>, transform_indices = @transform_1, window_bounds = array<i64: 9, 8, 8>}, {pipeline_mode = #tpu.pipeline_mode<synchronous>, transform_indices = @transform_2, window_bounds = array<i64: 8, 1>}, {pipeline_mode = #tpu.pipeline_mode<synchronous>, transform_indices = @transform_3, window_bounds = array<i64: 8, 1>}, {pipeline_mode = #tpu.pipeline_mode<synchronous>, transform_indices = @transform_4, window_bounds = array<i64: 9, 8, 8>}, {pipeline_mode = #tpu.pipeline_mode<synchronous>, transform_indices = @transform_5, window_bounds = array<i64: 8, 1>}, {pipeline_mode = #tpu.pipeline_mode<synchronous>, transform_indices = @transform_6, window_bounds = array<i64: 8, 1>}, {transform_indices = @transform_7, window_bounds = array<i64: 2, 8, 256>}]} {
    %0 = tpu.iota {dimensions = array<i32: 1>} : vector<1x256xi32>
    %c16_i32 = arith.constant 16 : i32
    %c0_i32 = arith.constant 0 : i32
    %1 = arith.cmpi eq, %c16_i32, %c0_i32 : i32
    %c1_i32 = arith.constant 1 : i32
    %2 = arith.select %1, %c1_i32, %c16_i32 : i32
    %3 = vector.broadcast %2 : i32 to vector<1x256xi32>
    %4 = arith.remsi %0, %3 : vector<1x256xi32>
    %c0_i32_0 = arith.constant 0 : i32
    %5 = vector.broadcast %c0_i32_0 : i32 to vector<1x256xi32>
    %6 = arith.cmpi ne, %4, %5 : vector<1x256xi32>
    %c0_i32_1 = arith.constant 0 : i32
    %7 = vector.broadcast %c0_i32_1 : i32 to vector<1x256xi32>
    %8 = arith.cmpi slt, %4, %7 : vector<1x256xi32>
    %c0_i32_2 = arith.constant 0 : i32
    %9 = arith.cmpi slt, %2, %c0_i32_2 : i32
    %10 = vector.broadcast %9 : i1 to vector<1x256xi1>
    %11 = vector.broadcast %10 : vector<1x256xi1> to vector<1x256xi1>
    %12 = arith.xori %8, %11 : vector<1x256xi1>
    %13 = arith.andi %12, %6 : vector<1x256xi1>
    %14 = vector.broadcast %2 : i32 to vector<1x256xi32>
    %15 = arith.addi %4, %14 : vector<1x256xi32>
    %16 = arith.select %13, %15, %4 : vector<1x256xi1>, vector<1x256xi32>
    %c16_i32_3 = arith.constant 16 : i32
    %17 = vector.broadcast %c16_i32_3 : i32 to vector<1x256xi32>
    %18 = arith.cmpi sge, %0, %17 : vector<1x256xi32>
    %c240_i32 = arith.constant 240 : i32
    %19 = vector.broadcast %c240_i32 : i32 to vector<1x256xi32>
    %20 = arith.cmpi slt, %0, %19 : vector<1x256xi32>
    %c1_i32_4 = arith.constant 1 : i32
    %21 = vector.broadcast %c1_i32_4 : i32 to vector<1x256xi32>
    %22 = arith.cmpi sge, %16, %21 : vector<1x256xi32>
    %c14_i32 = arith.constant 14 : i32
    %23 = vector.broadcast %c14_i32 : i32 to vector<1x256xi32>
    %24 = arith.cmpi sle, %16, %23 : vector<1x256xi32>
    %25 = arith.andi %18, %22 : vector<1x256xi1>
    %26 = arith.andi %18, %24 : vector<1x256xi1>
    %27 = arith.andi %20, %22 : vector<1x256xi1>
    %28 = arith.andi %20, %24 : vector<1x256xi1>
    %c0 = arith.constant 0 : index
    %c0_5 = arith.constant 0 : index
    %29 = vector.load %arg3[%c0, %c0_5] : memref<8x1xf32, #tpu.memory_space<vmem>>, vector<8x1xf32>
    %c0_6 = arith.constant 0 : index
    %c0_7 = arith.constant 0 : index
    %30 = vector.load %arg4[%c0_6, %c0_7] : memref<8x1xf32, #tpu.memory_space<vmem>>, vector<8x1xf32>
    %c0_8 = arith.constant 0 : index
    %c0_9 = arith.constant 0 : index
    %31 = vector.load %arg6[%c0_8, %c0_9] : memref<8x1xf32, #tpu.memory_space<vmem>>, vector<8x1xf32>
    %c0_10 = arith.constant 0 : index
    %c0_11 = arith.constant 0 : index
    %32 = vector.load %arg7[%c0_10, %c0_11] : memref<8x1xf32, #tpu.memory_space<vmem>>, vector<8x1xf32>
    %c0_12 = arith.constant 0 : index
    %c0_13 = arith.constant 0 : index
    %c0_14 = arith.constant 0 : index
    %33 = vector.load %arg1[%c0_12, %c0_13, %c0_14] : memref<2x8x256xf32, #tpu.memory_space<vmem>>, vector<1x8x256xf32>
    %34 = vector.shape_cast %33 : vector<1x8x256xf32> to vector<8x256xf32>
    %c17_i32 = arith.constant 17 : i32
    %35 = tpu.dynamic_rotate %34 by %c17_i32 dim 1 : vector<8x256xf32>, i32 -> vector<8x256xf32>
    %cst = arith.constant 0.000000e+00 : f32
    %36 = vector.broadcast %cst : f32 to vector<8x256xf32>
    %37 = vector.shape_cast %25 : vector<1x256xi1> to vector<1x256xi1>
    %38 = vector.broadcast %37 : vector<1x256xi1> to vector<8x256xi1>
    %39 = arith.select %38, %35, %36 : vector<8x256xi1>, vector<8x256xf32>
    %c0_15 = arith.constant 0 : index
    %c0_16 = arith.constant 0 : index
    %c0_17 = arith.constant 0 : index
    %40 = vector.load %arg2[%c0_15, %c0_16, %c0_17] : memref<9x8x8xf32, #tpu.memory_space<vmem>>, vector<1x8x8xf32>
    %41 = vector.shape_cast %40 : vector<1x8x8xf32> to vector<8x8xf32>
    %cst_18 = arith.constant dense<0.000000e+00> : vector<8x256xf32>
    %42 = tpu.matmul %41, %39, %cst_18 {dimension_numbers = #tpu.dot_dimension_numbers<[1], [0], [0], [1], [0, 0, 1, 1], [], []>} : vector<8x8xf32>, vector<8x256xf32>, vector<8x256xf32> -> vector<8x256xf32>
    %c16_i32_19 = arith.constant 16 : i32
    %43 = tpu.dynamic_rotate %34 by %c16_i32_19 dim 1 : vector<8x256xf32>, i32 -> vector<8x256xf32>
    %cst_20 = arith.constant 0.000000e+00 : f32
    %44 = vector.broadcast %cst_20 : f32 to vector<8x256xf32>
    %45 = vector.shape_cast %18 : vector<1x256xi1> to vector<1x256xi1>
    %46 = vector.broadcast %45 : vector<1x256xi1> to vector<8x256xi1>
    %47 = arith.select %46, %43, %44 : vector<8x256xi1>, vector<8x256xf32>
    %c1 = arith.constant 1 : index
    %c0_21 = arith.constant 0 : index
    %c0_22 = arith.constant 0 : index
    %48 = vector.load %arg2[%c1, %c0_21, %c0_22] : memref<9x8x8xf32, #tpu.memory_space<vmem>>, vector<1x8x8xf32>
    %49 = vector.shape_cast %48 : vector<1x8x8xf32> to vector<8x8xf32>
    %cst_23 = arith.constant dense<0.000000e+00> : vector<8x256xf32>
    %50 = tpu.matmul %49, %47, %cst_23 {dimension_numbers = #tpu.dot_dimension_numbers<[1], [0], [0], [1], [0, 0, 1, 1], [], []>} : vector<8x8xf32>, vector<8x256xf32>, vector<8x256xf32> -> vector<8x256xf32>
    %51 = arith.addf %42, %50 : vector<8x256xf32>
    %c15_i32 = arith.constant 15 : i32
    %52 = tpu.dynamic_rotate %34 by %c15_i32 dim 1 : vector<8x256xf32>, i32 -> vector<8x256xf32>
    %cst_24 = arith.constant 0.000000e+00 : f32
    %53 = vector.broadcast %cst_24 : f32 to vector<8x256xf32>
    %54 = vector.shape_cast %26 : vector<1x256xi1> to vector<1x256xi1>
    %55 = vector.broadcast %54 : vector<1x256xi1> to vector<8x256xi1>
    %56 = arith.select %55, %52, %53 : vector<8x256xi1>, vector<8x256xf32>
    %c2 = arith.constant 2 : index
    %c0_25 = arith.constant 0 : index
    %c0_26 = arith.constant 0 : index
    %57 = vector.load %arg2[%c2, %c0_25, %c0_26] : memref<9x8x8xf32, #tpu.memory_space<vmem>>, vector<1x8x8xf32>
    %58 = vector.shape_cast %57 : vector<1x8x8xf32> to vector<8x8xf32>
    %cst_27 = arith.constant dense<0.000000e+00> : vector<8x256xf32>
    %59 = tpu.matmul %58, %56, %cst_27 {dimension_numbers = #tpu.dot_dimension_numbers<[1], [0], [0], [1], [0, 0, 1, 1], [], []>} : vector<8x8xf32>, vector<8x256xf32>, vector<8x256xf32> -> vector<8x256xf32>
    %60 = arith.addf %51, %59 : vector<8x256xf32>
    %c1_i32_28 = arith.constant 1 : i32
    %61 = tpu.dynamic_rotate %34 by %c1_i32_28 dim 1 : vector<8x256xf32>, i32 -> vector<8x256xf32>
    %cst_29 = arith.constant 0.000000e+00 : f32
    %62 = vector.broadcast %cst_29 : f32 to vector<8x256xf32>
    %63 = vector.shape_cast %22 : vector<1x256xi1> to vector<1x256xi1>
    %64 = vector.broadcast %63 : vector<1x256xi1> to vector<8x256xi1>
    %65 = arith.select %64, %61, %62 : vector<8x256xi1>, vector<8x256xf32>
    %c3 = arith.constant 3 : index
    %c0_30 = arith.constant 0 : index
    %c0_31 = arith.constant 0 : index
    %66 = vector.load %arg2[%c3, %c0_30, %c0_31] : memref<9x8x8xf32, #tpu.memory_space<vmem>>, vector<1x8x8xf32>
    %67 = vector.shape_cast %66 : vector<1x8x8xf32> to vector<8x8xf32>
    %cst_32 = arith.constant dense<0.000000e+00> : vector<8x256xf32>
    %68 = tpu.matmul %67, %65, %cst_32 {dimension_numbers = #tpu.dot_dimension_numbers<[1], [0], [0], [1], [0, 0, 1, 1], [], []>} : vector<8x8xf32>, vector<8x256xf32>, vector<8x256xf32> -> vector<8x256xf32>
    %69 = arith.addf %60, %68 : vector<8x256xf32>
    %c4 = arith.constant 4 : index
    %c0_33 = arith.constant 0 : index
    %c0_34 = arith.constant 0 : index
    %70 = vector.load %arg2[%c4, %c0_33, %c0_34] : memref<9x8x8xf32, #tpu.memory_space<vmem>>, vector<1x8x8xf32>
    %71 = vector.shape_cast %70 : vector<1x8x8xf32> to vector<8x8xf32>
    %cst_35 = arith.constant dense<0.000000e+00> : vector<8x256xf32>
    %72 = tpu.matmul %71, %34, %cst_35 {dimension_numbers = #tpu.dot_dimension_numbers<[1], [0], [0], [1], [0, 0, 1, 1], [], []>} : vector<8x8xf32>, vector<8x256xf32>, vector<8x256xf32> -> vector<8x256xf32>
    %73 = arith.addf %69, %72 : vector<8x256xf32>
    %c255_i32 = arith.constant 255 : i32
    %74 = tpu.dynamic_rotate %34 by %c255_i32 dim 1 : vector<8x256xf32>, i32 -> vector<8x256xf32>
    %cst_36 = arith.constant 0.000000e+00 : f32
    %75 = vector.broadcast %cst_36 : f32 to vector<8x256xf32>
    %76 = vector.shape_cast %24 : vector<1x256xi1> to vector<1x256xi1>
    %77 = vector.broadcast %76 : vector<1x256xi1> to vector<8x256xi1>
    %78 = arith.select %77, %74, %75 : vector<8x256xi1>, vector<8x256xf32>
    %c5 = arith.constant 5 : index
    %c0_37 = arith.constant 0 : index
    %c0_38 = arith.constant 0 : index
    %79 = vector.load %arg2[%c5, %c0_37, %c0_38] : memref<9x8x8xf32, #tpu.memory_space<vmem>>, vector<1x8x8xf32>
    %80 = vector.shape_cast %79 : vector<1x8x8xf32> to vector<8x8xf32>
    %cst_39 = arith.constant dense<0.000000e+00> : vector<8x256xf32>
    %81 = tpu.matmul %80, %78, %cst_39 {dimension_numbers = #tpu.dot_dimension_numbers<[1], [0], [0], [1], [0, 0, 1, 1], [], []>} : vector<8x8xf32>, vector<8x256xf32>, vector<8x256xf32> -> vector<8x256xf32>
    %82 = arith.addf %73, %81 : vector<8x256xf32>
    %c241_i32 = arith.constant 241 : i32
    %83 = tpu.dynamic_rotate %34 by %c241_i32 dim 1 : vector<8x256xf32>, i32 -> vector<8x256xf32>
    %cst_40 = arith.constant 0.000000e+00 : f32
    %84 = vector.broadcast %cst_40 : f32 to vector<8x256xf32>
    %85 = vector.shape_cast %27 : vector<1x256xi1> to vector<1x256xi1>
    %86 = vector.broadcast %85 : vector<1x256xi1> to vector<8x256xi1>
    %87 = arith.select %86, %83, %84 : vector<8x256xi1>, vector<8x256xf32>
    %c6 = arith.constant 6 : index
    %c0_41 = arith.constant 0 : index
    %c0_42 = arith.constant 0 : index
    %88 = vector.load %arg2[%c6, %c0_41, %c0_42] : memref<9x8x8xf32, #tpu.memory_space<vmem>>, vector<1x8x8xf32>
    %89 = vector.shape_cast %88 : vector<1x8x8xf32> to vector<8x8xf32>
    %cst_43 = arith.constant dense<0.000000e+00> : vector<8x256xf32>
    %90 = tpu.matmul %89, %87, %cst_43 {dimension_numbers = #tpu.dot_dimension_numbers<[1], [0], [0], [1], [0, 0, 1, 1], [], []>} : vector<8x8xf32>, vector<8x256xf32>, vector<8x256xf32> -> vector<8x256xf32>
    %91 = arith.addf %82, %90 : vector<8x256xf32>
    %c240_i32_44 = arith.constant 240 : i32
    %92 = tpu.dynamic_rotate %34 by %c240_i32_44 dim 1 : vector<8x256xf32>, i32 -> vector<8x256xf32>
    %cst_45 = arith.constant 0.000000e+00 : f32
    %93 = vector.broadcast %cst_45 : f32 to vector<8x256xf32>
    %94 = vector.shape_cast %20 : vector<1x256xi1> to vector<1x256xi1>
    %95 = vector.broadcast %94 : vector<1x256xi1> to vector<8x256xi1>
    %96 = arith.select %95, %92, %93 : vector<8x256xi1>, vector<8x256xf32>
    %c7 = arith.constant 7 : index
    %c0_46 = arith.constant 0 : index
    %c0_47 = arith.constant 0 : index
    %97 = vector.load %arg2[%c7, %c0_46, %c0_47] : memref<9x8x8xf32, #tpu.memory_space<vmem>>, vector<1x8x8xf32>
    %98 = vector.shape_cast %97 : vector<1x8x8xf32> to vector<8x8xf32>
    %cst_48 = arith.constant dense<0.000000e+00> : vector<8x256xf32>
    %99 = tpu.matmul %98, %96, %cst_48 {dimension_numbers = #tpu.dot_dimension_numbers<[1], [0], [0], [1], [0, 0, 1, 1], [], []>} : vector<8x8xf32>, vector<8x256xf32>, vector<8x256xf32> -> vector<8x256xf32>
    %100 = arith.addf %91, %99 : vector<8x256xf32>
    %c239_i32 = arith.constant 239 : i32
    %101 = tpu.dynamic_rotate %34 by %c239_i32 dim 1 : vector<8x256xf32>, i32 -> vector<8x256xf32>
    %cst_49 = arith.constant 0.000000e+00 : f32
    %102 = vector.broadcast %cst_49 : f32 to vector<8x256xf32>
    %103 = vector.shape_cast %28 : vector<1x256xi1> to vector<1x256xi1>
    %104 = vector.broadcast %103 : vector<1x256xi1> to vector<8x256xi1>
    %105 = arith.select %104, %101, %102 : vector<8x256xi1>, vector<8x256xf32>
    %c8 = arith.constant 8 : index
    %c0_50 = arith.constant 0 : index
    %c0_51 = arith.constant 0 : index
    %106 = vector.load %arg2[%c8, %c0_50, %c0_51] : memref<9x8x8xf32, #tpu.memory_space<vmem>>, vector<1x8x8xf32>
    %107 = vector.shape_cast %106 : vector<1x8x8xf32> to vector<8x8xf32>
    %cst_52 = arith.constant dense<0.000000e+00> : vector<8x256xf32>
    %108 = tpu.matmul %107, %105, %cst_52 {dimension_numbers = #tpu.dot_dimension_numbers<[1], [0], [0], [1], [0, 0, 1, 1], [], []>} : vector<8x8xf32>, vector<8x256xf32>, vector<8x256xf32> -> vector<8x256xf32>
    %109 = arith.addf %100, %108 : vector<8x256xf32>
    %cst_53 = arith.constant dense<0.000000e+00> : vector<8xf32>
    %110 = vector.multi_reduction <add>, %109, %cst_53 [1] : vector<8x256xf32> to vector<8xf32>
    %111 = vector.shape_cast %110 : vector<8xf32> to vector<8x1xf32>
    %cst_54 = arith.constant 2.560000e+02 : f32
    %112 = vector.broadcast %cst_54 : f32 to vector<8x1xf32>
    %113 = arith.divf %111, %112 : vector<8x1xf32>
    %114 = vector.broadcast %113 : vector<8x1xf32> to vector<8x256xf32>
    %115 = arith.subf %109, %114 : vector<8x256xf32>
    %116 = arith.mulf %115, %115 : vector<8x256xf32>
    %cst_55 = arith.constant dense<0.000000e+00> : vector<8xf32>
    %117 = vector.multi_reduction <add>, %116, %cst_55 [1] : vector<8x256xf32> to vector<8xf32>
    %118 = vector.shape_cast %117 : vector<8xf32> to vector<8x1xf32>
    %cst_56 = arith.constant 2.560000e+02 : f32
    %119 = vector.broadcast %cst_56 : f32 to vector<8x1xf32>
    %120 = arith.divf %118, %119 : vector<8x1xf32>
    %cst_57 = arith.constant 9.99999974E-6 : f32
    %121 = vector.broadcast %cst_57 : f32 to vector<8x1xf32>
    %122 = arith.addf %120, %121 : vector<8x1xf32>
    %123 = math.rsqrt %122 : vector<8x1xf32>
    %124 = arith.mulf %29, %123 : vector<8x1xf32>
    %125 = vector.broadcast %124 : vector<8x1xf32> to vector<8x256xf32>
    %126 = arith.mulf %115, %125 : vector<8x256xf32>
    %127 = vector.broadcast %30 : vector<8x1xf32> to vector<8x256xf32>
    %128 = arith.addf %126, %127 : vector<8x256xf32>
    %cst_58 = arith.constant 0.000000e+00 : f32
    %129 = vector.broadcast %cst_58 : f32 to vector<8x256xf32>
    %130 = arith.maximumf %128, %129 : vector<8x256xf32>
    %c17_i32_59 = arith.constant 17 : i32
    %131 = tpu.dynamic_rotate %130 by %c17_i32_59 dim 1 : vector<8x256xf32>, i32 -> vector<8x256xf32>
    %cst_60 = arith.constant 0.000000e+00 : f32
    %132 = vector.broadcast %cst_60 : f32 to vector<8x256xf32>
    %133 = vector.shape_cast %25 : vector<1x256xi1> to vector<1x256xi1>
    %134 = vector.broadcast %133 : vector<1x256xi1> to vector<8x256xi1>
    %135 = arith.select %134, %131, %132 : vector<8x256xi1>, vector<8x256xf32>
    %c0_61 = arith.constant 0 : index
    %c0_62 = arith.constant 0 : index
    %c0_63 = arith.constant 0 : index
    %136 = vector.load %arg5[%c0_61, %c0_62, %c0_63] : memref<9x8x8xf32, #tpu.memory_space<vmem>>, vector<1x8x8xf32>
    %137 = vector.shape_cast %136 : vector<1x8x8xf32> to vector<8x8xf32>
    %cst_64 = arith.constant dense<0.000000e+00> : vector<8x256xf32>
    %138 = tpu.matmul %137, %135, %cst_64 {dimension_numbers = #tpu.dot_dimension_numbers<[1], [0], [0], [1], [0, 0, 1, 1], [], []>} : vector<8x8xf32>, vector<8x256xf32>, vector<8x256xf32> -> vector<8x256xf32>
    %c16_i32_65 = arith.constant 16 : i32
    %139 = tpu.dynamic_rotate %130 by %c16_i32_65 dim 1 : vector<8x256xf32>, i32 -> vector<8x256xf32>
    %cst_66 = arith.constant 0.000000e+00 : f32
    %140 = vector.broadcast %cst_66 : f32 to vector<8x256xf32>
    %141 = vector.shape_cast %18 : vector<1x256xi1> to vector<1x256xi1>
    %142 = vector.broadcast %141 : vector<1x256xi1> to vector<8x256xi1>
    %143 = arith.select %142, %139, %140 : vector<8x256xi1>, vector<8x256xf32>
    %c1_67 = arith.constant 1 : index
    %c0_68 = arith.constant 0 : index
    %c0_69 = arith.constant 0 : index
    %144 = vector.load %arg5[%c1_67, %c0_68, %c0_69] : memref<9x8x8xf32, #tpu.memory_space<vmem>>, vector<1x8x8xf32>
    %145 = vector.shape_cast %144 : vector<1x8x8xf32> to vector<8x8xf32>
    %cst_70 = arith.constant dense<0.000000e+00> : vector<8x256xf32>
    %146 = tpu.matmul %145, %143, %cst_70 {dimension_numbers = #tpu.dot_dimension_numbers<[1], [0], [0], [1], [0, 0, 1, 1], [], []>} : vector<8x8xf32>, vector<8x256xf32>, vector<8x256xf32> -> vector<8x256xf32>
    %147 = arith.addf %138, %146 : vector<8x256xf32>
    %c15_i32_71 = arith.constant 15 : i32
    %148 = tpu.dynamic_rotate %130 by %c15_i32_71 dim 1 : vector<8x256xf32>, i32 -> vector<8x256xf32>
    %cst_72 = arith.constant 0.000000e+00 : f32
    %149 = vector.broadcast %cst_72 : f32 to vector<8x256xf32>
    %150 = vector.shape_cast %26 : vector<1x256xi1> to vector<1x256xi1>
    %151 = vector.broadcast %150 : vector<1x256xi1> to vector<8x256xi1>
    %152 = arith.select %151, %148, %149 : vector<8x256xi1>, vector<8x256xf32>
    %c2_73 = arith.constant 2 : index
    %c0_74 = arith.constant 0 : index
    %c0_75 = arith.constant 0 : index
    %153 = vector.load %arg5[%c2_73, %c0_74, %c0_75] : memref<9x8x8xf32, #tpu.memory_space<vmem>>, vector<1x8x8xf32>
    %154 = vector.shape_cast %153 : vector<1x8x8xf32> to vector<8x8xf32>
    %cst_76 = arith.constant dense<0.000000e+00> : vector<8x256xf32>
    %155 = tpu.matmul %154, %152, %cst_76 {dimension_numbers = #tpu.dot_dimension_numbers<[1], [0], [0], [1], [0, 0, 1, 1], [], []>} : vector<8x8xf32>, vector<8x256xf32>, vector<8x256xf32> -> vector<8x256xf32>
    %156 = arith.addf %147, %155 : vector<8x256xf32>
    %c1_i32_77 = arith.constant 1 : i32
    %157 = tpu.dynamic_rotate %130 by %c1_i32_77 dim 1 : vector<8x256xf32>, i32 -> vector<8x256xf32>
    %cst_78 = arith.constant 0.000000e+00 : f32
    %158 = vector.broadcast %cst_78 : f32 to vector<8x256xf32>
    %159 = vector.shape_cast %22 : vector<1x256xi1> to vector<1x256xi1>
    %160 = vector.broadcast %159 : vector<1x256xi1> to vector<8x256xi1>
    %161 = arith.select %160, %157, %158 : vector<8x256xi1>, vector<8x256xf32>
    %c3_79 = arith.constant 3 : index
    %c0_80 = arith.constant 0 : index
    %c0_81 = arith.constant 0 : index
    %162 = vector.load %arg5[%c3_79, %c0_80, %c0_81] : memref<9x8x8xf32, #tpu.memory_space<vmem>>, vector<1x8x8xf32>
    %163 = vector.shape_cast %162 : vector<1x8x8xf32> to vector<8x8xf32>
    %cst_82 = arith.constant dense<0.000000e+00> : vector<8x256xf32>
    %164 = tpu.matmul %163, %161, %cst_82 {dimension_numbers = #tpu.dot_dimension_numbers<[1], [0], [0], [1], [0, 0, 1, 1], [], []>} : vector<8x8xf32>, vector<8x256xf32>, vector<8x256xf32> -> vector<8x256xf32>
    %165 = arith.addf %156, %164 : vector<8x256xf32>
    %c4_83 = arith.constant 4 : index
    %c0_84 = arith.constant 0 : index
    %c0_85 = arith.constant 0 : index
    %166 = vector.load %arg5[%c4_83, %c0_84, %c0_85] : memref<9x8x8xf32, #tpu.memory_space<vmem>>, vector<1x8x8xf32>
    %167 = vector.shape_cast %166 : vector<1x8x8xf32> to vector<8x8xf32>
    %cst_86 = arith.constant dense<0.000000e+00> : vector<8x256xf32>
    %168 = tpu.matmul %167, %130, %cst_86 {dimension_numbers = #tpu.dot_dimension_numbers<[1], [0], [0], [1], [0, 0, 1, 1], [], []>} : vector<8x8xf32>, vector<8x256xf32>, vector<8x256xf32> -> vector<8x256xf32>
    %169 = arith.addf %165, %168 : vector<8x256xf32>
    %c255_i32_87 = arith.constant 255 : i32
    %170 = tpu.dynamic_rotate %130 by %c255_i32_87 dim 1 : vector<8x256xf32>, i32 -> vector<8x256xf32>
    %cst_88 = arith.constant 0.000000e+00 : f32
    %171 = vector.broadcast %cst_88 : f32 to vector<8x256xf32>
    %172 = vector.shape_cast %24 : vector<1x256xi1> to vector<1x256xi1>
    %173 = vector.broadcast %172 : vector<1x256xi1> to vector<8x256xi1>
    %174 = arith.select %173, %170, %171 : vector<8x256xi1>, vector<8x256xf32>
    %c5_89 = arith.constant 5 : index
    %c0_90 = arith.constant 0 : index
    %c0_91 = arith.constant 0 : index
    %175 = vector.load %arg5[%c5_89, %c0_90, %c0_91] : memref<9x8x8xf32, #tpu.memory_space<vmem>>, vector<1x8x8xf32>
    %176 = vector.shape_cast %175 : vector<1x8x8xf32> to vector<8x8xf32>
    %cst_92 = arith.constant dense<0.000000e+00> : vector<8x256xf32>
    %177 = tpu.matmul %176, %174, %cst_92 {dimension_numbers = #tpu.dot_dimension_numbers<[1], [0], [0], [1], [0, 0, 1, 1], [], []>} : vector<8x8xf32>, vector<8x256xf32>, vector<8x256xf32> -> vector<8x256xf32>
    %178 = arith.addf %169, %177 : vector<8x256xf32>
    %c241_i32_93 = arith.constant 241 : i32
    %179 = tpu.dynamic_rotate %130 by %c241_i32_93 dim 1 : vector<8x256xf32>, i32 -> vector<8x256xf32>
    %cst_94 = arith.constant 0.000000e+00 : f32
    %180 = vector.broadcast %cst_94 : f32 to vector<8x256xf32>
    %181 = vector.shape_cast %27 : vector<1x256xi1> to vector<1x256xi1>
    %182 = vector.broadcast %181 : vector<1x256xi1> to vector<8x256xi1>
    %183 = arith.select %182, %179, %180 : vector<8x256xi1>, vector<8x256xf32>
    %c6_95 = arith.constant 6 : index
    %c0_96 = arith.constant 0 : index
    %c0_97 = arith.constant 0 : index
    %184 = vector.load %arg5[%c6_95, %c0_96, %c0_97] : memref<9x8x8xf32, #tpu.memory_space<vmem>>, vector<1x8x8xf32>
    %185 = vector.shape_cast %184 : vector<1x8x8xf32> to vector<8x8xf32>
    %cst_98 = arith.constant dense<0.000000e+00> : vector<8x256xf32>
    %186 = tpu.matmul %185, %183, %cst_98 {dimension_numbers = #tpu.dot_dimension_numbers<[1], [0], [0], [1], [0, 0, 1, 1], [], []>} : vector<8x8xf32>, vector<8x256xf32>, vector<8x256xf32> -> vector<8x256xf32>
    %187 = arith.addf %178, %186 : vector<8x256xf32>
    %c240_i32_99 = arith.constant 240 : i32
    %188 = tpu.dynamic_rotate %130 by %c240_i32_99 dim 1 : vector<8x256xf32>, i32 -> vector<8x256xf32>
    %cst_100 = arith.constant 0.000000e+00 : f32
    %189 = vector.broadcast %cst_100 : f32 to vector<8x256xf32>
    %190 = vector.shape_cast %20 : vector<1x256xi1> to vector<1x256xi1>
    %191 = vector.broadcast %190 : vector<1x256xi1> to vector<8x256xi1>
    %192 = arith.select %191, %188, %189 : vector<8x256xi1>, vector<8x256xf32>
    %c7_101 = arith.constant 7 : index
    %c0_102 = arith.constant 0 : index
    %c0_103 = arith.constant 0 : index
    %193 = vector.load %arg5[%c7_101, %c0_102, %c0_103] : memref<9x8x8xf32, #tpu.memory_space<vmem>>, vector<1x8x8xf32>
    %194 = vector.shape_cast %193 : vector<1x8x8xf32> to vector<8x8xf32>
    %cst_104 = arith.constant dense<0.000000e+00> : vector<8x256xf32>
    %195 = tpu.matmul %194, %192, %cst_104 {dimension_numbers = #tpu.dot_dimension_numbers<[1], [0], [0], [1], [0, 0, 1, 1], [], []>} : vector<8x8xf32>, vector<8x256xf32>, vector<8x256xf32> -> vector<8x256xf32>
    %196 = arith.addf %187, %195 : vector<8x256xf32>
    %c239_i32_105 = arith.constant 239 : i32
    %197 = tpu.dynamic_rotate %130 by %c239_i32_105 dim 1 : vector<8x256xf32>, i32 -> vector<8x256xf32>
    %cst_106 = arith.constant 0.000000e+00 : f32
    %198 = vector.broadcast %cst_106 : f32 to vector<8x256xf32>
    %199 = vector.shape_cast %28 : vector<1x256xi1> to vector<1x256xi1>
    %200 = vector.broadcast %199 : vector<1x256xi1> to vector<8x256xi1>
    %201 = arith.select %200, %197, %198 : vector<8x256xi1>, vector<8x256xf32>
    %c8_107 = arith.constant 8 : index
    %c0_108 = arith.constant 0 : index
    %c0_109 = arith.constant 0 : index
    %202 = vector.load %arg5[%c8_107, %c0_108, %c0_109] : memref<9x8x8xf32, #tpu.memory_space<vmem>>, vector<1x8x8xf32>
    %203 = vector.shape_cast %202 : vector<1x8x8xf32> to vector<8x8xf32>
    %cst_110 = arith.constant dense<0.000000e+00> : vector<8x256xf32>
    %204 = tpu.matmul %203, %201, %cst_110 {dimension_numbers = #tpu.dot_dimension_numbers<[1], [0], [0], [1], [0, 0, 1, 1], [], []>} : vector<8x8xf32>, vector<8x256xf32>, vector<8x256xf32> -> vector<8x256xf32>
    %205 = arith.addf %196, %204 : vector<8x256xf32>
    %cst_111 = arith.constant dense<0.000000e+00> : vector<8xf32>
    %206 = vector.multi_reduction <add>, %205, %cst_111 [1] : vector<8x256xf32> to vector<8xf32>
    %207 = vector.shape_cast %206 : vector<8xf32> to vector<8x1xf32>
    %cst_112 = arith.constant 2.560000e+02 : f32
    %208 = vector.broadcast %cst_112 : f32 to vector<8x1xf32>
    %209 = arith.divf %207, %208 : vector<8x1xf32>
    %210 = vector.broadcast %209 : vector<8x1xf32> to vector<8x256xf32>
    %211 = arith.subf %205, %210 : vector<8x256xf32>
    %212 = arith.mulf %211, %211 : vector<8x256xf32>
    %cst_113 = arith.constant dense<0.000000e+00> : vector<8xf32>
    %213 = vector.multi_reduction <add>, %212, %cst_113 [1] : vector<8x256xf32> to vector<8xf32>
    %214 = vector.shape_cast %213 : vector<8xf32> to vector<8x1xf32>
    %cst_114 = arith.constant 2.560000e+02 : f32
    %215 = vector.broadcast %cst_114 : f32 to vector<8x1xf32>
    %216 = arith.divf %214, %215 : vector<8x1xf32>
    %cst_115 = arith.constant 9.99999974E-6 : f32
    %217 = vector.broadcast %cst_115 : f32 to vector<8x1xf32>
    %218 = arith.addf %216, %217 : vector<8x1xf32>
    %219 = math.rsqrt %218 : vector<8x1xf32>
    %220 = arith.mulf %31, %219 : vector<8x1xf32>
    %221 = vector.broadcast %220 : vector<8x1xf32> to vector<8x256xf32>
    %222 = arith.mulf %211, %221 : vector<8x256xf32>
    %223 = vector.broadcast %32 : vector<8x1xf32> to vector<8x256xf32>
    %224 = arith.addf %222, %223 : vector<8x256xf32>
    %225 = arith.addf %34, %224 : vector<8x256xf32>
    %c0_116 = arith.constant 0 : index
    %c0_117 = arith.constant 0 : index
    %c0_118 = arith.constant 0 : index
    %226 = vector.load %arg8[%c0_116, %c0_117, %c0_118] : memref<2x8x256xf32, #tpu.memory_space<vmem>>, vector<1x8x256xf32>
    %227 = vector.shape_cast %226 : vector<1x8x256xf32> to vector<8x256xf32>
    %228 = vector.shape_cast %225 : vector<8x256xf32> to vector<1x8x256xf32>
    tpu.vector_store %arg8[%c0_116, %c0_117, %c0_118], %228 {strides = array<i32>} : memref<2x8x256xf32, #tpu.memory_space<vmem>>, vector<1x8x256xf32>,
    %c1_119 = arith.constant 1 : index
    %c0_120 = arith.constant 0 : index
    %c0_121 = arith.constant 0 : index
    %229 = vector.load %arg1[%c1_119, %c0_120, %c0_121] : memref<2x8x256xf32, #tpu.memory_space<vmem>>, vector<1x8x256xf32>
    %230 = vector.shape_cast %229 : vector<1x8x256xf32> to vector<8x256xf32>
    %c17_i32_122 = arith.constant 17 : i32
    %231 = tpu.dynamic_rotate %230 by %c17_i32_122 dim 1 : vector<8x256xf32>, i32 -> vector<8x256xf32>
    %cst_123 = arith.constant 0.000000e+00 : f32
    %232 = vector.broadcast %cst_123 : f32 to vector<8x256xf32>
    %233 = vector.shape_cast %25 : vector<1x256xi1> to vector<1x256xi1>
    %234 = vector.broadcast %233 : vector<1x256xi1> to vector<8x256xi1>
    %235 = arith.select %234, %231, %232 : vector<8x256xi1>, vector<8x256xf32>
    %c0_124 = arith.constant 0 : index
    %c0_125 = arith.constant 0 : index
    %c0_126 = arith.constant 0 : index
    %236 = vector.load %arg2[%c0_124, %c0_125, %c0_126] : memref<9x8x8xf32, #tpu.memory_space<vmem>>, vector<1x8x8xf32>
    %237 = vector.shape_cast %236 : vector<1x8x8xf32> to vector<8x8xf32>
    %cst_127 = arith.constant dense<0.000000e+00> : vector<8x256xf32>
    %238 = tpu.matmul %237, %235, %cst_127 {dimension_numbers = #tpu.dot_dimension_numbers<[1], [0], [0], [1], [0, 0, 1, 1], [], []>} : vector<8x8xf32>, vector<8x256xf32>, vector<8x256xf32> -> vector<8x256xf32>
    %c16_i32_128 = arith.constant 16 : i32
    %239 = tpu.dynamic_rotate %230 by %c16_i32_128 dim 1 : vector<8x256xf32>, i32 -> vector<8x256xf32>
    %cst_129 = arith.constant 0.000000e+00 : f32
    %240 = vector.broadcast %cst_129 : f32 to vector<8x256xf32>
    %241 = vector.shape_cast %18 : vector<1x256xi1> to vector<1x256xi1>
    %242 = vector.broadcast %241 : vector<1x256xi1> to vector<8x256xi1>
    %243 = arith.select %242, %239, %240 : vector<8x256xi1>, vector<8x256xf32>
    %c1_130 = arith.constant 1 : index
    %c0_131 = arith.constant 0 : index
    %c0_132 = arith.constant 0 : index
    %244 = vector.load %arg2[%c1_130, %c0_131, %c0_132] : memref<9x8x8xf32, #tpu.memory_space<vmem>>, vector<1x8x8xf32>
    %245 = vector.shape_cast %244 : vector<1x8x8xf32> to vector<8x8xf32>
    %cst_133 = arith.constant dense<0.000000e+00> : vector<8x256xf32>
    %246 = tpu.matmul %245, %243, %cst_133 {dimension_numbers = #tpu.dot_dimension_numbers<[1], [0], [0], [1], [0, 0, 1, 1], [], []>} : vector<8x8xf32>, vector<8x256xf32>, vector<8x256xf32> -> vector<8x256xf32>
    %247 = arith.addf %238, %246 : vector<8x256xf32>
    %c15_i32_134 = arith.constant 15 : i32
    %248 = tpu.dynamic_rotate %230 by %c15_i32_134 dim 1 : vector<8x256xf32>, i32 -> vector<8x256xf32>
    %cst_135 = arith.constant 0.000000e+00 : f32
    %249 = vector.broadcast %cst_135 : f32 to vector<8x256xf32>
    %250 = vector.shape_cast %26 : vector<1x256xi1> to vector<1x256xi1>
    %251 = vector.broadcast %250 : vector<1x256xi1> to vector<8x256xi1>
    %252 = arith.select %251, %248, %249 : vector<8x256xi1>, vector<8x256xf32>
    %c2_136 = arith.constant 2 : index
    %c0_137 = arith.constant 0 : index
    %c0_138 = arith.constant 0 : index
    %253 = vector.load %arg2[%c2_136, %c0_137, %c0_138] : memref<9x8x8xf32, #tpu.memory_space<vmem>>, vector<1x8x8xf32>
    %254 = vector.shape_cast %253 : vector<1x8x8xf32> to vector<8x8xf32>
    %cst_139 = arith.constant dense<0.000000e+00> : vector<8x256xf32>
    %255 = tpu.matmul %254, %252, %cst_139 {dimension_numbers = #tpu.dot_dimension_numbers<[1], [0], [0], [1], [0, 0, 1, 1], [], []>} : vector<8x8xf32>, vector<8x256xf32>, vector<8x256xf32> -> vector<8x256xf32>
    %256 = arith.addf %247, %255 : vector<8x256xf32>
    %c1_i32_140 = arith.constant 1 : i32
    %257 = tpu.dynamic_rotate %230 by %c1_i32_140 dim 1 : vector<8x256xf32>, i32 -> vector<8x256xf32>
    %cst_141 = arith.constant 0.000000e+00 : f32
    %258 = vector.broadcast %cst_141 : f32 to vector<8x256xf32>
    %259 = vector.shape_cast %22 : vector<1x256xi1> to vector<1x256xi1>
    %260 = vector.broadcast %259 : vector<1x256xi1> to vector<8x256xi1>
    %261 = arith.select %260, %257, %258 : vector<8x256xi1>, vector<8x256xf32>
    %c3_142 = arith.constant 3 : index
    %c0_143 = arith.constant 0 : index
    %c0_144 = arith.constant 0 : index
    %262 = vector.load %arg2[%c3_142, %c0_143, %c0_144] : memref<9x8x8xf32, #tpu.memory_space<vmem>>, vector<1x8x8xf32>
    %263 = vector.shape_cast %262 : vector<1x8x8xf32> to vector<8x8xf32>
    %cst_145 = arith.constant dense<0.000000e+00> : vector<8x256xf32>
    %264 = tpu.matmul %263, %261, %cst_145 {dimension_numbers = #tpu.dot_dimension_numbers<[1], [0], [0], [1], [0, 0, 1, 1], [], []>} : vector<8x8xf32>, vector<8x256xf32>, vector<8x256xf32> -> vector<8x256xf32>
    %265 = arith.addf %256, %264 : vector<8x256xf32>
    %c4_146 = arith.constant 4 : index
    %c0_147 = arith.constant 0 : index
    %c0_148 = arith.constant 0 : index
    %266 = vector.load %arg2[%c4_146, %c0_147, %c0_148] : memref<9x8x8xf32, #tpu.memory_space<vmem>>, vector<1x8x8xf32>
    %267 = vector.shape_cast %266 : vector<1x8x8xf32> to vector<8x8xf32>
    %cst_149 = arith.constant dense<0.000000e+00> : vector<8x256xf32>
    %268 = tpu.matmul %267, %230, %cst_149 {dimension_numbers = #tpu.dot_dimension_numbers<[1], [0], [0], [1], [0, 0, 1, 1], [], []>} : vector<8x8xf32>, vector<8x256xf32>, vector<8x256xf32> -> vector<8x256xf32>
    %269 = arith.addf %265, %268 : vector<8x256xf32>
    %c255_i32_150 = arith.constant 255 : i32
    %270 = tpu.dynamic_rotate %230 by %c255_i32_150 dim 1 : vector<8x256xf32>, i32 -> vector<8x256xf32>
    %cst_151 = arith.constant 0.000000e+00 : f32
    %271 = vector.broadcast %cst_151 : f32 to vector<8x256xf32>
    %272 = vector.shape_cast %24 : vector<1x256xi1> to vector<1x256xi1>
    %273 = vector.broadcast %272 : vector<1x256xi1> to vector<8x256xi1>
    %274 = arith.select %273, %270, %271 : vector<8x256xi1>, vector<8x256xf32>
    %c5_152 = arith.constant 5 : index
    %c0_153 = arith.constant 0 : index
    %c0_154 = arith.constant 0 : index
    %275 = vector.load %arg2[%c5_152, %c0_153, %c0_154] : memref<9x8x8xf32, #tpu.memory_space<vmem>>, vector<1x8x8xf32>
    %276 = vector.shape_cast %275 : vector<1x8x8xf32> to vector<8x8xf32>
    %cst_155 = arith.constant dense<0.000000e+00> : vector<8x256xf32>
    %277 = tpu.matmul %276, %274, %cst_155 {dimension_numbers = #tpu.dot_dimension_numbers<[1], [0], [0], [1], [0, 0, 1, 1], [], []>} : vector<8x8xf32>, vector<8x256xf32>, vector<8x256xf32> -> vector<8x256xf32>
    %278 = arith.addf %269, %277 : vector<8x256xf32>
    %c241_i32_156 = arith.constant 241 : i32
    %279 = tpu.dynamic_rotate %230 by %c241_i32_156 dim 1 : vector<8x256xf32>, i32 -> vector<8x256xf32>
    %cst_157 = arith.constant 0.000000e+00 : f32
    %280 = vector.broadcast %cst_157 : f32 to vector<8x256xf32>
    %281 = vector.shape_cast %27 : vector<1x256xi1> to vector<1x256xi1>
    %282 = vector.broadcast %281 : vector<1x256xi1> to vector<8x256xi1>
    %283 = arith.select %282, %279, %280 : vector<8x256xi1>, vector<8x256xf32>
    %c6_158 = arith.constant 6 : index
    %c0_159 = arith.constant 0 : index
    %c0_160 = arith.constant 0 : index
    %284 = vector.load %arg2[%c6_158, %c0_159, %c0_160] : memref<9x8x8xf32, #tpu.memory_space<vmem>>, vector<1x8x8xf32>
    %285 = vector.shape_cast %284 : vector<1x8x8xf32> to vector<8x8xf32>
    %cst_161 = arith.constant dense<0.000000e+00> : vector<8x256xf32>
    %286 = tpu.matmul %285, %283, %cst_161 {dimension_numbers = #tpu.dot_dimension_numbers<[1], [0], [0], [1], [0, 0, 1, 1], [], []>} : vector<8x8xf32>, vector<8x256xf32>, vector<8x256xf32> -> vector<8x256xf32>
    %287 = arith.addf %278, %286 : vector<8x256xf32>
    %c240_i32_162 = arith.constant 240 : i32
    %288 = tpu.dynamic_rotate %230 by %c240_i32_162 dim 1 : vector<8x256xf32>, i32 -> vector<8x256xf32>
    %cst_163 = arith.constant 0.000000e+00 : f32
    %289 = vector.broadcast %cst_163 : f32 to vector<8x256xf32>
    %290 = vector.shape_cast %20 : vector<1x256xi1> to vector<1x256xi1>
    %291 = vector.broadcast %290 : vector<1x256xi1> to vector<8x256xi1>
    %292 = arith.select %291, %288, %289 : vector<8x256xi1>, vector<8x256xf32>
    %c7_164 = arith.constant 7 : index
    %c0_165 = arith.constant 0 : index
    %c0_166 = arith.constant 0 : index
    %293 = vector.load %arg2[%c7_164, %c0_165, %c0_166] : memref<9x8x8xf32, #tpu.memory_space<vmem>>, vector<1x8x8xf32>
    %294 = vector.shape_cast %293 : vector<1x8x8xf32> to vector<8x8xf32>
    %cst_167 = arith.constant dense<0.000000e+00> : vector<8x256xf32>
    %295 = tpu.matmul %294, %292, %cst_167 {dimension_numbers = #tpu.dot_dimension_numbers<[1], [0], [0], [1], [0, 0, 1, 1], [], []>} : vector<8x8xf32>, vector<8x256xf32>, vector<8x256xf32> -> vector<8x256xf32>
    %296 = arith.addf %287, %295 : vector<8x256xf32>
    %c239_i32_168 = arith.constant 239 : i32
    %297 = tpu.dynamic_rotate %230 by %c239_i32_168 dim 1 : vector<8x256xf32>, i32 -> vector<8x256xf32>
    %cst_169 = arith.constant 0.000000e+00 : f32
    %298 = vector.broadcast %cst_169 : f32 to vector<8x256xf32>
    %299 = vector.shape_cast %28 : vector<1x256xi1> to vector<1x256xi1>
    %300 = vector.broadcast %299 : vector<1x256xi1> to vector<8x256xi1>
    %301 = arith.select %300, %297, %298 : vector<8x256xi1>, vector<8x256xf32>
    %c8_170 = arith.constant 8 : index
    %c0_171 = arith.constant 0 : index
    %c0_172 = arith.constant 0 : index
    %302 = vector.load %arg2[%c8_170, %c0_171, %c0_172] : memref<9x8x8xf32, #tpu.memory_space<vmem>>, vector<1x8x8xf32>
    %303 = vector.shape_cast %302 : vector<1x8x8xf32> to vector<8x8xf32>
    %cst_173 = arith.constant dense<0.000000e+00> : vector<8x256xf32>
    %304 = tpu.matmul %303, %301, %cst_173 {dimension_numbers = #tpu.dot_dimension_numbers<[1], [0], [0], [1], [0, 0, 1, 1], [], []>} : vector<8x8xf32>, vector<8x256xf32>, vector<8x256xf32> -> vector<8x256xf32>
    %305 = arith.addf %296, %304 : vector<8x256xf32>
    %cst_174 = arith.constant dense<0.000000e+00> : vector<8xf32>
    %306 = vector.multi_reduction <add>, %305, %cst_174 [1] : vector<8x256xf32> to vector<8xf32>
    %307 = vector.shape_cast %306 : vector<8xf32> to vector<8x1xf32>
    %cst_175 = arith.constant 2.560000e+02 : f32
    %308 = vector.broadcast %cst_175 : f32 to vector<8x1xf32>
    %309 = arith.divf %307, %308 : vector<8x1xf32>
    %310 = vector.broadcast %309 : vector<8x1xf32> to vector<8x256xf32>
    %311 = arith.subf %305, %310 : vector<8x256xf32>
    %312 = arith.mulf %311, %311 : vector<8x256xf32>
    %cst_176 = arith.constant dense<0.000000e+00> : vector<8xf32>
    %313 = vector.multi_reduction <add>, %312, %cst_176 [1] : vector<8x256xf32> to vector<8xf32>
    %314 = vector.shape_cast %313 : vector<8xf32> to vector<8x1xf32>
    %cst_177 = arith.constant 2.560000e+02 : f32
    %315 = vector.broadcast %cst_177 : f32 to vector<8x1xf32>
    %316 = arith.divf %314, %315 : vector<8x1xf32>
    %cst_178 = arith.constant 9.99999974E-6 : f32
    %317 = vector.broadcast %cst_178 : f32 to vector<8x1xf32>
    %318 = arith.addf %316, %317 : vector<8x1xf32>
    %319 = math.rsqrt %318 : vector<8x1xf32>
    %320 = arith.mulf %29, %319 : vector<8x1xf32>
    %321 = vector.broadcast %320 : vector<8x1xf32> to vector<8x256xf32>
    %322 = arith.mulf %311, %321 : vector<8x256xf32>
    %323 = vector.broadcast %30 : vector<8x1xf32> to vector<8x256xf32>
    %324 = arith.addf %322, %323 : vector<8x256xf32>
    %cst_179 = arith.constant 0.000000e+00 : f32
    %325 = vector.broadcast %cst_179 : f32 to vector<8x256xf32>
    %326 = arith.maximumf %324, %325 : vector<8x256xf32>
    %c17_i32_180 = arith.constant 17 : i32
    %327 = tpu.dynamic_rotate %326 by %c17_i32_180 dim 1 : vector<8x256xf32>, i32 -> vector<8x256xf32>
    %cst_181 = arith.constant 0.000000e+00 : f32
    %328 = vector.broadcast %cst_181 : f32 to vector<8x256xf32>
    %329 = vector.shape_cast %25 : vector<1x256xi1> to vector<1x256xi1>
    %330 = vector.broadcast %329 : vector<1x256xi1> to vector<8x256xi1>
    %331 = arith.select %330, %327, %328 : vector<8x256xi1>, vector<8x256xf32>
    %c0_182 = arith.constant 0 : index
    %c0_183 = arith.constant 0 : index
    %c0_184 = arith.constant 0 : index
    %332 = vector.load %arg5[%c0_182, %c0_183, %c0_184] : memref<9x8x8xf32, #tpu.memory_space<vmem>>, vector<1x8x8xf32>
    %333 = vector.shape_cast %332 : vector<1x8x8xf32> to vector<8x8xf32>
    %cst_185 = arith.constant dense<0.000000e+00> : vector<8x256xf32>
    %334 = tpu.matmul %333, %331, %cst_185 {dimension_numbers = #tpu.dot_dimension_numbers<[1], [0], [0], [1], [0, 0, 1, 1], [], []>} : vector<8x8xf32>, vector<8x256xf32>, vector<8x256xf32> -> vector<8x256xf32>
    %c16_i32_186 = arith.constant 16 : i32
    %335 = tpu.dynamic_rotate %326 by %c16_i32_186 dim 1 : vector<8x256xf32>, i32 -> vector<8x256xf32>
    %cst_187 = arith.constant 0.000000e+00 : f32
    %336 = vector.broadcast %cst_187 : f32 to vector<8x256xf32>
    %337 = vector.shape_cast %18 : vector<1x256xi1> to vector<1x256xi1>
    %338 = vector.broadcast %337 : vector<1x256xi1> to vector<8x256xi1>
    %339 = arith.select %338, %335, %336 : vector<8x256xi1>, vector<8x256xf32>
    %c1_188 = arith.constant 1 : index
    %c0_189 = arith.constant 0 : index
    %c0_190 = arith.constant 0 : index
    %340 = vector.load %arg5[%c1_188, %c0_189, %c0_190] : memref<9x8x8xf32, #tpu.memory_space<vmem>>, vector<1x8x8xf32>
    %341 = vector.shape_cast %340 : vector<1x8x8xf32> to vector<8x8xf32>
    %cst_191 = arith.constant dense<0.000000e+00> : vector<8x256xf32>
    %342 = tpu.matmul %341, %339, %cst_191 {dimension_numbers = #tpu.dot_dimension_numbers<[1], [0], [0], [1], [0, 0, 1, 1], [], []>} : vector<8x8xf32>, vector<8x256xf32>, vector<8x256xf32> -> vector<8x256xf32>
    %343 = arith.addf %334, %342 : vector<8x256xf32>
    %c15_i32_192 = arith.constant 15 : i32
    %344 = tpu.dynamic_rotate %326 by %c15_i32_192 dim 1 : vector<8x256xf32>, i32 -> vector<8x256xf32>
    %cst_193 = arith.constant 0.000000e+00 : f32
    %345 = vector.broadcast %cst_193 : f32 to vector<8x256xf32>
    %346 = vector.shape_cast %26 : vector<1x256xi1> to vector<1x256xi1>
    %347 = vector.broadcast %346 : vector<1x256xi1> to vector<8x256xi1>
    %348 = arith.select %347, %344, %345 : vector<8x256xi1>, vector<8x256xf32>
    %c2_194 = arith.constant 2 : index
    %c0_195 = arith.constant 0 : index
    %c0_196 = arith.constant 0 : index
    %349 = vector.load %arg5[%c2_194, %c0_195, %c0_196] : memref<9x8x8xf32, #tpu.memory_space<vmem>>, vector<1x8x8xf32>
    %350 = vector.shape_cast %349 : vector<1x8x8xf32> to vector<8x8xf32>
    %cst_197 = arith.constant dense<0.000000e+00> : vector<8x256xf32>
    %351 = tpu.matmul %350, %348, %cst_197 {dimension_numbers = #tpu.dot_dimension_numbers<[1], [0], [0], [1], [0, 0, 1, 1], [], []>} : vector<8x8xf32>, vector<8x256xf32>, vector<8x256xf32> -> vector<8x256xf32>
    %352 = arith.addf %343, %351 : vector<8x256xf32>
    %c1_i32_198 = arith.constant 1 : i32
    %353 = tpu.dynamic_rotate %326 by %c1_i32_198 dim 1 : vector<8x256xf32>, i32 -> vector<8x256xf32>
    %cst_199 = arith.constant 0.000000e+00 : f32
    %354 = vector.broadcast %cst_199 : f32 to vector<8x256xf32>
    %355 = vector.shape_cast %22 : vector<1x256xi1> to vector<1x256xi1>
    %356 = vector.broadcast %355 : vector<1x256xi1> to vector<8x256xi1>
    %357 = arith.select %356, %353, %354 : vector<8x256xi1>, vector<8x256xf32>
    %c3_200 = arith.constant 3 : index
    %c0_201 = arith.constant 0 : index
    %c0_202 = arith.constant 0 : index
    %358 = vector.load %arg5[%c3_200, %c0_201, %c0_202] : memref<9x8x8xf32, #tpu.memory_space<vmem>>, vector<1x8x8xf32>
    %359 = vector.shape_cast %358 : vector<1x8x8xf32> to vector<8x8xf32>
    %cst_203 = arith.constant dense<0.000000e+00> : vector<8x256xf32>
    %360 = tpu.matmul %359, %357, %cst_203 {dimension_numbers = #tpu.dot_dimension_numbers<[1], [0], [0], [1], [0, 0, 1, 1], [], []>} : vector<8x8xf32>, vector<8x256xf32>, vector<8x256xf32> -> vector<8x256xf32>
    %361 = arith.addf %352, %360 : vector<8x256xf32>
    %c4_204 = arith.constant 4 : index
    %c0_205 = arith.constant 0 : index
    %c0_206 = arith.constant 0 : index
    %362 = vector.load %arg5[%c4_204, %c0_205, %c0_206] : memref<9x8x8xf32, #tpu.memory_space<vmem>>, vector<1x8x8xf32>
    %363 = vector.shape_cast %362 : vector<1x8x8xf32> to vector<8x8xf32>
    %cst_207 = arith.constant dense<0.000000e+00> : vector<8x256xf32>
    %364 = tpu.matmul %363, %326, %cst_207 {dimension_numbers = #tpu.dot_dimension_numbers<[1], [0], [0], [1], [0, 0, 1, 1], [], []>} : vector<8x8xf32>, vector<8x256xf32>, vector<8x256xf32> -> vector<8x256xf32>
    %365 = arith.addf %361, %364 : vector<8x256xf32>
    %c255_i32_208 = arith.constant 255 : i32
    %366 = tpu.dynamic_rotate %326 by %c255_i32_208 dim 1 : vector<8x256xf32>, i32 -> vector<8x256xf32>
    %cst_209 = arith.constant 0.000000e+00 : f32
    %367 = vector.broadcast %cst_209 : f32 to vector<8x256xf32>
    %368 = vector.shape_cast %24 : vector<1x256xi1> to vector<1x256xi1>
    %369 = vector.broadcast %368 : vector<1x256xi1> to vector<8x256xi1>
    %370 = arith.select %369, %366, %367 : vector<8x256xi1>, vector<8x256xf32>
    %c5_210 = arith.constant 5 : index
    %c0_211 = arith.constant 0 : index
    %c0_212 = arith.constant 0 : index
    %371 = vector.load %arg5[%c5_210, %c0_211, %c0_212] : memref<9x8x8xf32, #tpu.memory_space<vmem>>, vector<1x8x8xf32>
    %372 = vector.shape_cast %371 : vector<1x8x8xf32> to vector<8x8xf32>
    %cst_213 = arith.constant dense<0.000000e+00> : vector<8x256xf32>
    %373 = tpu.matmul %372, %370, %cst_213 {dimension_numbers = #tpu.dot_dimension_numbers<[1], [0], [0], [1], [0, 0, 1, 1], [], []>} : vector<8x8xf32>, vector<8x256xf32>, vector<8x256xf32> -> vector<8x256xf32>
    %374 = arith.addf %365, %373 : vector<8x256xf32>
    %c241_i32_214 = arith.constant 241 : i32
    %375 = tpu.dynamic_rotate %326 by %c241_i32_214 dim 1 : vector<8x256xf32>, i32 -> vector<8x256xf32>
    %cst_215 = arith.constant 0.000000e+00 : f32
    %376 = vector.broadcast %cst_215 : f32 to vector<8x256xf32>
    %377 = vector.shape_cast %27 : vector<1x256xi1> to vector<1x256xi1>
    %378 = vector.broadcast %377 : vector<1x256xi1> to vector<8x256xi1>
    %379 = arith.select %378, %375, %376 : vector<8x256xi1>, vector<8x256xf32>
    %c6_216 = arith.constant 6 : index
    %c0_217 = arith.constant 0 : index
    %c0_218 = arith.constant 0 : index
    %380 = vector.load %arg5[%c6_216, %c0_217, %c0_218] : memref<9x8x8xf32, #tpu.memory_space<vmem>>, vector<1x8x8xf32>
    %381 = vector.shape_cast %380 : vector<1x8x8xf32> to vector<8x8xf32>
    %cst_219 = arith.constant dense<0.000000e+00> : vector<8x256xf32>
    %382 = tpu.matmul %381, %379, %cst_219 {dimension_numbers = #tpu.dot_dimension_numbers<[1], [0], [0], [1], [0, 0, 1, 1], [], []>} : vector<8x8xf32>, vector<8x256xf32>, vector<8x256xf32> -> vector<8x256xf32>
    %383 = arith.addf %374, %382 : vector<8x256xf32>
    %c240_i32_220 = arith.constant 240 : i32
    %384 = tpu.dynamic_rotate %326 by %c240_i32_220 dim 1 : vector<8x256xf32>, i32 -> vector<8x256xf32>
    %cst_221 = arith.constant 0.000000e+00 : f32
    %385 = vector.broadcast %cst_221 : f32 to vector<8x256xf32>
    %386 = vector.shape_cast %20 : vector<1x256xi1> to vector<1x256xi1>
    %387 = vector.broadcast %386 : vector<1x256xi1> to vector<8x256xi1>
    %388 = arith.select %387, %384, %385 : vector<8x256xi1>, vector<8x256xf32>
    %c7_222 = arith.constant 7 : index
    %c0_223 = arith.constant 0 : index
    %c0_224 = arith.constant 0 : index
    %389 = vector.load %arg5[%c7_222, %c0_223, %c0_224] : memref<9x8x8xf32, #tpu.memory_space<vmem>>, vector<1x8x8xf32>
    %390 = vector.shape_cast %389 : vector<1x8x8xf32> to vector<8x8xf32>
    %cst_225 = arith.constant dense<0.000000e+00> : vector<8x256xf32>
    %391 = tpu.matmul %390, %388, %cst_225 {dimension_numbers = #tpu.dot_dimension_numbers<[1], [0], [0], [1], [0, 0, 1, 1], [], []>} : vector<8x8xf32>, vector<8x256xf32>, vector<8x256xf32> -> vector<8x256xf32>
    %392 = arith.addf %383, %391 : vector<8x256xf32>
    %c239_i32_226 = arith.constant 239 : i32
    %393 = tpu.dynamic_rotate %326 by %c239_i32_226 dim 1 : vector<8x256xf32>, i32 -> vector<8x256xf32>
    %cst_227 = arith.constant 0.000000e+00 : f32
    %394 = vector.broadcast %cst_227 : f32 to vector<8x256xf32>
    %395 = vector.shape_cast %28 : vector<1x256xi1> to vector<1x256xi1>
    %396 = vector.broadcast %395 : vector<1x256xi1> to vector<8x256xi1>
    %397 = arith.select %396, %393, %394 : vector<8x256xi1>, vector<8x256xf32>
    %c8_228 = arith.constant 8 : index
    %c0_229 = arith.constant 0 : index
    %c0_230 = arith.constant 0 : index
    %398 = vector.load %arg5[%c8_228, %c0_229, %c0_230] : memref<9x8x8xf32, #tpu.memory_space<vmem>>, vector<1x8x8xf32>
    %399 = vector.shape_cast %398 : vector<1x8x8xf32> to vector<8x8xf32>
    %cst_231 = arith.constant dense<0.000000e+00> : vector<8x256xf32>
    %400 = tpu.matmul %399, %397, %cst_231 {dimension_numbers = #tpu.dot_dimension_numbers<[1], [0], [0], [1], [0, 0, 1, 1], [], []>} : vector<8x8xf32>, vector<8x256xf32>, vector<8x256xf32> -> vector<8x256xf32>
    %401 = arith.addf %392, %400 : vector<8x256xf32>
    %cst_232 = arith.constant dense<0.000000e+00> : vector<8xf32>
    %402 = vector.multi_reduction <add>, %401, %cst_232 [1] : vector<8x256xf32> to vector<8xf32>
    %403 = vector.shape_cast %402 : vector<8xf32> to vector<8x1xf32>
    %cst_233 = arith.constant 2.560000e+02 : f32
    %404 = vector.broadcast %cst_233 : f32 to vector<8x1xf32>
    %405 = arith.divf %403, %404 : vector<8x1xf32>
    %406 = vector.broadcast %405 : vector<8x1xf32> to vector<8x256xf32>
    %407 = arith.subf %401, %406 : vector<8x256xf32>
    %408 = arith.mulf %407, %407 : vector<8x256xf32>
    %cst_234 = arith.constant dense<0.000000e+00> : vector<8xf32>
    %409 = vector.multi_reduction <add>, %408, %cst_234 [1] : vector<8x256xf32> to vector<8xf32>
    %410 = vector.shape_cast %409 : vector<8xf32> to vector<8x1xf32>
    %cst_235 = arith.constant 2.560000e+02 : f32
    %411 = vector.broadcast %cst_235 : f32 to vector<8x1xf32>
    %412 = arith.divf %410, %411 : vector<8x1xf32>
    %cst_236 = arith.constant 9.99999974E-6 : f32
    %413 = vector.broadcast %cst_236 : f32 to vector<8x1xf32>
    %414 = arith.addf %412, %413 : vector<8x1xf32>
    %415 = math.rsqrt %414 : vector<8x1xf32>
    %416 = arith.mulf %31, %415 : vector<8x1xf32>
    %417 = vector.broadcast %416 : vector<8x1xf32> to vector<8x256xf32>
    %418 = arith.mulf %407, %417 : vector<8x256xf32>
    %419 = vector.broadcast %32 : vector<8x1xf32> to vector<8x256xf32>
    %420 = arith.addf %418, %419 : vector<8x256xf32>
    %421 = arith.addf %230, %420 : vector<8x256xf32>
    %c1_237 = arith.constant 1 : index
    %c0_238 = arith.constant 0 : index
    %c0_239 = arith.constant 0 : index
    %422 = vector.load %arg8[%c1_237, %c0_238, %c0_239] : memref<2x8x256xf32, #tpu.memory_space<vmem>>, vector<1x8x256xf32>
    %423 = vector.shape_cast %422 : vector<1x8x256xf32> to vector<8x256xf32>
    %424 = vector.shape_cast %421 : vector<8x256xf32> to vector<1x8x256xf32>
    tpu.vector_store %arg8[%c1_237, %c0_238, %c0_239], %424 {strides = array<i32>} : memref<2x8x256xf32, #tpu.memory_space<vmem>>, vector<1x8x256xf32>,
    return
  }
  func.func @transform_0(%arg0: i32) -> (i32, i32, i32) {
    %c0_i32 = arith.constant 0 : i32
    %c0_i32_0 = arith.constant 0 : i32
    %c0_i32_1 = arith.constant 0 : i32
    return %arg0, %c0_i32, %c0_i32_0 : i32, i32, i32
  }
  func.func @transform_1(%arg0: i32) -> (i32, i32, i32) {
    %c0_i32 = arith.constant 0 : i32
    %c0_i32_0 = arith.constant 0 : i32
    %c0_i32_1 = arith.constant 0 : i32
    %c0_i32_2 = arith.constant 0 : i32
    return %c0_i32, %c0_i32_0, %c0_i32_1 : i32, i32, i32
  }
  func.func @transform_2(%arg0: i32) -> (i32, i32) {
    %c0_i32 = arith.constant 0 : i32
    %c0_i32_0 = arith.constant 0 : i32
    %c0_i32_1 = arith.constant 0 : i32
    return %c0_i32, %c0_i32_0 : i32, i32
  }
  func.func @transform_3(%arg0: i32) -> (i32, i32) {
    %c0_i32 = arith.constant 0 : i32
    %c0_i32_0 = arith.constant 0 : i32
    %c0_i32_1 = arith.constant 0 : i32
    return %c0_i32, %c0_i32_0 : i32, i32
  }
  func.func @transform_4(%arg0: i32) -> (i32, i32, i32) {
    %c0_i32 = arith.constant 0 : i32
    %c0_i32_0 = arith.constant 0 : i32
    %c0_i32_1 = arith.constant 0 : i32
    %c0_i32_2 = arith.constant 0 : i32
    return %c0_i32, %c0_i32_0, %c0_i32_1 : i32, i32, i32
  }
  func.func @transform_5(%arg0: i32) -> (i32, i32) {
    %c0_i32 = arith.constant 0 : i32
    %c0_i32_0 = arith.constant 0 : i32
    %c0_i32_1 = arith.constant 0 : i32
    return %c0_i32, %c0_i32_0 : i32, i32
  }
  func.func @transform_6(%arg0: i32) -> (i32, i32) {
    %c0_i32 = arith.constant 0 : i32
    %c0_i32_0 = arith.constant 0 : i32
    %c0_i32_1 = arith.constant 0 : i32
    return %c0_i32, %c0_i32_0 : i32, i32
  }
  func.func @transform_7(%arg0: i32) -> (i32, i32, i32) {
    %c0_i32 = arith.constant 0 : i32
    %c0_i32_0 = arith.constant 0 : i32
    %c0_i32_1 = arith.constant 0 : i32
    return %arg0, %c0_i32, %c0_i32_0 : i32, i32, i32
  }
}

</mosaic_0001>

<llo_original>
// kernel: tpu_custom_call.1
$region0: #{tpu_custom_call.1}
  #allocation0 [shape = 'u32[]', space=smem, size = 0x4, offset = 0x4, fixed_abs, tag = 'smem constant byte address 0x4 - core index']
  #allocation1 [shape = 'u32[144,128]{1,0:T(1,128)}', space=vmem, size = 0x12000, scoped, tag = 'internal scratch']
  %s0 = inlined_call_operand.vmem [shape: f32[4,8,256], index: 0, kind: input, shape index: {}]
  %s1 = inlined_call_operand.vmem [shape: f32[9,8,8], index: 1, kind: input, shape index: {}]
  %s2 = inlined_call_operand.vmem [shape: f32[8,1], index: 2, kind: input, shape index: {}]
  %s3 = inlined_call_operand.vmem [shape: f32[8,1], index: 3, kind: input, shape index: {}]
  %s4 = inlined_call_operand.vmem [shape: f32[9,8,8], index: 4, kind: input, shape index: {}]
  %s5 = inlined_call_operand.vmem [shape: f32[8,1], index: 5, kind: input, shape index: {}]
  %s6 = inlined_call_operand.vmem [shape: f32[8,1], index: 6, kind: input, shape index: {}]
  %s7 = inlined_call_operand.hbm [shape: f32[4,8,256], index: 7, kind: output, shape index: {}]
  %s8 = sld [smem:[#allocation0]]
  $region61: #{tpu_custom_call.1} parent=0
    _
  %s10 = ssub.s32 1, %s8
  %s11 = scalar_select 0, %s10, %s8
  $region1: #{tpu_custom_call.1} parent=0
    #allocation2 [shape = 'u8[32768]{0}', space=vmem, size = 0x8000, scoped, tag = 'output window, operand 0']
    #allocation3 [shape = 's32[2]{0}', space=sflag, size = 0x8, scoped, tag = 'scoped memory for tpu_custom_call.1']
    %12 = vsyncpa [#allocation3], 0
    %s13 = scalar_lea.sflag [#allocation3], 1
    %14 = vsyncpa %s13, 0
    loop: start=0, step=1, limit=4
    $region2: #{tpu_custom_call.1} parent=1 // loop_pre_header
      _
    $region3: #{tpu_custom_call.1} parent=1 // loop_header
      %s16 = sphi 0, %s20
      %p17 = scmp.ge.s32.totalorder %s16, 4
      %s26 = sphi 0, %s28
      %s29 = sphi 0, %s26
      %s30 = sphi 0, %s29
      %s46 = sphi 0, %s30
      %s50 = sphi 0, %s50
      %s52 = sphi 0, %s50
      %s53 = sphi 0, %s52
      %s67 = sphi 0, %s53
      %s71 = sphi 0, %s71
      %s73 = sphi 0, %s71
      %s74 = sphi 0, %s73
      %s88 = sphi 0, %s74
      %s92 = sphi 0, %s92
      %s94 = sphi 0, %s92
      %s95 = sphi 0, %s94
      %s109 = sphi 0, %s95
      %s113 = sphi 0, %s113
      %s115 = sphi 0, %s113
      %s116 = sphi 0, %s115
      %s130 = sphi 0, %s116
      %s134 = sphi 0, %s134
      %s136 = sphi 0, %s134
      %s137 = sphi 0, %s136
      %s151 = sphi 0, %s137
      %s155 = sphi 0, %s155
      %s157 = sphi 0, %s155
      %s158 = sphi 0, %s157
      %s172 = sphi 0, %s158
      %s178 = sphi 0, %s180
      %s181 = sphi 0, %s178
      %s182 = sphi 0, %s181
      %s198 = sphi 0, %s182
    $region4: #{tpu_custom_call.1} parent=1 // loop_header_branch
      %19 = sbr.rel (%p17) target = $region8
    $region5: #{tpu_custom_call.1} parent=1 // loop_body
      %s21 = ssub.s32 %s16, 1
      %s22 = ssub.s32 %s16, 2
      %s23 = sadd.s32 %s16, 1
      %s24 = ssub.s32 %s16, %s23
      %p25 = scmp.eq.s32.totalorder %s24, 0
      %s27 = sadd.s32 %s26, 1
      %s28 = scalar_select %p25, %s26, %s27
      %p31 = pneg %p25
      %p32 = scmp.eq.s32.totalorder %s16, 1
      %p33 = por %p31, %p32
      %p34 = scmp.ne.s32.totalorder %s26, %s29
      %p35 = scmp.eq.s32.totalorder %s16, 0
      %p36 = por %p34, %p35
      %p37 = scmp.ne.s32.totalorder %s26, %s29
      %p38 = scmp.eq.s32.totalorder %s21, 1
      %p39 = por %p37, %p38
      %p40 = scmp.ne.s32.totalorder %s29, %s30
      %p41 = scmp.eq.s32.totalorder %s21, 0
      %p42 = por %p40, %p41
      %p43 = scmp.ne.s32.totalorder %s29, %s30
      %p44 = scmp.eq.s32.totalorder %s22, 1
      %p45 = por %p43, %p44
      %p47 = scmp.ne.s32.totalorder %s30, %s46
      %p48 = scmp.eq.s32.totalorder %s22, 0
      %p49 = por %p47, %p48
      %s51 = sadd.s32 %s50, 1
      %p54 = scmp.eq.s32.totalorder %s16, 1
      %p55 = scmp.ne.s32.totalorder %s50, %s52
      %p56 = scmp.eq.s32.totalorder %s16, 0
      %p57 = por %p55, %p56
      %p58 = scmp.ne.s32.totalorder %s50, %s52
      %p59 = scmp.eq.s32.totalorder %s21, 1
      %p60 = por %p58, %p59
      %p61 = scmp.ne.s32.totalorder %s52, %s53
      %p62 = scmp.eq.s32.totalorder %s21, 0
      %p63 = por %p61, %p62
      %p64 = scmp.ne.s32.totalorder %s52, %s53
      %p65 = scmp.eq.s32.totalorder %s22, 1
      %p66 = por %p64, %p65
      %p68 = scmp.ne.s32.totalorder %s53, %s67
      %p69 = scmp.eq.s32.totalorder %s22, 0
      %p70 = por %p68, %p69
      %s72 = sadd.s32 %s71, 1
      %p75 = scmp.eq.s32.totalorder %s16, 1
      %p76 = scmp.ne.s32.totalorder %s71, %s73
      %p77 = scmp.eq.s32.totalorder %s16, 0
      %p78 = por %p76, %p77
      %p79 = scmp.ne.s32.totalorder %s71, %s73
      %p80 = scmp.eq.s32.totalorder %s21, 1
      %p81 = por %p79, %p80
      %p82 = scmp.ne.s32.totalorder %s73, %s74
      %p83 = scmp.eq.s32.totalorder %s21, 0
      %p84 = por %p82, %p83
      %p85 = scmp.ne.s32.totalorder %s73, %s74
      %p86 = scmp.eq.s32.totalorder %s22, 1
      %p87 = por %p85, %p86
      %p89 = scmp.ne.s32.totalorder %s74, %s88
      %p90 = scmp.eq.s32.totalorder %s22, 0
      %p91 = por %p89, %p90
      %s93 = sadd.s32 %s92, 1
      %p96 = scmp.eq.s32.totalorder %s16, 1
      %p97 = scmp.ne.s32.totalorder %s92, %s94
      %p98 = scmp.eq.s32.totalorder %s16, 0
      %p99 = por %p97, %p98
      %p100 = scmp.ne.s32.totalorder %s92, %s94
      %p101 = scmp.eq.s32.totalorder %s21, 1
      %p102 = por %p100, %p101
      %p103 = scmp.ne.s32.totalorder %s94, %s95
      %p104 = scmp.eq.s32.totalorder %s21, 0
      %p105 = por %p103, %p104
      %p106 = scmp.ne.s32.totalorder %s94, %s95
      %p107 = scmp.eq.s32.totalorder %s22, 1
      %p108 = por %p106, %p107
      %p110 = scmp.ne.s32.totalorder %s95, %s109
      %p111 = scmp.eq.s32.totalorder %s22, 0
      %p112 = por %p110, %p111
      %s114 = sadd.s32 %s113, 1
      %p117 = scmp.eq.s32.totalorder %s16, 1
      %p118 = scmp.ne.s32.totalorder %s113, %s115
      %p119 = scmp.eq.s32.totalorder %s16, 0
      %p120 = por %p118, %p119
      %p121 = scmp.ne.s32.totalorder %s113, %s115
      %p122 = scmp.eq.s32.totalorder %s21, 1
      %p123 = por %p121, %p122
      %p124 = scmp.ne.s32.totalorder %s115, %s116
      %p125 = scmp.eq.s32.totalorder %s21, 0
      %p126 = por %p124, %p125
      %p127 = scmp.ne.s32.totalorder %s115, %s116
      %p128 = scmp.eq.s32.totalorder %s22, 1
      %p129 = por %p127, %p128
      %p131 = scmp.ne.s32.totalorder %s116, %s130
      %p132 = scmp.eq.s32.totalorder %s22, 0
      %p133 = por %p131, %p132
      %s135 = sadd.s32 %s134, 1
      %p138 = scmp.eq.s32.totalorder %s16, 1
      %p139 = scmp.ne.s32.totalorder %s134, %s136
      %p140 = scmp.eq.s32.totalorder %s16, 0
      %p141 = por %p139, %p140
      %p142 = scmp.ne.s32.totalorder %s134, %s136
      %p143 = scmp.eq.s32.totalorder %s21, 1
      %p144 = por %p142, %p143
      %p145 = scmp.ne.s32.totalorder %s136, %s137
      %p146 = scmp.eq.s32.totalorder %s21, 0
      %p147 = por %p145, %p146
      %p148 = scmp.ne.s32.totalorder %s136, %s137
      %p149 = scmp.eq.s32.totalorder %s22, 1
      %p150 = por %p148, %p149
      %p152 = scmp.ne.s32.totalorder %s137, %s151
      %p153 = scmp.eq.s32.totalorder %s22, 0
      %p154 = por %p152, %p153
      %s156 = sadd.s32 %s155, 1
      %p159 = scmp.eq.s32.totalorder %s16, 1
      %p160 = scmp.ne.s32.totalorder %s155, %s157
      %p161 = scmp.eq.s32.totalorder %s16, 0
      %p162 = por %p160, %p161
      %p163 = scmp.ne.s32.totalorder %s155, %s157
      %p164 = scmp.eq.s32.totalorder %s21, 1
      %p165 = por %p163, %p164
      %p166 = scmp.ne.s32.totalorder %s157, %s158
      %p167 = scmp.eq.s32.totalorder %s21, 0
      %p168 = por %p166, %p167
      %p169 = scmp.ne.s32.totalorder %s157, %s158
      %p170 = scmp.eq.s32.totalorder %s22, 1
      %p171 = por %p169, %p170
      %p173 = scmp.ne.s32.totalorder %s158, %s172
      %p174 = scmp.eq.s32.totalorder %s22, 0
      %p175 = por %p173, %p174
      %s176 = ssub.s32 %s16, %s23
      %p177 = scmp.eq.s32.totalorder %s176, 0
      %s179 = sadd.s32 %s178, 1
      %s180 = scalar_select %p177, %s178, %s179
      %p183 = pneg %p177
      %p184 = scmp.eq.s32.totalorder %s16, 1
      %p185 = por %p183, %p184
      %p186 = scmp.ne.s32.totalorder %s178, %s181
      %p187 = scmp.eq.s32.totalorder %s16, 0
      %p188 = por %p186, %p187
      %p189 = scmp.ne.s32.totalorder %s178, %s181
      %p190 = scmp.eq.s32.totalorder %s21, 1
      %p191 = por %p189, %p190
      %p192 = scmp.ne.s32.totalorder %s181, %s182
      %p193 = scmp.eq.s32.totalorder %s21, 0
      %p194 = por %p192, %p193
      %p195 = scmp.ne.s32.totalorder %s181, %s182
      %p196 = scmp.eq.s32.totalorder %s22, 1
      %p197 = por %p195, %p196
      %p199 = scmp.ne.s32.totalorder %s182, %s198
      %p200 = scmp.eq.s32.totalorder %s22, 0
      %p201 = por %p199, %p200
      %p202 = scmp.le.s32.totalorder 1, %s16
      %p203 = scmp.lt.s32.totalorder %s16, 3
      %p204 = pnand %p202, %p203
      %p205 = pneg %p204
      // Predicated region
      $region9: #{tpu_custom_call.1} parent=5 // pred_check
        _
      $region10: #{tpu_custom_call.1} parent=5 // pred_check_branch
        %207 = sbr.rel (%p204) target = $region12
      $region11: #{tpu_custom_call.1} parent=5 // pred_region
        %s208 = ssub.s32 %s16, 1
        // Predicated region
        $region13: #{tpu_custom_call.1} parent=11 // pred_check
          %p209 = pneg %p63
        $region14: #{tpu_custom_call.1} parent=11 // pred_check_branch
          %211 = sbr.rel (%p209) target = $region16
        $region15: #{tpu_custom_call.1} parent=11 // pred_region
          _
        $region16: #{tpu_custom_call.1} parent=11 // pred_fallthru
          _
        // Predicated region
        $region17: #{tpu_custom_call.1} parent=11 // pred_check
          %p212 = pneg %p84
        $region18: #{tpu_custom_call.1} parent=11 // pred_check_branch
          %214 = sbr.rel (%p212) target = $region20
        $region19: #{tpu_custom_call.1} parent=11 // pred_region
          _
        $region20: #{tpu_custom_call.1} parent=11 // pred_fallthru
          _
        // Predicated region
        $region21: #{tpu_custom_call.1} parent=11 // pred_check
          %p215 = pneg %p105
        $region22: #{tpu_custom_call.1} parent=11 // pred_check_branch
          %217 = sbr.rel (%p215) target = $region24
        $region23: #{tpu_custom_call.1} parent=11 // pred_region
          _
        $region24: #{tpu_custom_call.1} parent=11 // pred_fallthru
          _
        // Predicated region
        $region25: #{tpu_custom_call.1} parent=11 // pred_check
          %p218 = pneg %p126
        $region26: #{tpu_custom_call.1} parent=11 // pred_check_branch
          %220 = sbr.rel (%p218) target = $region28
        $region27: #{tpu_custom_call.1} parent=11 // pred_region
          _
        $region28: #{tpu_custom_call.1} parent=11 // pred_fallthru
          _
        // Predicated region
        $region29: #{tpu_custom_call.1} parent=11 // pred_check
          %p221 = pneg %p147
        $region30: #{tpu_custom_call.1} parent=11 // pred_check_branch
          %223 = sbr.rel (%p221) target = $region32
        $region31: #{tpu_custom_call.1} parent=11 // pred_region
          _
        $region32: #{tpu_custom_call.1} parent=11 // pred_fallthru
          _
        // Predicated region
        $region33: #{tpu_custom_call.1} parent=11 // pred_check
          %p224 = pneg %p168
        $region34: #{tpu_custom_call.1} parent=11 // pred_check_branch
          %226 = sbr.rel (%p224) target = $region36
        $region35: #{tpu_custom_call.1} parent=11 // pred_region
          _
        $region36: #{tpu_custom_call.1} parent=11 // pred_fallthru
          _
      $region12: #{tpu_custom_call.1} parent=5 // pred_fallthru
        _
      %p227 = scmp.lt.s32.totalorder %s16, 2
      // Predicated region
      $region37: #{tpu_custom_call.1} parent=5 // pred_check
        %p228 = pneg %p227
      $region38: #{tpu_custom_call.1} parent=5 // pred_check_branch
        %230 = sbr.rel (%p228) target = $region40
      $region39: #{tpu_custom_call.1} parent=5 // pred_region
        // Predicated region
        $region41: #{tpu_custom_call.1} parent=39 // pred_check
          %p231 = pneg %p36
        $region42: #{tpu_custom_call.1} parent=39 // pred_check_branch
          %233 = sbr.rel (%p231) target = $region44
        $region43: #{tpu_custom_call.1} parent=39 // pred_region
          %s234 = smul.u32 2, %s16
          %p235 = scmp.lt.s32.totalorder %s234, 3
          %s236 = scalar_select %p235, %s234, 3
          %s237 = smul.addr %s236, 2
          %s238 = smul.addr %s237, 8
          %s239 = scalar_lea.vmem %s0, %s238
          %s240 = smul.u32 2, %s16
        $region44: #{tpu_custom_call.1} parent=39 // pred_fallthru
          _
      $region40: #{tpu_custom_call.1} parent=5 // pred_fallthru
        _
      %p241 = scmp.le.s32.totalorder 1, %s16
      %p242 = scmp.lt.s32.totalorder %s16, 3
      %p243 = pnand %p241, %p242
      %p244 = pneg %p243
      // Predicated region
      $region45: #{tpu_custom_call.1} parent=5 // pred_check
        _
      $region46: #{tpu_custom_call.1} parent=5 // pred_check_branch
        %246 = sbr.rel (%p243) target = $region48
      $region47: #{tpu_custom_call.1} parent=5 // pred_region
        %s247 = ssub.s32 %s16, 1
        %s248 = smul.u32 2, %s21
        %p249 = scmp.lt.s32.totalorder %s248, 3
        %s250 = scalar_select %p249, %s248, 3
        %s251 = smul.addr %s250, 2
        %s252 = smul.addr %s251, 8
        %s253 = scalar_lea.vmem %s0, %s252
        %p254 = pneg %p42
        %p255 = pneg %p39
        %p256 = pneg %p63
        %p257 = pneg %p60
        %p258 = pneg %p84
        %p259 = pneg %p81
        %p260 = pneg %p105
        %p261 = pneg %p102
        %p262 = pneg %p126
        %p263 = pneg %p123
        %p264 = pneg %p147
        %p265 = pneg %p144
        %p266 = pneg %p168
        %p267 = pneg %p165
        %p268 = pneg %p194
        %p269 = pneg %p191
        %s270 = sand.u32 %s181, 1
        %s271 = scalar_lea.sflag [#allocation3], %s270
        %s272 = sand.u32 %s181, 1
        %s273 = smul.addr %s272, 32
        %s274 = scalar_lea.vmem [#allocation2], %s273
        %s275 = smul.u32 2, %s21
        %p276 = scmp.lt.s32.totalorder %s275, 3
        %s277 = scalar_select %p276, %s275, 3
        %s278 = smul.addr %s277, 2
        %s279 = smul.addr %s278, 8
        %s280 = scalar_lea.vmem %s0, %s279
        %s281 = smul.u32 2, %s21
        %s282 = smul.u32 2, %s21
        %v283 = vlaneseq
        %v284 = vand.u32 %v283, 127
        %v285 = vadd.s32 %v284, 128
        %vm286 = vcmp.lt.s32.totalorder %v284, 0
        %v287 = vsub.s32 0, %v284
        %v288 = vsel %vm286, %v287, %v284
        %v289 = vshrl.u32 %v288, 4
        %v290 = vand.u32 %v288, 15
        %v291 = vsub.s32 0, %v290
        %v292 = vsel %vm286, %v291, %v290
        %vm293 = vcmp.lt.s32.totalorder %v285, 0
        %v294 = vsub.s32 0, %v285
        %v295 = vsel %vm293, %v294, %v285
        %v296 = vshrl.u32 %v295, 4
        %v297 = vand.u32 %v295, 15
        %v298 = vsub.s32 0, %v297
        %v299 = vsel %vm293, %v298, %v297
        %vm300 = vcmp.ne.s32.totalorder %v292, 0
        %vm301 = vcmp.ne.s32.totalorder %v299, 0
        %vm302 = vcmp.lt.s32.totalorder %v292, 0
        %vm303 = vcmp.lt.s32.totalorder %v299, 0
        %vm304 = vmand %vm302, %vm300
        %vm305 = vmand %vm303, %vm301
        %v306 = vadd.s32 %v292, 16
        %v307 = vadd.s32 %v299, 16
        %v308 = vsel %vm304, %v306, %v292
        %v309 = vsel %vm305, %v307, %v299
        %vm310 = vcmp.ge.s32.totalorder %v284, 16
        %vm311 = vcmp.ge.s32.totalorder %v285, 16
        %vm312 = vcmp.lt.s32.totalorder %v284, 240
        %vm313 = vcmp.lt.s32.totalorder %v285, 240
        %vm314 = vcmp.ge.s32.totalorder %v308, 1
        %vm315 = vcmp.ge.s32.totalorder %v309, 1
        %vm316 = vcmp.le.s32.totalorder %v308, 14
        %vm317 = vcmp.le.s32.totalorder %v309, 14
        %vm318 = vmand %vm310, %vm314
        %vm319 = vmand %vm311, %vm315
        %vm320 = vmand %vm310, %vm316
        %vm321 = vmand %vm311, %vm317
        %vm322 = vmand %vm312, %vm314
        %vm323 = vmand %vm313, %vm315
        %vm324 = vmand %vm312, %vm316
        %vm325 = vmand %vm313, %vm317
        %v326 = vld [vmem:[%s2] sm:$0xff]
        %v327 = vld [vmem:[%s3] sm:$0xff]
        %v328 = vld [vmem:[%s5] sm:$0xff]
        %v329 = vld [vmem:[%s6] sm:$0xff]
        %v330 = vld [vmem:[%s280] sm:$0xff]
        %v331 = vld [vmem:[%s280 + $0x8] sm:$0xff]
        %332 = vrot.lane.b32.xlu0 %v330, 17
        %v333 = vpop.permute.xlu0 %332
        %334 = vrot.lane.b32.xlu0 %v331, 17
        %v335 = vpop.permute.xlu0 %334
        %vm336 = vcmp.lt.s32.totalorder %v284, 17
        %v337 = vsel %vm336, %v333, %v335
        %v338 = vsel %vm336, %v335, %v333
        %v339 = vsel %vm318, 1, 0
        %v340 = vsel %vm319, 1, 0
        %vm341 = vcmp.eq.s32.totalorder %v339, 1
        %vm342 = vcmp.eq.s32.totalorder %v340, 1
        %v343 = vsel %vm341, %v338, 0.0
        %v344 = vsel %vm342, %v337, 0.0
        %v345 = vld [vmem:[%s1] sm:$0xff]
        %346 = vrot.lane.b32.xlu0 %v330, 16
        %v347 = vpop.permute.xlu0 %346
        %348 = vrot.lane.b32.xlu0 %v331, 16
        %v349 = vpop.permute.xlu0 %348
        %vm350 = vcmp.lt.s32.totalorder %v284, 16
        %v351 = vsel %vm350, %v347, %v349
        %v352 = vsel %vm350, %v349, %v347
        %v353 = vsel %vm310, 1, 0
        %v354 = vsel %vm311, 1, 0
        %vm355 = vcmp.eq.s32.totalorder %v353, 1
        %vm356 = vcmp.eq.s32.totalorder %v354, 1
        %v357 = vsel %vm355, %v352, 0.0
        %v358 = vsel %vm356, %v351, 0.0
        %s359 = scalar_lea.vmem %s1, 8
        %v360 = vld [vmem:[%s359] sm:$0xff]
        %vm361 = vcmask 64512
        %v363 = vsel %vm361, %v360, 0
        %365 = vmatprep.subr.mxu0 %v358
        %366 = vmatpush1.msra.mxu0 %v357
        %367 = vmatprep.subr.mxu0 0.0
        %368 = vmatpush1.msra.mxu0 0.0
        %369 = vmatprep.subr.mxu0 0.0
        %370 = vmatpush1.msra.mxu0 0.0
        %371 = vmatprep.subr.mxu0 0.0
        %372 = vmatpush1.msra.mxu0 0.0
        %373 = vmatprep.subr.mxu0 0.0
        %374 = vmatpush1.msra.mxu0 0.0
        %375 = vmatprep.subr.mxu0 0.0
        %376 = vmatpush1.msra.mxu0 0.0
        %377 = vmatprep.subr.mxu0 0.0
        %378 = vmatpush1.msra.mxu0 0.0
        %379 = vmatprep.subr.mxu0 0.0
        %380 = vmatpush1.msra.mxu0 0.0
        %381 = vmatprep.subr.mxu0 0.0
        %382 = vmatpush1.msra.mxu0 0.0
        %383 = vmatprep.subr.mxu0 0.0
        %384 = vmatpush1.msra.mxu0 0.0
        %385 = vmatprep.subr.mxu0 0.0
        %386 = vmatpush1.msra.mxu0 0.0
        %387 = vmatprep.subr.mxu0 0.0
        %388 = vmatpush1.msra.mxu0 0.0
        %389 = vmatprep.subr.mxu0 0.0
        %390 = vmatpush1.msra.mxu0 0.0
        %391 = vmatprep.subr.mxu0 0.0
        %392 = vmatpush1.msra.mxu0 0.0
        %393 = vmatprep.subr.mxu0 0.0
        %394 = vmatpush1.msra.mxu0 0.0
        %395 = vmatprep.subr.mxu0 0.0
        %396 = vmatpush1.msra.mxu0 0.0
        %397 = vmatprep.subr.mxu0 0.0
        %398 = vmatpush1.msra.mxu0 0.0
        %399 = vmatprep.subr.mxu0 0.0
        %400 = vmatpush1.msra.mxu0 0.0
        %401 = vmatprep.subr.mxu0 0.0
        %402 = vmatpush1.msra.mxu0 0.0
        %403 = vmatprep.subr.mxu0 0.0
        %404 = vmatpush1.msra.mxu0 0.0
        %405 = vmatprep.subr.mxu0 0.0
        %406 = vmatpush1.msra.mxu0 0.0
        %407 = vmatprep.subr.mxu0 0.0
        %408 = vmatpush1.msra.mxu0 0.0
        %409 = vmatprep.subr.mxu0 0.0
        %410 = vmatpush1.msra.mxu0 0.0
        %411 = vmatprep.subr.mxu0 0.0
        %412 = vmatpush1.msra.mxu0 0.0
        %413 = vmatprep.subr.mxu0 0.0
        %414 = vmatpush1.msra.mxu0 0.0
        %415 = vmatprep.subr.mxu0 0.0
        %416 = vmatpush1.msra.mxu0 0.0
        %417 = vmatprep.subr.mxu0 0.0
        %418 = vmatpush1.msra.mxu0 0.0
        %419 = vmatprep.subr.mxu0 0.0
        %420 = vmatpush1.msra.mxu0 0.0
        %421 = vmatprep.subr.mxu0 0.0
        %422 = vmatpush1.msra.mxu0 0.0
        %423 = vmatprep.subr.mxu0 0.0
        %424 = vmatpush1.msra.mxu0 0.0
        %425 = vmatprep.subr.mxu0 0.0
        %426 = vmatpush1.msra.mxu0 0.0
        %427 = vmatprep.subr.mxu0 0.0
        %428 = vmatpush1.msra.mxu0 0.0
        %429 = vmatprep.mubr.f32.mxu0 0.0
        %430 = vmatmul.mubr.f32.gmra.mrb[0].mxu0 %v363
        %v431 = vpop.f32.mrb[0].mxu0
        %v432 = vadd.f32 0.0, %v431
        %v433 = vpop.f32.mrb[0].mxu0
        %v434 = vadd.f32 0.0, %v433
        %435 = vdwg.mxu0
        %v437 = vsel %vm361, %v345, 0
        %439 = vmatprep.subr.mxu0 %v344
        %440 = vmatpush1.msra.mxu0 %v343
        %441 = vmatprep.subr.mxu0 0.0
        %442 = vmatpush1.msra.mxu0 0.0
        %443 = vmatprep.subr.mxu0 0.0
        %444 = vmatpush1.msra.mxu0 0.0
        %445 = vmatprep.subr.mxu0 0.0
        %446 = vmatpush1.msra.mxu0 0.0
        %447 = vmatprep.subr.mxu0 0.0
        %448 = vmatpush1.msra.mxu0 0.0
        %449 = vmatprep.subr.mxu0 0.0
        %450 = vmatpush1.msra.mxu0 0.0
        %451 = vmatprep.subr.mxu0 0.0
        %452 = vmatpush1.msra.mxu0 0.0
        %453 = vmatprep.subr.mxu0 0.0
        %454 = vmatpush1.msra.mxu0 0.0
        %455 = vmatprep.subr.mxu0 0.0
        %456 = vmatpush1.msra.mxu0 0.0
        %457 = vmatprep.subr.mxu0 0.0
        %458 = vmatpush1.msra.mxu0 0.0
        %459 = vmatprep.subr.mxu0 0.0
        %460 = vmatpush1.msra.mxu0 0.0
        %461 = vmatprep.subr.mxu0 0.0
        %462 = vmatpush1.msra.mxu0 0.0
        %463 = vmatprep.subr.mxu0 0.0
        %464 = vmatpush1.msra.mxu0 0.0
        %465 = vmatprep.subr.mxu0 0.0
        %466 = vmatpush1.msra.mxu0 0.0
        %467 = vmatprep.subr.mxu0 0.0
        %468 = vmatpush1.msra.mxu0 0.0
        %469 = vmatprep.subr.mxu0 0.0
        %470 = vmatpush1.msra.mxu0 0.0
        %471 = vmatprep.subr.mxu0 0.0
        %472 = vmatpush1.msra.mxu0 0.0
        %473 = vmatprep.subr.mxu0 0.0
        %474 = vmatpush1.msra.mxu0 0.0
        %475 = vmatprep.subr.mxu0 0.0
        %476 = vmatpush1.msra.mxu0 0.0
        %477 = vmatprep.subr.mxu0 0.0
        %478 = vmatpush1.msra.mxu0 0.0
        %479 = vmatprep.subr.mxu0 0.0
        %480 = vmatpush1.msra.mxu0 0.0
        %481 = vmatprep.subr.mxu0 0.0
        %482 = vmatpush1.msra.mxu0 0.0
        %483 = vmatprep.subr.mxu0 0.0
        %484 = vmatpush1.msra.mxu0 0.0
        %485 = vmatprep.subr.mxu0 0.0
        %486 = vmatpush1.msra.mxu0 0.0
        %487 = vmatprep.subr.mxu0 0.0
        %488 = vmatpush1.msra.mxu0 0.0
        %489 = vmatprep.subr.mxu0 0.0
        %490 = vmatpush1.msra.mxu0 0.0
        %491 = vmatprep.subr.mxu0 0.0
        %492 = vmatpush1.msra.mxu0 0.0
        %493 = vmatprep.subr.mxu0 0.0
        %494 = vmatpush1.msra.mxu0 0.0
        %495 = vmatprep.subr.mxu0 0.0
        %496 = vmatpush1.msra.mxu0 0.0
        %497 = vmatprep.subr.mxu0 0.0
        %498 = vmatpush1.msra.mxu0 0.0
        %499 = vmatprep.subr.mxu0 0.0
        %500 = vmatpush1.msra.mxu0 0.0
        %501 = vmatprep.subr.mxu0 0.0
        %502 = vmatpush1.msra.mxu0 0.0
        %503 = vmatprep.mubr.f32.mxu0 0.0
        %504 = vmatmul.mubr.f32.gmra.mrb[0].mxu0 %v437
        %v505 = vpop.f32.mrb[0].mxu0
        %v506 = vadd.f32 %v432, %v505
        %v507 = vpop.f32.mrb[0].mxu0
        %v508 = vadd.f32 %v434, %v507
        %509 = vdwg.mxu0
        %510 = vrot.lane.b32.xlu0 %v330, 15
        %v511 = vpop.permute.xlu0 %510
        %512 = vrot.lane.b32.xlu0 %v331, 15
        %v513 = vpop.permute.xlu0 %512
        %vm514 = vcmp.lt.s32.totalorder %v284, 15
        %v515 = vsel %vm514, %v511, %v513
        %v516 = vsel %vm514, %v513, %v511
        %v517 = vsel %vm320, 1, 0
        %v518 = vsel %vm321, 1, 0
        %vm519 = vcmp.eq.s32.totalorder %v517, 1
        %vm520 = vcmp.eq.s32.totalorder %v518, 1
        %v521 = vsel %vm519, %v516, 0.0
        %v522 = vsel %vm520, %v515, 0.0
        %s523 = scalar_lea.vmem %s1, 16
        %v524 = vld [vmem:[%s523] sm:$0xff]
        %v526 = vsel %vm361, %v524, 0
        %528 = vmatprep.subr.mxu0 %v522
        %529 = vmatpush1.msra.mxu0 %v521
        %530 = vmatprep.subr.mxu0 0.0
        %531 = vmatpush1.msra.mxu0 0.0
        %532 = vmatprep.subr.mxu0 0.0
        %533 = vmatpush1.msra.mxu0 0.0
        %534 = vmatprep.subr.mxu0 0.0
        %535 = vmatpush1.msra.mxu0 0.0
        %536 = vmatprep.subr.mxu0 0.0
        %537 = vmatpush1.msra.mxu0 0.0
        %538 = vmatprep.subr.mxu0 0.0
        %539 = vmatpush1.msra.mxu0 0.0
        %540 = vmatprep.subr.mxu0 0.0
        %541 = vmatpush1.msra.mxu0 0.0
        %542 = vmatprep.subr.mxu0 0.0
        %543 = vmatpush1.msra.mxu0 0.0
        %544 = vmatprep.subr.mxu0 0.0
        %545 = vmatpush1.msra.mxu0 0.0
        %546 = vmatprep.subr.mxu0 0.0
        %547 = vmatpush1.msra.mxu0 0.0
        %548 = vmatprep.subr.mxu0 0.0
        %549 = vmatpush1.msra.mxu0 0.0
        %550 = vmatprep.subr.mxu0 0.0
        %551 = vmatpush1.msra.mxu0 0.0
        %552 = vmatprep.subr.mxu0 0.0
        %553 = vmatpush1.msra.mxu0 0.0
        %554 = vmatprep.subr.mxu0 0.0
        %555 = vmatpush1.msra.mxu0 0.0
        %556 = vmatprep.subr.mxu0 0.0
        %557 = vmatpush1.msra.mxu0 0.0
        %558 = vmatprep.subr.mxu0 0.0
        %559 = vmatpush1.msra.mxu0 0.0
        %560 = vmatprep.subr.mxu0 0.0
        %561 = vmatpush1.msra.mxu0 0.0
        %562 = vmatprep.subr.mxu0 0.0
        %563 = vmatpush1.msra.mxu0 0.0
        %564 = vmatprep.subr.mxu0 0.0
        %565 = vmatpush1.msra.mxu0 0.0
        %566 = vmatprep.subr.mxu0 0.0
        %567 = vmatpush1.msra.mxu0 0.0
        %568 = vmatprep.subr.mxu0 0.0
        %569 = vmatpush1.msra.mxu0 0.0
        %570 = vmatprep.subr.mxu0 0.0
        %571 = vmatpush1.msra.mxu0 0.0
        %572 = vmatprep.subr.mxu0 0.0
        %573 = vmatpush1.msra.mxu0 0.0
        %574 = vmatprep.subr.mxu0 0.0
        %575 = vmatpush1.msra.mxu0 0.0
        %576 = vmatprep.subr.mxu0 0.0
        %577 = vmatpush1.msra.mxu0 0.0
        %578 = vmatprep.subr.mxu0 0.0
        %579 = vmatpush1.msra.mxu0 0.0
        %580 = vmatprep.subr.mxu0 0.0
        %581 = vmatpush1.msra.mxu0 0.0
        %582 = vmatprep.subr.mxu0 0.0
        %583 = vmatpush1.msra.mxu0 0.0
        %584 = vmatprep.subr.mxu0 0.0
        %585 = vmatpush1.msra.mxu0 0.0
        %586 = vmatprep.subr.mxu0 0.0
        %587 = vmatpush1.msra.mxu0 0.0
        %588 = vmatprep.subr.mxu0 0.0
        %589 = vmatpush1.msra.mxu0 0.0
        %590 = vmatprep.subr.mxu0 0.0
        %591 = vmatpush1.msra.mxu0 0.0
        %592 = vmatprep.mubr.f32.mxu0 0.0
        %593 = vmatmul.mubr.f32.gmra.mrb[0].mxu0 %v526
        %v594 = vpop.f32.mrb[0].mxu0
        %v595 = vadd.f32 0.0, %v594
        %v596 = vpop.f32.mrb[0].mxu0
        %v597 = vadd.f32 0.0, %v596
        %598 = vdwg.mxu0
        %v599 = vadd.f32 %v506, %v595
        %v600 = vadd.f32 %v508, %v597
        %601 = vrot.lane.b32.xlu0 %v330, 1
        %v602 = vpop.permute.xlu0 %601
        %603 = vrot.lane.b32.xlu0 %v331, 1
        %v604 = vpop.permute.xlu0 %603
        %vm605 = vcmp.lt.s32.totalorder %v284, 1
        %v606 = vsel %vm605, %v602, %v604
        %v607 = vsel %vm605, %v604, %v602
        %v608 = vsel %vm314, 1, 0
        %v609 = vsel %vm315, 1, 0
        %vm610 = vcmp.eq.s32.totalorder %v608, 1
        %vm611 = vcmp.eq.s32.totalorder %v609, 1
        %v612 = vsel %vm610, %v607, 0.0
        %v613 = vsel %vm611, %v606, 0.0
        %s614 = scalar_lea.vmem %s1, 24
        %v615 = vld [vmem:[%s614] sm:$0xff]
        %v617 = vsel %vm361, %v615, 0
        %619 = vmatprep.subr.mxu0 %v613
        %620 = vmatpush1.msra.mxu0 %v612
        %621 = vmatprep.subr.mxu0 0.0
        %622 = vmatpush1.msra.mxu0 0.0
        %623 = vmatprep.subr.mxu0 0.0
        %624 = vmatpush1.msra.mxu0 0.0
        %625 = vmatprep.subr.mxu0 0.0
        %626 = vmatpush1.msra.mxu0 0.0
        %627 = vmatprep.subr.mxu0 0.0
        %628 = vmatpush1.msra.mxu0 0.0
        %629 = vmatprep.subr.mxu0 0.0
        %630 = vmatpush1.msra.mxu0 0.0
        %631 = vmatprep.subr.mxu0 0.0
        %632 = vmatpush1.msra.mxu0 0.0
        %633 = vmatprep.subr.mxu0 0.0
        %634 = vmatpush1.msra.mxu0 0.0
        %635 = vmatprep.subr.mxu0 0.0
        %636 = vmatpush1.msra.mxu0 0.0
        %637 = vmatprep.subr.mxu0 0.0
        %638 = vmatpush1.msra.mxu0 0.0
        %639 = vmatprep.subr.mxu0 0.0
        %640 = vmatpush1.msra.mxu0 0.0
        %641 = vmatprep.subr.mxu0 0.0
        %642 = vmatpush1.msra.mxu0 0.0
        %643 = vmatprep.subr.mxu0 0.0
        %644 = vmatpush1.msra.mxu0 0.0
        %645 = vmatprep.subr.mxu0 0.0
        %646 = vmatpush1.msra.mxu0 0.0
        %647 = vmatprep.subr.mxu0 0.0
        %648 = vmatpush1.msra.mxu0 0.0
        %649 = vmatprep.subr.mxu0 0.0
        %650 = vmatpush1.msra.mxu0 0.0
        %651 = vmatprep.subr.mxu0 0.0
        %652 = vmatpush1.msra.mxu0 0.0
        %653 = vmatprep.subr.mxu0 0.0
        %654 = vmatpush1.msra.mxu0 0.0
        %655 = vmatprep.subr.mxu0 0.0
        %656 = vmatpush1.msra.mxu0 0.0
        %657 = vmatprep.subr.mxu0 0.0
        %658 = vmatpush1.msra.mxu0 0.0
        %659 = vmatprep.subr.mxu0 0.0
        %660 = vmatpush1.msra.mxu0 0.0
        %661 = vmatprep.subr.mxu0 0.0
        %662 = vmatpush1.msra.mxu0 0.0
        %663 = vmatprep.subr.mxu0 0.0
        %664 = vmatpush1.msra.mxu0 0.0
        %665 = vmatprep.subr.mxu0 0.0
        %666 = vmatpush1.msra.mxu0 0.0
        %667 = vmatprep.subr.mxu0 0.0
        %668 = vmatpush1.msra.mxu0 0.0
        %669 = vmatprep.subr.mxu0 0.0
        %670 = vmatpush1.msra.mxu0 0.0
        %671 = vmatprep.subr.mxu0 0.0
        %672 = vmatpush1.msra.mxu0 0.0
        %673 = vmatprep.subr.mxu0 0.0
        %674 = vmatpush1.msra.mxu0 0.0
        %675 = vmatprep.subr.mxu0 0.0
        %676 = vmatpush1.msra.mxu0 0.0
        %677 = vmatprep.subr.mxu0 0.0
        %678 = vmatpush1.msra.mxu0 0.0
        %679 = vmatprep.subr.mxu0 0.0
        %680 = vmatpush1.msra.mxu0 0.0
        %681 = vmatprep.subr.mxu0 0.0
        %682 = vmatpush1.msra.mxu0 0.0
        %683 = vmatprep.mubr.f32.mxu0 0.0
        %684 = vmatmul.mubr.f32.gmra.mrb[0].mxu0 %v617
        %v685 = vpop.f32.mrb[0].mxu0
        %v686 = vadd.f32 0.0, %v685
        %v687 = vpop.f32.mrb[0].mxu0
        %v688 = vadd.f32 0.0, %v687
        %689 = vdwg.mxu0
        %v690 = vadd.f32 %v599, %v686
        %v691 = vadd.f32 %v600, %v688
        %s692 = scalar_lea.vmem %s1, 32
        %v693 = vld [vmem:[%s692] sm:$0xff]
        %v695 = vsel %vm361, %v693, 0
        %697 = vmatprep.subr.mxu0 %v331
        %698 = vmatpush1.msra.mxu0 %v330
        %699 = vmatprep.subr.mxu0 0.0
        %700 = vmatpush1.msra.mxu0 0.0
        %701 = vmatprep.subr.mxu0 0.0
        %702 = vmatpush1.msra.mxu0 0.0
        %703 = vmatprep.subr.mxu0 0.0
        %704 = vmatpush1.msra.mxu0 0.0
        %705 = vmatprep.subr.mxu0 0.0
        %706 = vmatpush1.msra.mxu0 0.0
        %707 = vmatprep.subr.mxu0 0.0
        %708 = vmatpush1.msra.mxu0 0.0
        %709 = vmatprep.subr.mxu0 0.0
        %710 = vmatpush1.msra.mxu0 0.0
        %711 = vmatprep.subr.mxu0 0.0
        %712 = vmatpush1.msra.mxu0 0.0
        %713 = vmatprep.subr.mxu0 0.0
        %714 = vmatpush1.msra.mxu0 0.0
        %715 = vmatprep.subr.mxu0 0.0
        %716 = vmatpush1.msra.mxu0 0.0
        %717 = vmatprep.subr.mxu0 0.0
        %718 = vmatpush1.msra.mxu0 0.0
        %719 = vmatprep.subr.mxu0 0.0
        %720 = vmatpush1.msra.mxu0 0.0
        %721 = vmatprep.subr.mxu0 0.0
        %722 = vmatpush1.msra.mxu0 0.0
        %723 = vmatprep.subr.mxu0 0.0
        %724 = vmatpush1.msra.mxu0 0.0
        %725 = vmatprep.subr.mxu0 0.0
        %726 = vmatpush1.msra.mxu0 0.0
        %727 = vmatprep.subr.mxu0 0.0
        %728 = vmatpush1.msra.mxu0 0.0
        %729 = vmatprep.subr.mxu0 0.0
        %730 = vmatpush1.msra.mxu0 0.0
        %731 = vmatprep.subr.mxu0 0.0
        %732 = vmatpush1.msra.mxu0 0.0
        %733 = vmatprep.subr.mxu0 0.0
        %734 = vmatpush1.msra.mxu0 0.0
        %735 = vmatprep.subr.mxu0 0.0
        %736 = vmatpush1.msra.mxu0 0.0
        %737 = vmatprep.subr.mxu0 0.0
        %738 = vmatpush1.msra.mxu0 0.0
        %739 = vmatprep.subr.mxu0 0.0
        %740 = vmatpush1.msra.mxu0 0.0
        %741 = vmatprep.subr.mxu0 0.0
        %742 = vmatpush1.msra.mxu0 0.0
        %743 = vmatprep.subr.mxu0 0.0
        %744 = vmatpush1.msra.mxu0 0.0
        %745 = vmatprep.subr.mxu0 0.0
        %746 = vmatpush1.msra.mxu0 0.0
        %747 = vmatprep.subr.mxu0 0.0
        %748 = vmatpush1.msra.mxu0 0.0
        %749 = vmatprep.subr.mxu0 0.0
        %750 = vmatpush1.msra.mxu0 0.0
        %751 = vmatprep.subr.mxu0 0.0
        %752 = vmatpush1.msra.mxu0 0.0
        %753 = vmatprep.subr.mxu0 0.0
        %754 = vmatpush1.msra.mxu0 0.0
        %755 = vmatprep.subr.mxu0 0.0
        %756 = vmatpush1.msra.mxu0 0.0
        %757 = vmatprep.subr.mxu0 0.0
        %758 = vmatpush1.msra.mxu0 0.0
        %759 = vmatprep.subr.mxu0 0.0
        %760 = vmatpush1.msra.mxu0 0.0
        %761 = vmatprep.mubr.f32.mxu0 0.0
        %762 = vmatmul.mubr.f32.gmra.mrb[0].mxu0 %v695
        %v763 = vpop.f32.mrb[0].mxu0
        %v764 = vadd.f32 0.0, %v763
        %v765 = vpop.f32.mrb[0].mxu0
        %v766 = vadd.f32 0.0, %v765
        %767 = vdwg.mxu0
        %v768 = vadd.f32 %v690, %v764
        %v769 = vadd.f32 %v691, %v766
        %770 = vrot.lane.b32.xlu0 %v330, 127
        %v771 = vpop.permute.xlu0 %770
        %772 = vrot.lane.b32.xlu0 %v331, 127
        %v773 = vpop.permute.xlu0 %772
        %vm774 = vcmp.lt.s32.totalorder %v284, 127
        %v775 = vsel %vm774, %v771, %v773
        %v776 = vsel %vm774, %v773, %v771
        %v777 = vsel %vm316, 1, 0
        %v778 = vsel %vm317, 1, 0
        %vm779 = vcmp.eq.s32.totalorder %v777, 1
        %vm780 = vcmp.eq.s32.totalorder %v778, 1
        %v781 = vsel %vm779, %v775, 0.0
        %v782 = vsel %vm780, %v776, 0.0
        %s783 = scalar_lea.vmem %s1, 40
        %v784 = vld [vmem:[%s783] sm:$0xff]
        %v786 = vsel %vm361, %v784, 0
        %788 = vmatprep.subr.mxu0 %v782
        %789 = vmatpush1.msra.mxu0 %v781
        %790 = vmatprep.subr.mxu0 0.0
        %791 = vmatpush1.msra.mxu0 0.0
        %792 = vmatprep.subr.mxu0 0.0
        %793 = vmatpush1.msra.mxu0 0.0
        %794 = vmatprep.subr.mxu0 0.0
        %795 = vmatpush1.msra.mxu0 0.0
        %796 = vmatprep.subr.mxu0 0.0
        %797 = vmatpush1.msra.mxu0 0.0
        %798 = vmatprep.subr.mxu0 0.0
        %799 = vmatpush1.msra.mxu0 0.0
        %800 = vmatprep.subr.mxu0 0.0
        %801 = vmatpush1.msra.mxu0 0.0
        %802 = vmatprep.subr.mxu0 0.0
        %803 = vmatpush1.msra.mxu0 0.0
        %804 = vmatprep.subr.mxu0 0.0
        %805 = vmatpush1.msra.mxu0 0.0
        %806 = vmatprep.subr.mxu0 0.0
        %807 = vmatpush1.msra.mxu0 0.0
        %808 = vmatprep.subr.mxu0 0.0
        %809 = vmatpush1.msra.mxu0 0.0
        %810 = vmatprep.subr.mxu0 0.0
        %811 = vmatpush1.msra.mxu0 0.0
        %812 = vmatprep.subr.mxu0 0.0
        %813 = vmatpush1.msra.mxu0 0.0
        %814 = vmatprep.subr.mxu0 0.0
        %815 = vmatpush1.msra.mxu0 0.0
        %816 = vmatprep.subr.mxu0 0.0
        %817 = vmatpush1.msra.mxu0 0.0
        %818 = vmatprep.subr.mxu0 0.0
        %819 = vmatpush1.msra.mxu0 0.0
        %820 = vmatprep.subr.mxu0 0.0
        %821 = vmatpush1.msra.mxu0 0.0
        %822 = vmatprep.subr.mxu0 0.0
        %823 = vmatpush1.msra.mxu0 0.0
        %824 = vmatprep.subr.mxu0 0.0
        %825 = vmatpush1.msra.mxu0 0.0
        %826 = vmatprep.subr.mxu0 0.0
        %827 = vmatpush1.msra.mxu0 0.0
        %828 = vmatprep.subr.mxu0 0.0
        %829 = vmatpush1.msra.mxu0 0.0
        %830 = vmatprep.subr.mxu0 0.0
        %831 = vmatpush1.msra.mxu0 0.0
        %832 = vmatprep.subr.mxu0 0.0
        %833 = vmatpush1.msra.mxu0 0.0
        %834 = vmatprep.subr.mxu0 0.0
        %835 = vmatpush1.msra.mxu0 0.0
        %836 = vmatprep.subr.mxu0 0.0
        %837 = vmatpush1.msra.mxu0 0.0
        %838 = vmatprep.subr.mxu0 0.0
        %839 = vmatpush1.msra.mxu0 0.0
        %840 = vmatprep.subr.mxu0 0.0
        %841 = vmatpush1.msra.mxu0 0.0
        %842 = vmatprep.subr.mxu0 0.0
        %843 = vmatpush1.msra.mxu0 0.0
        %844 = vmatprep.subr.mxu0 0.0
        %845 = vmatpush1.msra.mxu0 0.0
        %846 = vmatprep.subr.mxu0 0.0
        %847 = vmatpush1.msra.mxu0 0.0
        %848 = vmatprep.subr.mxu0 0.0
        %849 = vmatpush1.msra.mxu0 0.0
        %850 = vmatprep.subr.mxu0 0.0
        %851 = vmatpush1.msra.mxu0 0.0
        %852 = vmatprep.mubr.f32.mxu0 0.0
        %853 = vmatmul.mubr.f32.gmra.mrb[0].mxu0 %v786
        %v854 = vpop.f32.mrb[0].mxu0
        %v855 = vadd.f32 0.0, %v854
        %v856 = vpop.f32.mrb[0].mxu0
        %v857 = vadd.f32 0.0, %v856
        %858 = vdwg.mxu0
        %v859 = vadd.f32 %v768, %v855
        %v860 = vadd.f32 %v769, %v857
        %861 = vrot.lane.b32.xlu0 %v330, 113
        %v862 = vpop.permute.xlu0 %861
        %863 = vrot.lane.b32.xlu0 %v331, 113
        %v864 = vpop.permute.xlu0 %863
        %vm865 = vcmp.lt.s32.totalorder %v284, 113
        %v866 = vsel %vm865, %v862, %v864
        %v867 = vsel %vm865, %v864, %v862
        %v868 = vsel %vm322, 1, 0
        %v869 = vsel %vm323, 1, 0
        %vm870 = vcmp.eq.s32.totalorder %v868, 1
        %vm871 = vcmp.eq.s32.totalorder %v869, 1
        %v872 = vsel %vm870, %v866, 0.0
        %v873 = vsel %vm871, %v867, 0.0
        %s874 = scalar_lea.vmem %s1, 48
        %v875 = vld [vmem:[%s874] sm:$0xff]
        %v877 = vsel %vm361, %v875, 0
        %879 = vmatprep.subr.mxu0 %v873
        %880 = vmatpush1.msra.mxu0 %v872
        %881 = vmatprep.subr.mxu0 0.0
        %882 = vmatpush1.msra.mxu0 0.0
        %883 = vmatprep.subr.mxu0 0.0
        %884 = vmatpush1.msra.mxu0 0.0
        %885 = vmatprep.subr.mxu0 0.0
        %886 = vmatpush1.msra.mxu0 0.0
        %887 = vmatprep.subr.mxu0 0.0
        %888 = vmatpush1.msra.mxu0 0.0
        %889 = vmatprep.subr.mxu0 0.0
        %890 = vmatpush1.msra.mxu0 0.0
        %891 = vmatprep.subr.mxu0 0.0
        %892 = vmatpush1.msra.mxu0 0.0
        %893 = vmatprep.subr.mxu0 0.0
        %894 = vmatpush1.msra.mxu0 0.0
        %895 = vmatprep.subr.mxu0 0.0
        %896 = vmatpush1.msra.mxu0 0.0
        %897 = vmatprep.subr.mxu0 0.0
        %898 = vmatpush1.msra.mxu0 0.0
        %899 = vmatprep.subr.mxu0 0.0
        %900 = vmatpush1.msra.mxu0 0.0
        %901 = vmatprep.subr.mxu0 0.0
        %902 = vmatpush1.msra.mxu0 0.0
        %903 = vmatprep.subr.mxu0 0.0
        %904 = vmatpush1.msra.mxu0 0.0
        %905 = vmatprep.subr.mxu0 0.0
        %906 = vmatpush1.msra.mxu0 0.0
        %907 = vmatprep.subr.mxu0 0.0
        %908 = vmatpush1.msra.mxu0 0.0
        %909 = vmatprep.subr.mxu0 0.0
        %910 = vmatpush1.msra.mxu0 0.0
        %911 = vmatprep.subr.mxu0 0.0
        %912 = vmatpush1.msra.mxu0 0.0
        %913 = vmatprep.subr.mxu0 0.0
        %914 = vmatpush1.msra.mxu0 0.0
        %915 = vmatprep.subr.mxu0 0.0
        %916 = vmatpush1.msra.mxu0 0.0
        %917 = vmatprep.subr.mxu0 0.0
        %918 = vmatpush1.msra.mxu0 0.0
        %919 = vmatprep.subr.mxu0 0.0
        %920 = vmatpush1.msra.mxu0 0.0
        %921 = vmatprep.subr.mxu0 0.0
        %922 = vmatpush1.msra.mxu0 0.0
        %923 = vmatprep.subr.mxu0 0.0
        %924 = vmatpush1.msra.mxu0 0.0
        %925 = vmatprep.subr.mxu0 0.0
        %926 = vmatpush1.msra.mxu0 0.0
        %927 = vmatprep.subr.mxu0 0.0
        %928 = vmatpush1.msra.mxu0 0.0
        %929 = vmatprep.subr.mxu0 0.0
        %930 = vmatpush1.msra.mxu0 0.0
        %931 = vmatprep.subr.mxu0 0.0
        %932 = vmatpush1.msra.mxu0 0.0
        %933 = vmatprep.subr.mxu0 0.0
        %934 = vmatpush1.msra.mxu0 0.0
        %935 = vmatprep.subr.mxu0 0.0
        %936 = vmatpush1.msra.mxu0 0.0
        %937 = vmatprep.subr.mxu0 0.0
        %938 = vmatpush1.msra.mxu0 0.0
        %939 = vmatprep.subr.mxu0 0.0
        %940 = vmatpush1.msra.mxu0 0.0
        %941 = vmatprep.subr.mxu0 0.0
        %942 = vmatpush1.msra.mxu0 0.0
        %943 = vmatprep.mubr.f32.mxu0 0.0
        %944 = vmatmul.mubr.f32.gmra.mrb[0].mxu0 %v877
        %v945 = vpop.f32.mrb[0].mxu0
        %v946 = vadd.f32 0.0, %v945
        %v947 = vpop.f32.mrb[0].mxu0
        %v948 = vadd.f32 0.0, %v947
        %949 = vdwg.mxu0
        %v950 = vadd.f32 %v859, %v946
        %v951 = vadd.f32 %v860, %v948
        %952 = vrot.lane.b32.xlu0 %v330, 112
        %v953 = vpop.permute.xlu0 %952
        %954 = vrot.lane.b32.xlu0 %v331, 112
        %v955 = vpop.permute.xlu0 %954
        %vm956 = vcmp.lt.s32.totalorder %v284, 112
        %v957 = vsel %vm956, %v953, %v955
        %v958 = vsel %vm956, %v955, %v953
        %v959 = vsel %vm312, 1, 0
        %v960 = vsel %vm313, 1, 0
        %vm961 = vcmp.eq.s32.totalorder %v959, 1
        %vm962 = vcmp.eq.s32.totalorder %v960, 1
        %v963 = vsel %vm961, %v957, 0.0
        %v964 = vsel %vm962, %v958, 0.0
        %s965 = scalar_lea.vmem %s1, 56
        %v966 = vld [vmem:[%s965] sm:$0xff]
        %v968 = vsel %vm361, %v966, 0
        %970 = vmatprep.subr.mxu0 %v964
        %971 = vmatpush1.msra.mxu0 %v963
        %972 = vmatprep.subr.mxu0 0.0
        %973 = vmatpush1.msra.mxu0 0.0
        %974 = vmatprep.subr.mxu0 0.0
        %975 = vmatpush1.msra.mxu0 0.0
        %976 = vmatprep.subr.mxu0 0.0
        %977 = vmatpush1.msra.mxu0 0.0
        %978 = vmatprep.subr.mxu0 0.0
        %979 = vmatpush1.msra.mxu0 0.0
        %980 = vmatprep.subr.mxu0 0.0
        %981 = vmatpush1.msra.mxu0 0.0
        %982 = vmatprep.subr.mxu0 0.0
        %983 = vmatpush1.msra.mxu0 0.0
        %984 = vmatprep.subr.mxu0 0.0
        %985 = vmatpush1.msra.mxu0 0.0
        %986 = vmatprep.subr.mxu0 0.0
        %987 = vmatpush1.msra.mxu0 0.0
        %988 = vmatprep.subr.mxu0 0.0
        %989 = vmatpush1.msra.mxu0 0.0
        %990 = vmatprep.subr.mxu0 0.0
        %991 = vmatpush1.msra.mxu0 0.0
        %992 = vmatprep.subr.mxu0 0.0
        %993 = vmatpush1.msra.mxu0 0.0
        %994 = vmatprep.subr.mxu0 0.0
        %995 = vmatpush1.msra.mxu0 0.0
        %996 = vmatprep.subr.mxu0 0.0
        %997 = vmatpush1.msra.mxu0 0.0
        %998 = vmatprep.subr.mxu0 0.0
        %999 = vmatpush1.msra.mxu0 0.0
        %1000 = vmatprep.subr.mxu0 0.0
        %1001 = vmatpush1.msra.mxu0 0.0
        %1002 = vmatprep.subr.mxu0 0.0
        %1003 = vmatpush1.msra.mxu0 0.0
        %1004 = vmatprep.subr.mxu0 0.0
        %1005 = vmatpush1.msra.mxu0 0.0
        %1006 = vmatprep.subr.mxu0 0.0
        %1007 = vmatpush1.msra.mxu0 0.0
        %1008 = vmatprep.subr.mxu0 0.0
        %1009 = vmatpush1.msra.mxu0 0.0
        %1010 = vmatprep.subr.mxu0 0.0
        %1011 = vmatpush1.msra.mxu0 0.0
        %1012 = vmatprep.subr.mxu0 0.0
        %1013 = vmatpush1.msra.mxu0 0.0
        %1014 = vmatprep.subr.mxu0 0.0
        %1015 = vmatpush1.msra.mxu0 0.0
        %1016 = vmatprep.subr.mxu0 0.0
        %1017 = vmatpush1.msra.mxu0 0.0
        %1018 = vmatprep.subr.mxu0 0.0
        %1019 = vmatpush1.msra.mxu0 0.0
        %1020 = vmatprep.subr.mxu0 0.0
        %1021 = vmatpush1.msra.mxu0 0.0
        %1022 = vmatprep.subr.mxu0 0.0
        %1023 = vmatpush1.msra.mxu0 0.0
        %1024 = vmatprep.subr.mxu0 0.0
        %1025 = vmatpush1.msra.mxu0 0.0
        %1026 = vmatprep.subr.mxu0 0.0
        %1027 = vmatpush1.msra.mxu0 0.0
        %1028 = vmatprep.subr.mxu0 0.0
        %1029 = vmatpush1.msra.mxu0 0.0
        %1030 = vmatprep.subr.mxu0 0.0
        %1031 = vmatpush1.msra.mxu0 0.0
        %1032 = vmatprep.subr.mxu0 0.0
        %1033 = vmatpush1.msra.mxu0 0.0
        %1034 = vmatprep.mubr.f32.mxu0 0.0
        %1035 = vmatmul.mubr.f32.gmra.mrb[0].mxu0 %v968
        %v1036 = vpop.f32.mrb[0].mxu0
        %v1037 = vadd.f32 0.0, %v1036
        %v1038 = vpop.f32.mrb[0].mxu0
        %v1039 = vadd.f32 0.0, %v1038
        %1040 = vdwg.mxu0
        %v1041 = vadd.f32 %v950, %v1037
        %v1042 = vadd.f32 %v951, %v1039
        %1043 = vrot.lane.b32.xlu0 %v330, 111
        %v1044 = vpop.permute.xlu0 %1043
        %1045 = vrot.lane.b32.xlu0 %v331, 111
        %v1046 = vpop.permute.xlu0 %1045
        %vm1047 = vcmp.lt.s32.totalorder %v284, 111
        %v1048 = vsel %vm1047, %v1044, %v1046
        %v1049 = vsel %vm1047, %v1046, %v1044
        %v1050 = vsel %vm324, 1, 0
        %v1051 = vsel %vm325, 1, 0
        %vm1052 = vcmp.eq.s32.totalorder %v1050, 1
        %vm1053 = vcmp.eq.s32.totalorder %v1051, 1
        %v1054 = vsel %vm1052, %v1048, 0.0
        %v1055 = vsel %vm1053, %v1049, 0.0
        %s1056 = scalar_lea.vmem %s1, 64
        %v1057 = vld [vmem:[%s1056] sm:$0xff]
        %v1059 = vsel %vm361, %v1057, 0
        %1061 = vmatprep.subr.mxu0 %v1055
        %1062 = vmatpush1.msra.mxu0 %v1054
        %1063 = vmatprep.subr.mxu0 0.0
        %1064 = vmatpush1.msra.mxu0 0.0
        %1065 = vmatprep.subr.mxu0 0.0
        %1066 = vmatpush1.msra.mxu0 0.0
        %1067 = vmatprep.subr.mxu0 0.0
        %1068 = vmatpush1.msra.mxu0 0.0
        %1069 = vmatprep.subr.mxu0 0.0
        %1070 = vmatpush1.msra.mxu0 0.0
        %1071 = vmatprep.subr.mxu0 0.0
        %1072 = vmatpush1.msra.mxu0 0.0
        %1073 = vmatprep.subr.mxu0 0.0
        %1074 = vmatpush1.msra.mxu0 0.0
        %1075 = vmatprep.subr.mxu0 0.0
        %1076 = vmatpush1.msra.mxu0 0.0
        %1077 = vmatprep.subr.mxu0 0.0
        %1078 = vmatpush1.msra.mxu0 0.0
        %1079 = vmatprep.subr.mxu0 0.0
        %1080 = vmatpush1.msra.mxu0 0.0
        %1081 = vmatprep.subr.mxu0 0.0
        %1082 = vmatpush1.msra.mxu0 0.0
        %1083 = vmatprep.subr.mxu0 0.0
        %1084 = vmatpush1.msra.mxu0 0.0
        %1085 = vmatprep.subr.mxu0 0.0
        %1086 = vmatpush1.msra.mxu0 0.0
        %1087 = vmatprep.subr.mxu0 0.0
        %1088 = vmatpush1.msra.mxu0 0.0
        %1089 = vmatprep.subr.mxu0 0.0
        %1090 = vmatpush1.msra.mxu0 0.0
        %1091 = vmatprep.subr.mxu0 0.0
        %1092 = vmatpush1.msra.mxu0 0.0
        %1093 = vmatprep.subr.mxu0 0.0
        %1094 = vmatpush1.msra.mxu0 0.0
        %1095 = vmatprep.subr.mxu0 0.0
        %1096 = vmatpush1.msra.mxu0 0.0
        %1097 = vmatprep.subr.mxu0 0.0
        %1098 = vmatpush1.msra.mxu0 0.0
        %1099 = vmatprep.subr.mxu0 0.0
        %1100 = vmatpush1.msra.mxu0 0.0
        %1101 = vmatprep.subr.mxu0 0.0
        %1102 = vmatpush1.msra.mxu0 0.0
        %1103 = vmatprep.subr.mxu0 0.0
        %1104 = vmatpush1.msra.mxu0 0.0
        %1105 = vmatprep.subr.mxu0 0.0
        %1106 = vmatpush1.msra.mxu0 0.0
        %1107 = vmatprep.subr.mxu0 0.0
        %1108 = vmatpush1.msra.mxu0 0.0
        %1109 = vmatprep.subr.mxu0 0.0
        %1110 = vmatpush1.msra.mxu0 0.0
        %1111 = vmatprep.subr.mxu0 0.0
        %1112 = vmatpush1.msra.mxu0 0.0
        %1113 = vmatprep.subr.mxu0 0.0
        %1114 = vmatpush1.msra.mxu0 0.0
        %1115 = vmatprep.subr.mxu0 0.0
        %1116 = vmatpush1.msra.mxu0 0.0
        %1117 = vmatprep.subr.mxu0 0.0
        %1118 = vmatpush1.msra.mxu0 0.0
        %1119 = vmatprep.subr.mxu0 0.0
        %1120 = vmatpush1.msra.mxu0 0.0
        %1121 = vmatprep.subr.mxu0 0.0
        %1122 = vmatpush1.msra.mxu0 0.0
        %1123 = vmatprep.subr.mxu0 0.0
        %1124 = vmatpush1.msra.mxu0 0.0
        %1125 = vmatprep.mubr.f32.mxu0 0.0
        %1126 = vmatmul.mubr.f32.gmra.mrb[0].mxu0 %v1059
        %v1127 = vpop.f32.mrb[0].mxu0
        %v1128 = vadd.f32 0.0, %v1127
        %v1129 = vpop.f32.mrb[0].mxu0
        %v1130 = vadd.f32 0.0, %v1129
        %1131 = vdwg.mxu0
        %v1132 = vadd.f32 %v1041, %v1128
        %v1133 = vadd.f32 %v1042, %v1130
        %v1134 = vadd.f32 %v1132, %v1133
        %1135 = vadd.xlane.f32.xlu0 %v1134
        %v1136 = vpop.xlane.xlu0 %1135
        %v1137 = vrcp.pop 256.0
        %v1138 = vmul.f32 %v1136, %v1137
        %v1139 = vsub.f32 %v1132, %v1138
        %v1140 = vsub.f32 %v1133, %v1138
        %v1141 = vmul.f32 %v1139, %v1139
        %v1142 = vmul.f32 %v1140, %v1140
        %v1143 = vadd.f32 %v1141, %v1142
        %1144 = vadd.xlane.f32.xlu0 %v1143
        %v1145 = vpop.xlane.xlu0 %1144
        %v1146 = vmul.f32 %v1145, %v1137
        %v1147 = vadd.f32 %v1146, 1e-05
        %v1148 = vrsqrt.pop %v1147
        %v1149 = vmul.f32 %v326, %v1148
        %1151 = vset.pattern.permute.xlu0 0
        %1152 = vperm.xlu0 %1151, %v1149
        %v1153 = vpop.permute.xlu0 %1152
        %v1155 = vmul.f32 %v1139, %v1153
        %v1156 = vmul.f32 %v1140, %v1153
        %1158 = vset.pattern.permute.xlu0 0
        %1159 = vperm.xlu0 %1158, %v327
        %v1160 = vpop.permute.xlu0 %1159
        %v1162 = vadd.f32 %v1155, %v1160
        %v1163 = vadd.f32 %v1156, %v1160
        %v1164 = vmax.f32 %v1162, 0.0
        %v1165 = vmax.f32 %v1163, 0.0
        %1166 = vrot.lane.b32.xlu0 %v1164, 17
        %v1167 = vpop.permute.xlu0 %1166
        %1168 = vrot.lane.b32.xlu0 %v1165, 17
        %v1169 = vpop.permute.xlu0 %1168
        %v1170 = vsel %vm336, %v1167, %v1169
        %v1171 = vsel %vm336, %v1169, %v1167
        %v1172 = vsel %vm341, %v1171, 0.0
        %v1173 = vsel %vm342, %v1170, 0.0
        %v1174 = vld [vmem:[%s4] sm:$0xff]
        %1175 = vrot.lane.b32.xlu0 %v1164, 16
        %v1176 = vpop.permute.xlu0 %1175
        %1177 = vrot.lane.b32.xlu0 %v1165, 16
        %v1178 = vpop.permute.xlu0 %1177
        %v1179 = vsel %vm350, %v1176, %v1178
        %v1180 = vsel %vm350, %v1178, %v1176
        %v1181 = vsel %vm355, %v1180, 0.0
        %v1182 = vsel %vm356, %v1179, 0.0
        %s1183 = scalar_lea.vmem %s4, 8
        %v1184 = vld [vmem:[%s1183] sm:$0xff]
        %v1186 = vsel %vm361, %v1184, 0
        %1188 = vmatprep.subr.mxu0 %v1182
        %1189 = vmatpush1.msra.mxu0 %v1181
        %1190 = vmatprep.subr.mxu0 0.0
        %1191 = vmatpush1.msra.mxu0 0.0
        %1192 = vmatprep.subr.mxu0 0.0
        %1193 = vmatpush1.msra.mxu0 0.0
        %1194 = vmatprep.subr.mxu0 0.0
        %1195 = vmatpush1.msra.mxu0 0.0
        %1196 = vmatprep.subr.mxu0 0.0
        %1197 = vmatpush1.msra.mxu0 0.0
        %1198 = vmatprep.subr.mxu0 0.0
        %1199 = vmatpush1.msra.mxu0 0.0
        %1200 = vmatprep.subr.mxu0 0.0
        %1201 = vmatpush1.msra.mxu0 0.0
        %1202 = vmatprep.subr.mxu0 0.0
        %1203 = vmatpush1.msra.mxu0 0.0
        %1204 = vmatprep.subr.mxu0 0.0
        %1205 = vmatpush1.msra.mxu0 0.0
        %1206 = vmatprep.subr.mxu0 0.0
        %1207 = vmatpush1.msra.mxu0 0.0
        %1208 = vmatprep.subr.mxu0 0.0
        %1209 = vmatpush1.msra.mxu0 0.0
        %1210 = vmatprep.subr.mxu0 0.0
        %1211 = vmatpush1.msra.mxu0 0.0
        %1212 = vmatprep.subr.mxu0 0.0
        %1213 = vmatpush1.msra.mxu0 0.0
        %1214 = vmatprep.subr.mxu0 0.0
        %1215 = vmatpush1.msra.mxu0 0.0
        %1216 = vmatprep.subr.mxu0 0.0
        %1217 = vmatpush1.msra.mxu0 0.0
        %1218 = vmatprep.subr.mxu0 0.0
        %1219 = vmatpush1.msra.mxu0 0.0
        %1220 = vmatprep.subr.mxu0 0.0
        %1221 = vmatpush1.msra.mxu0 0.0
        %1222 = vmatprep.subr.mxu0 0.0
        %1223 = vmatpush1.msra.mxu0 0.0
        %1224 = vmatprep.subr.mxu0 0.0
        %1225 = vmatpush1.msra.mxu0 0.0
        %1226 = vmatprep.subr.mxu0 0.0
        %1227 = vmatpush1.msra.mxu0 0.0
        %1228 = vmatprep.subr.mxu0 0.0
        %1229 = vmatpush1.msra.mxu0 0.0
        %1230 = vmatprep.subr.mxu0 0.0
        %1231 = vmatpush1.msra.mxu0 0.0
        %1232 = vmatprep.subr.mxu0 0.0
        %1233 = vmatpush1.msra.mxu0 0.0
        %1234 = vmatprep.subr.mxu0 0.0
        %1235 = vmatpush1.msra.mxu0 0.0
        %1236 = vmatprep.subr.mxu0 0.0
        %1237 = vmatpush1.msra.mxu0 0.0
        %1238 = vmatprep.subr.mxu0 0.0
        %1239 = vmatpush1.msra.mxu0 0.0
        %1240 = vmatprep.subr.mxu0 0.0
        %1241 = vmatpush1.msra.mxu0 0.0
        %1242 = vmatprep.subr.mxu0 0.0
        %1243 = vmatpush1.msra.mxu0 0.0
        %1244 = vmatprep.subr.mxu0 0.0
        %1245 = vmatpush1.msra.mxu0 0.0
        %1246 = vmatprep.subr.mxu0 0.0
        %1247 = vmatpush1.msra.mxu0 0.0
        %1248 = vmatprep.subr.mxu0 0.0
        %1249 = vmatpush1.msra.mxu0 0.0
        %1250 = vmatprep.subr.mxu0 0.0
        %1251 = vmatpush1.msra.mxu0 0.0
        %1252 = vmatprep.mubr.f32.mxu0 0.0
        %1253 = vmatmul.mubr.f32.gmra.mrb[0].mxu0 %v1186
        %v1254 = vpop.f32.mrb[0].mxu0
        %v1255 = vadd.f32 0.0, %v1254
        %v1256 = vpop.f32.mrb[0].mxu0
        %v1257 = vadd.f32 0.0, %v1256
        %1258 = vdwg.mxu0
        %v1260 = vsel %vm361, %v1174, 0
        %1262 = vmatprep.subr.mxu0 %v1173
        %1263 = vmatpush1.msra.mxu0 %v1172
        %1264 = vmatprep.subr.mxu0 0.0
        %1265 = vmatpush1.msra.mxu0 0.0
        %1266 = vmatprep.subr.mxu0 0.0
        %1267 = vmatpush1.msra.mxu0 0.0
        %1268 = vmatprep.subr.mxu0 0.0
        %1269 = vmatpush1.msra.mxu0 0.0
        %1270 = vmatprep.subr.mxu0 0.0
        %1271 = vmatpush1.msra.mxu0 0.0
        %1272 = vmatprep.subr.mxu0 0.0
        %1273 = vmatpush1.msra.mxu0 0.0
        %1274 = vmatprep.subr.mxu0 0.0
        %1275 = vmatpush1.msra.mxu0 0.0
        %1276 = vmatprep.subr.mxu0 0.0
        %1277 = vmatpush1.msra.mxu0 0.0
        %1278 = vmatprep.subr.mxu0 0.0
        %1279 = vmatpush1.msra.mxu0 0.0
        %1280 = vmatprep.subr.mxu0 0.0
        %1281 = vmatpush1.msra.mxu0 0.0
        %1282 = vmatprep.subr.mxu0 0.0
        %1283 = vmatpush1.msra.mxu0 0.0
        %1284 = vmatprep.subr.mxu0 0.0
        %1285 = vmatpush1.msra.mxu0 0.0
        %1286 = vmatprep.subr.mxu0 0.0
        %1287 = vmatpush1.msra.mxu0 0.0
        %1288 = vmatprep.subr.mxu0 0.0
        %1289 = vmatpush1.msra.mxu0 0.0
        %1290 = vmatprep.subr.mxu0 0.0
        %1291 = vmatpush1.msra.mxu0 0.0
        %1292 = vmatprep.subr.mxu0 0.0
        %1293 = vmatpush1.msra.mxu0 0.0
        %1294 = vmatprep.subr.mxu0 0.0
        %1295 = vmatpush1.msra.mxu0 0.0
        %1296 = vmatprep.subr.mxu0 0.0
        %1297 = vmatpush1.msra.mxu0 0.0
        %1298 = vmatprep.subr.mxu0 0.0
        %1299 = vmatpush1.msra.mxu0 0.0
        %1300 = vmatprep.subr.mxu0 0.0
        %1301 = vmatpush1.msra.mxu0 0.0
        %1302 = vmatprep.subr.mxu0 0.0
        %1303 = vmatpush1.msra.mxu0 0.0
        %1304 = vmatprep.subr.mxu0 0.0
        %1305 = vmatpush1.msra.mxu0 0.0
        %1306 = vmatprep.subr.mxu0 0.0
        %1307 = vmatpush1.msra.mxu0 0.0
        %1308 = vmatprep.subr.mxu0 0.0
        %1309 = vmatpush1.msra.mxu0 0.0
        %1310 = vmatprep.subr.mxu0 0.0
        %1311 = vmatpush1.msra.mxu0 0.0
        %1312 = vmatprep.subr.mxu0 0.0
        %1313 = vmatpush1.msra.mxu0 0.0
        %1314 = vmatprep.subr.mxu0 0.0
        %1315 = vmatpush1.msra.mxu0 0.0
        %1316 = vmatprep.subr.mxu0 0.0
        %1317 = vmatpush1.msra.mxu0 0.0
        %1318 = vmatprep.subr.mxu0 0.0
        %1319 = vmatpush1.msra.mxu0 0.0
        %1320 = vmatprep.subr.mxu0 0.0
        %1321 = vmatpush1.msra.mxu0 0.0
        %1322 = vmatprep.subr.mxu0 0.0
        %1323 = vmatpush1.msra.mxu0 0.0
        %1324 = vmatprep.subr.mxu0 0.0
        %1325 = vmatpush1.msra.mxu0 0.0
        %1326 = vmatprep.mubr.f32.mxu0 0.0
        %1327 = vmatmul.mubr.f32.gmra.mrb[0].mxu0 %v1260
        %v1328 = vpop.f32.mrb[0].mxu0
        %v1329 = vadd.f32 %v1255, %v1328
        %v1330 = vpop.f32.mrb[0].mxu0
        %v1331 = vadd.f32 %v1257, %v1330
        %1332 = vdwg.mxu0
        %1333 = vrot.lane.b32.xlu0 %v1164, 15
        %v1334 = vpop.permute.xlu0 %1333
        %1335 = vrot.lane.b32.xlu0 %v1165, 15
        %v1336 = vpop.permute.xlu0 %1335
        %v1337 = vsel %vm514, %v1334, %v1336
        %v1338 = vsel %vm514, %v1336, %v1334
        %v1339 = vsel %vm519, %v1338, 0.0
        %v1340 = vsel %vm520, %v1337, 0.0
        %s1341 = scalar_lea.vmem %s4, 16
        %v1342 = vld [vmem:[%s1341] sm:$0xff]
        %v1344 = vsel %vm361, %v1342, 0
        %1346 = vmatprep.subr.mxu0 %v1340
        %1347 = vmatpush1.msra.mxu0 %v1339
        %1348 = vmatprep.subr.mxu0 0.0
        %1349 = vmatpush1.msra.mxu0 0.0
        %1350 = vmatprep.subr.mxu0 0.0
        %1351 = vmatpush1.msra.mxu0 0.0
        %1352 = vmatprep.subr.mxu0 0.0
        %1353 = vmatpush1.msra.mxu0 0.0
        %1354 = vmatprep.subr.mxu0 0.0
        %1355 = vmatpush1.msra.mxu0 0.0
        %1356 = vmatprep.subr.mxu0 0.0
        %1357 = vmatpush1.msra.mxu0 0.0
        %1358 = vmatprep.subr.mxu0 0.0
        %1359 = vmatpush1.msra.mxu0 0.0
        %1360 = vmatprep.subr.mxu0 0.0
        %1361 = vmatpush1.msra.mxu0 0.0
        %1362 = vmatprep.subr.mxu0 0.0
        %1363 = vmatpush1.msra.mxu0 0.0
        %1364 = vmatprep.subr.mxu0 0.0
        %1365 = vmatpush1.msra.mxu0 0.0
        %1366 = vmatprep.subr.mxu0 0.0
        %1367 = vmatpush1.msra.mxu0 0.0
        %1368 = vmatprep.subr.mxu0 0.0
        %1369 = vmatpush1.msra.mxu0 0.0
        %1370 = vmatprep.subr.mxu0 0.0
        %1371 = vmatpush1.msra.mxu0 0.0
        %1372 = vmatprep.subr.mxu0 0.0
        %1373 = vmatpush1.msra.mxu0 0.0
        %1374 = vmatprep.subr.mxu0 0.0
        %1375 = vmatpush1.msra.mxu0 0.0
        %1376 = vmatprep.subr.mxu0 0.0
        %1377 = vmatpush1.msra.mxu0 0.0
        %1378 = vmatprep.subr.mxu0 0.0
        %1379 = vmatpush1.msra.mxu0 0.0
        %1380 = vmatprep.subr.mxu0 0.0
        %1381 = vmatpush1.msra.mxu0 0.0
        %1382 = vmatprep.subr.mxu0 0.0
        %1383 = vmatpush1.msra.mxu0 0.0
        %1384 = vmatprep.subr.mxu0 0.0
        %1385 = vmatpush1.msra.mxu0 0.0
        %1386 = vmatprep.subr.mxu0 0.0
        %1387 = vmatpush1.msra.mxu0 0.0
        %1388 = vmatprep.subr.mxu0 0.0
        %1389 = vmatpush1.msra.mxu0 0.0
        %1390 = vmatprep.subr.mxu0 0.0
        %1391 = vmatpush1.msra.mxu0 0.0
        %1392 = vmatprep.subr.mxu0 0.0
        %1393 = vmatpush1.msra.mxu0 0.0
        %1394 = vmatprep.subr.mxu0 0.0
        %1395 = vmatpush1.msra.mxu0 0.0
        %1396 = vmatprep.subr.mxu0 0.0
        %1397 = vmatpush1.msra.mxu0 0.0
        %1398 = vmatprep.subr.mxu0 0.0
        %1399 = vmatpush1.msra.mxu0 0.0
        %1400 = vmatprep.subr.mxu0 0.0
        %1401 = vmatpush1.msra.mxu0 0.0
        %1402 = vmatprep.subr.mxu0 0.0
        %1403 = vmatpush1.msra.mxu0 0.0
        %1404 = vmatprep.subr.mxu0 0.0
        %1405 = vmatpush1.msra.mxu0 0.0
        %1406 = vmatprep.subr.mxu0 0.0
        %1407 = vmatpush1.msra.mxu0 0.0
        %1408 = vmatprep.subr.mxu0 0.0
        %1409 = vmatpush1.msra.mxu0 0.0
        %1410 = vmatprep.mubr.f32.mxu0 0.0
        %1411 = vmatmul.mubr.f32.gmra.mrb[0].mxu0 %v1344
        %v1412 = vpop.f32.mrb[0].mxu0
        %v1413 = vadd.f32 0.0, %v1412
        %v1414 = vpop.f32.mrb[0].mxu0
        %v1415 = vadd.f32 0.0, %v1414
        %1416 = vdwg.mxu0
        %v1417 = vadd.f32 %v1329, %v1413
        %v1418 = vadd.f32 %v1331, %v1415
        %1419 = vrot.lane.b32.xlu0 %v1164, 1
        %v1420 = vpop.permute.xlu0 %1419
        %1421 = vrot.lane.b32.xlu0 %v1165, 1
        %v1422 = vpop.permute.xlu0 %1421
        %v1423 = vsel %vm605, %v1420, %v1422
        %v1424 = vsel %vm605, %v1422, %v1420
        %v1425 = vsel %vm610, %v1424, 0.0
        %v1426 = vsel %vm611, %v1423, 0.0
        %s1427 = scalar_lea.vmem %s4, 24
        %v1428 = vld [vmem:[%s1427] sm:$0xff]
        %v1430 = vsel %vm361, %v1428, 0
        %1432 = vmatprep.subr.mxu0 %v1426
        %1433 = vmatpush1.msra.mxu0 %v1425
        %1434 = vmatprep.subr.mxu0 0.0
        %1435 = vmatpush1.msra.mxu0 0.0
        %1436 = vmatprep.subr.mxu0 0.0
        %1437 = vmatpush1.msra.mxu0 0.0
        %1438 = vmatprep.subr.mxu0 0.0
        %1439 = vmatpush1.msra.mxu0 0.0
        %1440 = vmatprep.subr.mxu0 0.0
        %1441 = vmatpush1.msra.mxu0 0.0
        %1442 = vmatprep.subr.mxu0 0.0
        %1443 = vmatpush1.msra.mxu0 0.0
        %1444 = vmatprep.subr.mxu0 0.0
        %1445 = vmatpush1.msra.mxu0 0.0
        %1446 = vmatprep.subr.mxu0 0.0
        %1447 = vmatpush1.msra.mxu0 0.0
        %1448 = vmatprep.subr.mxu0 0.0
        %1449 = vmatpush1.msra.mxu0 0.0
        %1450 = vmatprep.subr.mxu0 0.0
        %1451 = vmatpush1.msra.mxu0 0.0
        %1452 = vmatprep.subr.mxu0 0.0
        %1453 = vmatpush1.msra.mxu0 0.0
        %1454 = vmatprep.subr.mxu0 0.0
        %1455 = vmatpush1.msra.mxu0 0.0
        %1456 = vmatprep.subr.mxu0 0.0
        %1457 = vmatpush1.msra.mxu0 0.0
        %1458 = vmatprep.subr.mxu0 0.0
        %1459 = vmatpush1.msra.mxu0 0.0
        %1460 = vmatprep.subr.mxu0 0.0
        %1461 = vmatpush1.msra.mxu0 0.0
        %1462 = vmatprep.subr.mxu0 0.0
        %1463 = vmatpush1.msra.mxu0 0.0
        %1464 = vmatprep.subr.mxu0 0.0
        %1465 = vmatpush1.msra.mxu0 0.0
        %1466 = vmatprep.subr.mxu0 0.0
        %1467 = vmatpush1.msra.mxu0 0.0
        %1468 = vmatprep.subr.mxu0 0.0
        %1469 = vmatpush1.msra.mxu0 0.0
        %1470 = vmatprep.subr.mxu0 0.0
        %1471 = vmatpush1.msra.mxu0 0.0
        %1472 = vmatprep.subr.mxu0 0.0
        %1473 = vmatpush1.msra.mxu0 0.0
        %1474 = vmatprep.subr.mxu0 0.0
        %1475 = vmatpush1.msra.mxu0 0.0
        %1476 = vmatprep.subr.mxu0 0.0
        %1477 = vmatpush1.msra.mxu0 0.0
        %1478 = vmatprep.subr.mxu0 0.0
        %1479 = vmatpush1.msra.mxu0 0.0
        %1480 = vmatprep.subr.mxu0 0.0
        %1481 = vmatpush1.msra.mxu0 0.0
        %1482 = vmatprep.subr.mxu0 0.0
        %1483 = vmatpush1.msra.mxu0 0.0
        %1484 = vmatprep.subr.mxu0 0.0
        %1485 = vmatpush1.msra.mxu0 0.0
        %1486 = vmatprep.subr.mxu0 0.0
        %1487 = vmatpush1.msra.mxu0 0.0
        %1488 = vmatprep.subr.mxu0 0.0
        %1489 = vmatpush1.msra.mxu0 0.0
        %1490 = vmatprep.subr.mxu0 0.0
        %1491 = vmatpush1.msra.mxu0 0.0
        %1492 = vmatprep.subr.mxu0 0.0
        %1493 = vmatpush1.msra.mxu0 0.0
        %1494 = vmatprep.subr.mxu0 0.0
        %1495 = vmatpush1.msra.mxu0 0.0
        %1496 = vmatprep.mubr.f32.mxu0 0.0
        %1497 = vmatmul.mubr.f32.gmra.mrb[0].mxu0 %v1430
        %v1498 = vpop.f32.mrb[0].mxu0
        %v1499 = vadd.f32 0.0, %v1498
        %v1500 = vpop.f32.mrb[0].mxu0
        %v1501 = vadd.f32 0.0, %v1500
        %1502 = vdwg.mxu0
        %v1503 = vadd.f32 %v1417, %v1499
        %v1504 = vadd.f32 %v1418, %v1501
        %s1505 = scalar_lea.vmem %s4, 32
        %v1506 = vld [vmem:[%s1505] sm:$0xff]
        %v1508 = vsel %vm361, %v1506, 0
        %1510 = vmatprep.subr.mxu0 %v1165
        %1511 = vmatpush1.msra.mxu0 %v1164
        %1512 = vmatprep.subr.mxu0 0.0
        %1513 = vmatpush1.msra.mxu0 0.0
        %1514 = vmatprep.subr.mxu0 0.0
        %1515 = vmatpush1.msra.mxu0 0.0
        %1516 = vmatprep.subr.mxu0 0.0
        %1517 = vmatpush1.msra.mxu0 0.0
        %1518 = vmatprep.subr.mxu0 0.0
        %1519 = vmatpush1.msra.mxu0 0.0
        %1520 = vmatprep.subr.mxu0 0.0
        %1521 = vmatpush1.msra.mxu0 0.0
        %1522 = vmatprep.subr.mxu0 0.0
        %1523 = vmatpush1.msra.mxu0 0.0
        %1524 = vmatprep.subr.mxu0 0.0
        %1525 = vmatpush1.msra.mxu0 0.0
        %1526 = vmatprep.subr.mxu0 0.0
        %1527 = vmatpush1.msra.mxu0 0.0
        %1528 = vmatprep.subr.mxu0 0.0
        %1529 = vmatpush1.msra.mxu0 0.0
        %1530 = vmatprep.subr.mxu0 0.0
        %1531 = vmatpush1.msra.mxu0 0.0
        %1532 = vmatprep.subr.mxu0 0.0
        %1533 = vmatpush1.msra.mxu0 0.0
        %1534 = vmatprep.subr.mxu0 0.0
        %1535 = vmatpush1.msra.mxu0 0.0
        %1536 = vmatprep.subr.mxu0 0.0
        %1537 = vmatpush1.msra.mxu0 0.0
        %1538 = vmatprep.subr.mxu0 0.0
        %1539 = vmatpush1.msra.mxu0 0.0
        %1540 = vmatprep.subr.mxu0 0.0
        %1541 = vmatpush1.msra.mxu0 0.0
        %1542 = vmatprep.subr.mxu0 0.0
        %1543 = vmatpush1.msra.mxu0 0.0
        %1544 = vmatprep.subr.mxu0 0.0
        %1545 = vmatpush1.msra.mxu0 0.0
        %1546 = vmatprep.subr.mxu0 0.0
        %1547 = vmatpush1.msra.mxu0 0.0
        %1548 = vmatprep.subr.mxu0 0.0
        %1549 = vmatpush1.msra.mxu0 0.0
        %1550 = vmatprep.subr.mxu0 0.0
        %1551 = vmatpush1.msra.mxu0 0.0
        %1552 = vmatprep.subr.mxu0 0.0
        %1553 = vmatpush1.msra.mxu0 0.0
        %1554 = vmatprep.subr.mxu0 0.0
        %1555 = vmatpush1.msra.mxu0 0.0
        %1556 = vmatprep.subr.mxu0 0.0
        %1557 = vmatpush1.msra.mxu0 0.0
        %1558 = vmatprep.subr.mxu0 0.0
        %1559 = vmatpush1.msra.mxu0 0.0
        %1560 = vmatprep.subr.mxu0 0.0
        %1561 = vmatpush1.msra.mxu0 0.0
        %1562 = vmatprep.subr.mxu0 0.0
        %1563 = vmatpush1.msra.mxu0 0.0
        %1564 = vmatprep.subr.mxu0 0.0
        %1565 = vmatpush1.msra.mxu0 0.0
        %1566 = vmatprep.subr.mxu0 0.0
        %1567 = vmatpush1.msra.mxu0 0.0
        %1568 = vmatprep.subr.mxu0 0.0
        %1569 = vmatpush1.msra.mxu0 0.0
        %1570 = vmatprep.subr.mxu0 0.0
        %1571 = vmatpush1.msra.mxu0 0.0
        %1572 = vmatprep.subr.mxu0 0.0
        %1573 = vmatpush1.msra.mxu0 0.0
        %1574 = vmatprep.mubr.f32.mxu0 0.0
        %1575 = vmatmul.mubr.f32.gmra.mrb[0].mxu0 %v1508
        %v1576 = vpop.f32.mrb[0].mxu0
        %v1577 = vadd.f32 0.0, %v1576
        %v1578 = vpop.f32.mrb[0].mxu0
        %v1579 = vadd.f32 0.0, %v1578
        %1580 = vdwg.mxu0
        %v1581 = vadd.f32 %v1503, %v1577
        %v1582 = vadd.f32 %v1504, %v1579
        %1583 = vrot.lane.b32.xlu0 %v1164, 127
        %v1584 = vpop.permute.xlu0 %1583
        %1585 = vrot.lane.b32.xlu0 %v1165, 127
        %v1586 = vpop.permute.xlu0 %1585
        %v1587 = vsel %vm774, %v1584, %v1586
        %v1588 = vsel %vm774, %v1586, %v1584
        %v1589 = vsel %vm779, %v1587, 0.0
        %v1590 = vsel %vm780, %v1588, 0.0
        %s1591 = scalar_lea.vmem %s4, 40
        %v1592 = vld [vmem:[%s1591] sm:$0xff]
        %v1594 = vsel %vm361, %v1592, 0
        %1596 = vmatprep.subr.mxu0 %v1590
        %1597 = vmatpush1.msra.mxu0 %v1589
        %1598 = vmatprep.subr.mxu0 0.0
        %1599 = vmatpush1.msra.mxu0 0.0
        %1600 = vmatprep.subr.mxu0 0.0
        %1601 = vmatpush1.msra.mxu0 0.0
        %1602 = vmatprep.subr.mxu0 0.0
        %1603 = vmatpush1.msra.mxu0 0.0
        %1604 = vmatprep.subr.mxu0 0.0
        %1605 = vmatpush1.msra.mxu0 0.0
        %1606 = vmatprep.subr.mxu0 0.0
        %1607 = vmatpush1.msra.mxu0 0.0
        %1608 = vmatprep.subr.mxu0 0.0
        %1609 = vmatpush1.msra.mxu0 0.0
        %1610 = vmatprep.subr.mxu0 0.0
        %1611 = vmatpush1.msra.mxu0 0.0
        %1612 = vmatprep.subr.mxu0 0.0
        %1613 = vmatpush1.msra.mxu0 0.0
        %1614 = vmatprep.subr.mxu0 0.0
        %1615 = vmatpush1.msra.mxu0 0.0
        %1616 = vmatprep.subr.mxu0 0.0
        %1617 = vmatpush1.msra.mxu0 0.0
        %1618 = vmatprep.subr.mxu0 0.0
        %1619 = vmatpush1.msra.mxu0 0.0
        %1620 = vmatprep.subr.mxu0 0.0
        %1621 = vmatpush1.msra.mxu0 0.0
        %1622 = vmatprep.subr.mxu0 0.0
        %1623 = vmatpush1.msra.mxu0 0.0
        %1624 = vmatprep.subr.mxu0 0.0
        %1625 = vmatpush1.msra.mxu0 0.0
        %1626 = vmatprep.subr.mxu0 0.0
        %1627 = vmatpush1.msra.mxu0 0.0
        %1628 = vmatprep.subr.mxu0 0.0
        %1629 = vmatpush1.msra.mxu0 0.0
        %1630 = vmatprep.subr.mxu0 0.0
        %1631 = vmatpush1.msra.mxu0 0.0
        %1632 = vmatprep.subr.mxu0 0.0
        %1633 = vmatpush1.msra.mxu0 0.0
        %1634 = vmatprep.subr.mxu0 0.0
        %1635 = vmatpush1.msra.mxu0 0.0
        %1636 = vmatprep.subr.mxu0 0.0
        %1637 = vmatpush1.msra.mxu0 0.0
        %1638 = vmatprep.subr.mxu0 0.0
        %1639 = vmatpush1.msra.mxu0 0.0
        %1640 = vmatprep.subr.mxu0 0.0
        %1641 = vmatpush1.msra.mxu0 0.0
        %1642 = vmatprep.subr.mxu0 0.0
        %1643 = vmatpush1.msra.mxu0 0.0
        %1644 = vmatprep.subr.mxu0 0.0
        %1645 = vmatpush1.msra.mxu0 0.0
        %1646 = vmatprep.subr.mxu0 0.0
        %1647 = vmatpush1.msra.mxu0 0.0
        %1648 = vmatprep.subr.mxu0 0.0
        %1649 = vmatpush1.msra.mxu0 0.0
        %1650 = vmatprep.subr.mxu0 0.0
        %1651 = vmatpush1.msra.mxu0 0.0
        %1652 = vmatprep.subr.mxu0 0.0
        %1653 = vmatpush1.msra.mxu0 0.0
        %1654 = vmatprep.subr.mxu0 0.0
        %1655 = vmatpush1.msra.mxu0 0.0
        %1656 = vmatprep.subr.mxu0 0.0
        %1657 = vmatpush1.msra.mxu0 0.0
        %1658 = vmatprep.subr.mxu0 0.0
        %1659 = vmatpush1.msra.mxu0 0.0
        %1660 = vmatprep.mubr.f32.mxu0 0.0
        %1661 = vmatmul.mubr.f32.gmra.mrb[0].mxu0 %v1594
        %v1662 = vpop.f32.mrb[0].mxu0
        %v1663 = vadd.f32 0.0, %v1662
        %v1664 = vpop.f32.mrb[0].mxu0
        %v1665 = vadd.f32 0.0, %v1664
        %1666 = vdwg.mxu0
        %v1667 = vadd.f32 %v1581, %v1663
        %v1668 = vadd.f32 %v1582, %v1665
        %1669 = vrot.lane.b32.xlu0 %v1164, 113
        %v1670 = vpop.permute.xlu0 %1669
        %1671 = vrot.lane.b32.xlu0 %v1165, 113
        %v1672 = vpop.permute.xlu0 %1671
        %v1673 = vsel %vm865, %v1670, %v1672
        %v1674 = vsel %vm865, %v1672, %v1670
        %v1675 = vsel %vm870, %v1673, 0.0
        %v1676 = vsel %vm871, %v1674, 0.0
        %s1677 = scalar_lea.vmem %s4, 48
        %v1678 = vld [vmem:[%s1677] sm:$0xff]
        %v1680 = vsel %vm361, %v1678, 0
        %1682 = vmatprep.subr.mxu0 %v1676
        %1683 = vmatpush1.msra.mxu0 %v1675
        %1684 = vmatprep.subr.mxu0 0.0
        %1685 = vmatpush1.msra.mxu0 0.0
        %1686 = vmatprep.subr.mxu0 0.0
        %1687 = vmatpush1.msra.mxu0 0.0
        %1688 = vmatprep.subr.mxu0 0.0
        %1689 = vmatpush1.msra.mxu0 0.0
        %1690 = vmatprep.subr.mxu0 0.0
        %1691 = vmatpush1.msra.mxu0 0.0
        %1692 = vmatprep.subr.mxu0 0.0
        %1693 = vmatpush1.msra.mxu0 0.0
        %1694 = vmatprep.subr.mxu0 0.0
        %1695 = vmatpush1.msra.mxu0 0.0
        %1696 = vmatprep.subr.mxu0 0.0
        %1697 = vmatpush1.msra.mxu0 0.0
        %1698 = vmatprep.subr.mxu0 0.0
        %1699 = vmatpush1.msra.mxu0 0.0
        %1700 = vmatprep.subr.mxu0 0.0
        %1701 = vmatpush1.msra.mxu0 0.0
        %1702 = vmatprep.subr.mxu0 0.0
        %1703 = vmatpush1.msra.mxu0 0.0
        %1704 = vmatprep.subr.mxu0 0.0
        %1705 = vmatpush1.msra.mxu0 0.0
        %1706 = vmatprep.subr.mxu0 0.0
        %1707 = vmatpush1.msra.mxu0 0.0
        %1708 = vmatprep.subr.mxu0 0.0
        %1709 = vmatpush1.msra.mxu0 0.0
        %1710 = vmatprep.subr.mxu0 0.0
        %1711 = vmatpush1.msra.mxu0 0.0
        %1712 = vmatprep.subr.mxu0 0.0
        %1713 = vmatpush1.msra.mxu0 0.0
        %1714 = vmatprep.subr.mxu0 0.0
        %1715 = vmatpush1.msra.mxu0 0.0
        %1716 = vmatprep.subr.mxu0 0.0
        %1717 = vmatpush1.msra.mxu0 0.0
        %1718 = vmatprep.subr.mxu0 0.0
        %1719 = vmatpush1.msra.mxu0 0.0
        %1720 = vmatprep.subr.mxu0 0.0
        %1721 = vmatpush1.msra.mxu0 0.0
        %1722 = vmatprep.subr.mxu0 0.0
        %1723 = vmatpush1.msra.mxu0 0.0
        %1724 = vmatprep.subr.mxu0 0.0
        %1725 = vmatpush1.msra.mxu0 0.0
        %1726 = vmatprep.subr.mxu0 0.0
        %1727 = vmatpush1.msra.mxu0 0.0
        %1728 = vmatprep.subr.mxu0 0.0
        %1729 = vmatpush1.msra.mxu0 0.0
        %1730 = vmatprep.subr.mxu0 0.0
        %1731 = vmatpush1.msra.mxu0 0.0
        %1732 = vmatprep.subr.mxu0 0.0
        %1733 = vmatpush1.msra.mxu0 0.0
        %1734 = vmatprep.subr.mxu0 0.0
        %1735 = vmatpush1.msra.mxu0 0.0
        %1736 = vmatprep.subr.mxu0 0.0
        %1737 = vmatpush1.msra.mxu0 0.0
        %1738 = vmatprep.subr.mxu0 0.0
        %1739 = vmatpush1.msra.mxu0 0.0
        %1740 = vmatprep.subr.mxu0 0.0
        %1741 = vmatpush1.msra.mxu0 0.0
        %1742 = vmatprep.subr.mxu0 0.0
        %1743 = vmatpush1.msra.mxu0 0.0
        %1744 = vmatprep.subr.mxu0 0.0
        %1745 = vmatpush1.msra.mxu0 0.0
        %1746 = vmatprep.mubr.f32.mxu0 0.0
        %1747 = vmatmul.mubr.f32.gmra.mrb[0].mxu0 %v1680
        %v1748 = vpop.f32.mrb[0].mxu0
        %v1749 = vadd.f32 0.0, %v1748
        %v1750 = vpop.f32.mrb[0].mxu0
        %v1751 = vadd.f32 0.0, %v1750
        %1752 = vdwg.mxu0
        %v1753 = vadd.f32 %v1667, %v1749
        %v1754 = vadd.f32 %v1668, %v1751
        %1755 = vrot.lane.b32.xlu0 %v1164, 112
        %v1756 = vpop.permute.xlu0 %1755
        %1757 = vrot.lane.b32.xlu0 %v1165, 112
        %v1758 = vpop.permute.xlu0 %1757
        %v1759 = vsel %vm956, %v1756, %v1758
        %v1760 = vsel %vm956, %v1758, %v1756
        %v1761 = vsel %vm961, %v1759, 0.0
        %v1762 = vsel %vm962, %v1760, 0.0
        %s1763 = scalar_lea.vmem %s4, 56
        %v1764 = vld [vmem:[%s1763] sm:$0xff]
        %v1766 = vsel %vm361, %v1764, 0
        %1768 = vmatprep.subr.mxu0 %v1762
        %1769 = vmatpush1.msra.mxu0 %v1761
        %1770 = vmatprep.subr.mxu0 0.0
        %1771 = vmatpush1.msra.mxu0 0.0
        %1772 = vmatprep.subr.mxu0 0.0
        %1773 = vmatpush1.msra.mxu0 0.0
        %1774 = vmatprep.subr.mxu0 0.0
        %1775 = vmatpush1.msra.mxu0 0.0
        %1776 = vmatprep.subr.mxu0 0.0
        %1777 = vmatpush1.msra.mxu0 0.0
        %1778 = vmatprep.subr.mxu0 0.0
        %1779 = vmatpush1.msra.mxu0 0.0
        %1780 = vmatprep.subr.mxu0 0.0
        %1781 = vmatpush1.msra.mxu0 0.0
        %1782 = vmatprep.subr.mxu0 0.0
        %1783 = vmatpush1.msra.mxu0 0.0
        %1784 = vmatprep.subr.mxu0 0.0
        %1785 = vmatpush1.msra.mxu0 0.0
        %1786 = vmatprep.subr.mxu0 0.0
        %1787 = vmatpush1.msra.mxu0 0.0
        %1788 = vmatprep.subr.mxu0 0.0
        %1789 = vmatpush1.msra.mxu0 0.0
        %1790 = vmatprep.subr.mxu0 0.0
        %1791 = vmatpush1.msra.mxu0 0.0
        %1792 = vmatprep.subr.mxu0 0.0
        %1793 = vmatpush1.msra.mxu0 0.0
        %1794 = vmatprep.subr.mxu0 0.0
        %1795 = vmatpush1.msra.mxu0 0.0
        %1796 = vmatprep.subr.mxu0 0.0
        %1797 = vmatpush1.msra.mxu0 0.0
        %1798 = vmatprep.subr.mxu0 0.0
        %1799 = vmatpush1.msra.mxu0 0.0
        %1800 = vmatprep.subr.mxu0 0.0
        %1801 = vmatpush1.msra.mxu0 0.0
        %1802 = vmatprep.subr.mxu0 0.0
        %1803 = vmatpush1.msra.mxu0 0.0
        %1804 = vmatprep.subr.mxu0 0.0
        %1805 = vmatpush1.msra.mxu0 0.0
        %1806 = vmatprep.subr.mxu0 0.0
        %1807 = vmatpush1.msra.mxu0 0.0
        %1808 = vmatprep.subr.mxu0 0.0
        %1809 = vmatpush1.msra.mxu0 0.0
        %1810 = vmatprep.subr.mxu0 0.0
        %1811 = vmatpush1.msra.mxu0 0.0
        %1812 = vmatprep.subr.mxu0 0.0
        %1813 = vmatpush1.msra.mxu0 0.0
        %1814 = vmatprep.subr.mxu0 0.0
        %1815 = vmatpush1.msra.mxu0 0.0
        %1816 = vmatprep.subr.mxu0 0.0
        %1817 = vmatpush1.msra.mxu0 0.0
        %1818 = vmatprep.subr.mxu0 0.0
        %1819 = vmatpush1.msra.mxu0 0.0
        %1820 = vmatprep.subr.mxu0 0.0
        %1821 = vmatpush1.msra.mxu0 0.0
        %1822 = vmatprep.subr.mxu0 0.0
        %1823 = vmatpush1.msra.mxu0 0.0
        %1824 = vmatprep.subr.mxu0 0.0
        %1825 = vmatpush1.msra.mxu0 0.0
        %1826 = vmatprep.subr.mxu0 0.0
        %1827 = vmatpush1.msra.mxu0 0.0
        %1828 = vmatprep.subr.mxu0 0.0
        %1829 = vmatpush1.msra.mxu0 0.0
        %1830 = vmatprep.subr.mxu0 0.0
        %1831 = vmatpush1.msra.mxu0 0.0
        %1832 = vmatprep.mubr.f32.mxu0 0.0
        %1833 = vmatmul.mubr.f32.gmra.mrb[0].mxu0 %v1766
        %v1834 = vpop.f32.mrb[0].mxu0
        %v1835 = vadd.f32 0.0, %v1834
        %v1836 = vpop.f32.mrb[0].mxu0
        %v1837 = vadd.f32 0.0, %v1836
        %1838 = vdwg.mxu0
        %v1839 = vadd.f32 %v1753, %v1835
        %v1840 = vadd.f32 %v1754, %v1837
        %1841 = vrot.lane.b32.xlu0 %v1164, 111
        %v1842 = vpop.permute.xlu0 %1841
        %1843 = vrot.lane.b32.xlu0 %v1165, 111
        %v1844 = vpop.permute.xlu0 %1843
        %v1845 = vsel %vm1047, %v1842, %v1844
        %v1846 = vsel %vm1047, %v1844, %v1842
        %v1847 = vsel %vm1052, %v1845, 0.0
        %v1848 = vsel %vm1053, %v1846, 0.0
        %s1849 = scalar_lea.vmem %s4, 64
        %v1850 = vld [vmem:[%s1849] sm:$0xff]
        %v1852 = vsel %vm361, %v1850, 0
        %1854 = vmatprep.subr.mxu0 %v1848
        %1855 = vmatpush1.msra.mxu0 %v1847
        %1856 = vmatprep.subr.mxu0 0.0
        %1857 = vmatpush1.msra.mxu0 0.0
        %1858 = vmatprep.subr.mxu0 0.0
        %1859 = vmatpush1.msra.mxu0 0.0
        %1860 = vmatprep.subr.mxu0 0.0
        %1861 = vmatpush1.msra.mxu0 0.0
        %1862 = vmatprep.subr.mxu0 0.0
        %1863 = vmatpush1.msra.mxu0 0.0
        %1864 = vmatprep.subr.mxu0 0.0
        %1865 = vmatpush1.msra.mxu0 0.0
        %1866 = vmatprep.subr.mxu0 0.0
        %1867 = vmatpush1.msra.mxu0 0.0
        %1868 = vmatprep.subr.mxu0 0.0
        %1869 = vmatpush1.msra.mxu0 0.0
        %1870 = vmatprep.subr.mxu0 0.0
        %1871 = vmatpush1.msra.mxu0 0.0
        %1872 = vmatprep.subr.mxu0 0.0
        %1873 = vmatpush1.msra.mxu0 0.0
        %1874 = vmatprep.subr.mxu0 0.0
        %1875 = vmatpush1.msra.mxu0 0.0
        %1876 = vmatprep.subr.mxu0 0.0
        %1877 = vmatpush1.msra.mxu0 0.0
        %1878 = vmatprep.subr.mxu0 0.0
        %1879 = vmatpush1.msra.mxu0 0.0
        %1880 = vmatprep.subr.mxu0 0.0
        %1881 = vmatpush1.msra.mxu0 0.0
        %1882 = vmatprep.subr.mxu0 0.0
        %1883 = vmatpush1.msra.mxu0 0.0
        %1884 = vmatprep.subr.mxu0 0.0
        %1885 = vmatpush1.msra.mxu0 0.0
        %1886 = vmatprep.subr.mxu0 0.0
        %1887 = vmatpush1.msra.mxu0 0.0
        %1888 = vmatprep.subr.mxu0 0.0
        %1889 = vmatpush1.msra.mxu0 0.0
        %1890 = vmatprep.subr.mxu0 0.0
        %1891 = vmatpush1.msra.mxu0 0.0
        %1892 = vmatprep.subr.mxu0 0.0
        %1893 = vmatpush1.msra.mxu0 0.0
        %1894 = vmatprep.subr.mxu0 0.0
        %1895 = vmatpush1.msra.mxu0 0.0
        %1896 = vmatprep.subr.mxu0 0.0
        %1897 = vmatpush1.msra.mxu0 0.0
        %1898 = vmatprep.subr.mxu0 0.0
        %1899 = vmatpush1.msra.mxu0 0.0
        %1900 = vmatprep.subr.mxu0 0.0
        %1901 = vmatpush1.msra.mxu0 0.0
        %1902 = vmatprep.subr.mxu0 0.0
        %1903 = vmatpush1.msra.mxu0 0.0
        %1904 = vmatprep.subr.mxu0 0.0
        %1905 = vmatpush1.msra.mxu0 0.0
        %1906 = vmatprep.subr.mxu0 0.0
        %1907 = vmatpush1.msra.mxu0 0.0
        %1908 = vmatprep.subr.mxu0 0.0
        %1909 = vmatpush1.msra.mxu0 0.0
        %1910 = vmatprep.subr.mxu0 0.0
        %1911 = vmatpush1.msra.mxu0 0.0
        %1912 = vmatprep.subr.mxu0 0.0
        %1913 = vmatpush1.msra.mxu0 0.0
        %1914 = vmatprep.subr.mxu0 0.0
        %1915 = vmatpush1.msra.mxu0 0.0
        %1916 = vmatprep.subr.mxu0 0.0
        %1917 = vmatpush1.msra.mxu0 0.0
        %1918 = vmatprep.mubr.f32.mxu0 0.0
        %1919 = vmatmul.mubr.f32.gmra.mrb[0].mxu0 %v1852
        %v1920 = vpop.f32.mrb[0].mxu0
        %v1921 = vadd.f32 0.0, %v1920
        %v1922 = vpop.f32.mrb[0].mxu0
        %v1923 = vadd.f32 0.0, %v1922
        %1924 = vdwg.mxu0
        %v1925 = vadd.f32 %v1839, %v1921
        %v1926 = vadd.f32 %v1840, %v1923
        %v1927 = vadd.f32 %v1925, %v1926
        %1928 = vadd.xlane.f32.xlu0 %v1927
        %v1929 = vpop.xlane.xlu0 %1928
        %v1930 = vmul.f32 %v1929, %v1137
        %v1931 = vsub.f32 %v1925, %v1930
        %v1932 = vsub.f32 %v1926, %v1930
        %v1933 = vmul.f32 %v1931, %v1931
        %v1934 = vmul.f32 %v1932, %v1932
        %v1935 = vadd.f32 %v1933, %v1934
        %1936 = vadd.xlane.f32.xlu0 %v1935
        %v1937 = vpop.xlane.xlu0 %1936
        %v1938 = vmul.f32 %v1937, %v1137
        %v1939 = vadd.f32 %v1938, 1e-05
        %v1940 = vrsqrt.pop %v1939
        %v1941 = vmul.f32 %v328, %v1940
        %1943 = vset.pattern.permute.xlu0 0
        %1944 = vperm.xlu0 %1943, %v1941
        %v1945 = vpop.permute.xlu0 %1944
        %v1947 = vmul.f32 %v1931, %v1945
        %v1948 = vmul.f32 %v1932, %v1945
        %1950 = vset.pattern.permute.xlu0 0
        %1951 = vperm.xlu0 %1950, %v329
        %v1952 = vpop.permute.xlu0 %1951
        %v1954 = vadd.f32 %v1947, %v1952
        %v1955 = vadd.f32 %v1948, %v1952
        %v1956 = vadd.f32 %v330, %v1954
        %v1957 = vadd.f32 %v331, %v1955
        %1958 = vst [vmem:[%s274] sm:$0xff] %v1956
        %1959 = vst [vmem:[%s274 + $0x8] sm:$0xff] %v1957
        %s1960 = scalar_lea.vmem %s280, 16
        %v1961 = vld [vmem:[%s1960] sm:$0xff]
        %v1962 = vld [vmem:[%s1960 + $0x8] sm:$0xff]
        %1963 = vrot.lane.b32.xlu0 %v1961, 17
        %v1964 = vpop.permute.xlu0 %1963
        %1965 = vrot.lane.b32.xlu0 %v1962, 17
        %v1966 = vpop.permute.xlu0 %1965
        %v1967 = vsel %vm336, %v1964, %v1966
        %v1968 = vsel %vm336, %v1966, %v1964
        %v1969 = vsel %vm341, %v1968, 0.0
        %v1970 = vsel %vm342, %v1967, 0.0
        %v1971 = vld [vmem:[%s1] sm:$0xff]
        %1972 = vrot.lane.b32.xlu0 %v1961, 16
        %v1973 = vpop.permute.xlu0 %1972
        %1974 = vrot.lane.b32.xlu0 %v1962, 16
        %v1975 = vpop.permute.xlu0 %1974
        %v1976 = vsel %vm350, %v1973, %v1975
        %v1977 = vsel %vm350, %v1975, %v1973
        %v1978 = vsel %vm355, %v1977, 0.0
        %v1979 = vsel %vm356, %v1976, 0.0
        %v1980 = vld [vmem:[%s359] sm:$0xff]
        %v1982 = vsel %vm361, %v1980, 0
        %1984 = vmatprep.subr.mxu0 %v1979
        %1985 = vmatpush1.msra.mxu0 %v1978
        %1986 = vmatprep.subr.mxu0 0.0
        %1987 = vmatpush1.msra.mxu0 0.0
        %1988 = vmatprep.subr.mxu0 0.0
        %1989 = vmatpush1.msra.mxu0 0.0
        %1990 = vmatprep.subr.mxu0 0.0
        %1991 = vmatpush1.msra.mxu0 0.0
        %1992 = vmatprep.subr.mxu0 0.0
        %1993 = vmatpush1.msra.mxu0 0.0
        %1994 = vmatprep.subr.mxu0 0.0
        %1995 = vmatpush1.msra.mxu0 0.0
        %1996 = vmatprep.subr.mxu0 0.0
        %1997 = vmatpush1.msra.mxu0 0.0
        %1998 = vmatprep.subr.mxu0 0.0
        %1999 = vmatpush1.msra.mxu0 0.0
        %2000 = vmatprep.subr.mxu0 0.0
        %2001 = vmatpush1.msra.mxu0 0.0
        %2002 = vmatprep.subr.mxu0 0.0
        %2003 = vmatpush1.msra.mxu0 0.0
        %2004 = vmatprep.subr.mxu0 0.0
        %2005 = vmatpush1.msra.mxu0 0.0
        %2006 = vmatprep.subr.mxu0 0.0
        %2007 = vmatpush1.msra.mxu0 0.0
        %2008 = vmatprep.subr.mxu0 0.0
        %2009 = vmatpush1.msra.mxu0 0.0
        %2010 = vmatprep.subr.mxu0 0.0
        %2011 = vmatpush1.msra.mxu0 0.0
        %2012 = vmatprep.subr.mxu0 0.0
        %2013 = vmatpush1.msra.mxu0 0.0
        %2014 = vmatprep.subr.mxu0 0.0
        %2015 = vmatpush1.msra.mxu0 0.0
        %2016 = vmatprep.subr.mxu0 0.0
        %2017 = vmatpush1.msra.mxu0 0.0
        %2018 = vmatprep.subr.mxu0 0.0
        %2019 = vmatpush1.msra.mxu0 0.0
        %2020 = vmatprep.subr.mxu0 0.0
        %2021 = vmatpush1.msra.mxu0 0.0
        %2022 = vmatprep.subr.mxu0 0.0
        %2023 = vmatpush1.msra.mxu0 0.0
        %2024 = vmatprep.subr.mxu0 0.0
        %2025 = vmatpush1.msra.mxu0 0.0
        %2026 = vmatprep.subr.mxu0 0.0
        %2027 = vmatpush1.msra.mxu0 0.0
        %2028 = vmatprep.subr.mxu0 0.0
        %2029 = vmatpush1.msra.mxu0 0.0
        %2030 = vmatprep.subr.mxu0 0.0
        %2031 = vmatpush1.msra.mxu0 0.0
        %2032 = vmatprep.subr.mxu0 0.0
        %2033 = vmatpush1.msra.mxu0 0.0
        %2034 = vmatprep.subr.mxu0 0.0
        %2035 = vmatpush1.msra.mxu0 0.0
        %2036 = vmatprep.subr.mxu0 0.0
        %2037 = vmatpush1.msra.mxu0 0.0
        %2038 = vmatprep.subr.mxu0 0.0
        %2039 = vmatpush1.msra.mxu0 0.0
        %2040 = vmatprep.subr.mxu0 0.0
        %2041 = vmatpush1.msra.mxu0 0.0
        %2042 = vmatprep.subr.mxu0 0.0
        %2043 = vmatpush1.msra.mxu0 0.0
        %2044 = vmatprep.subr.mxu0 0.0
        %2045 = vmatpush1.msra.mxu0 0.0
        %2046 = vmatprep.subr.mxu0 0.0
        %2047 = vmatpush1.msra.mxu0 0.0
        %2048 = vmatprep.mubr.f32.mxu0 0.0
        %2049 = vmatmul.mubr.f32.gmra.mrb[0].mxu0 %v1982
        %v2050 = vpop.f32.mrb[0].mxu0
        %v2051 = vadd.f32 0.0, %v2050
        %v2052 = vpop.f32.mrb[0].mxu0
        %v2053 = vadd.f32 0.0, %v2052
        %2054 = vdwg.mxu0
        %v2056 = vsel %vm361, %v1971, 0
        %2058 = vmatprep.subr.mxu0 %v1970
        %2059 = vmatpush1.msra.mxu0 %v1969
        %2060 = vmatprep.subr.mxu0 0.0
        %2061 = vmatpush1.msra.mxu0 0.0
        %2062 = vmatprep.subr.mxu0 0.0
        %2063 = vmatpush1.msra.mxu0 0.0
        %2064 = vmatprep.subr.mxu0 0.0
        %2065 = vmatpush1.msra.mxu0 0.0
        %2066 = vmatprep.subr.mxu0 0.0
        %2067 = vmatpush1.msra.mxu0 0.0
        %2068 = vmatprep.subr.mxu0 0.0
        %2069 = vmatpush1.msra.mxu0 0.0
        %2070 = vmatprep.subr.mxu0 0.0
        %2071 = vmatpush1.msra.mxu0 0.0
        %2072 = vmatprep.subr.mxu0 0.0
        %2073 = vmatpush1.msra.mxu0 0.0
        %2074 = vmatprep.subr.mxu0 0.0
        %2075 = vmatpush1.msra.mxu0 0.0
        %2076 = vmatprep.subr.mxu0 0.0
        %2077 = vmatpush1.msra.mxu0 0.0
        %2078 = vmatprep.subr.mxu0 0.0
        %2079 = vmatpush1.msra.mxu0 0.0
        %2080 = vmatprep.subr.mxu0 0.0
        %2081 = vmatpush1.msra.mxu0 0.0
        %2082 = vmatprep.subr.mxu0 0.0
        %2083 = vmatpush1.msra.mxu0 0.0
        %2084 = vmatprep.subr.mxu0 0.0
        %2085 = vmatpush1.msra.mxu0 0.0
        %2086 = vmatprep.subr.mxu0 0.0
        %2087 = vmatpush1.msra.mxu0 0.0
        %2088 = vmatprep.subr.mxu0 0.0
        %2089 = vmatpush1.msra.mxu0 0.0
        %2090 = vmatprep.subr.mxu0 0.0
        %2091 = vmatpush1.msra.mxu0 0.0
        %2092 = vmatprep.subr.mxu0 0.0
        %2093 = vmatpush1.msra.mxu0 0.0
        %2094 = vmatprep.subr.mxu0 0.0
        %2095 = vmatpush1.msra.mxu0 0.0
        %2096 = vmatprep.subr.mxu0 0.0
        %2097 = vmatpush1.msra.mxu0 0.0
        %2098 = vmatprep.subr.mxu0 0.0
        %2099 = vmatpush1.msra.mxu0 0.0
        %2100 = vmatprep.subr.mxu0 0.0
        %2101 = vmatpush1.msra.mxu0 0.0
        %2102 = vmatprep.subr.mxu0 0.0
        %2103 = vmatpush1.msra.mxu0 0.0
        %2104 = vmatprep.subr.mxu0 0.0
        %2105 = vmatpush1.msra.mxu0 0.0
        %2106 = vmatprep.subr.mxu0 0.0
        %2107 = vmatpush1.msra.mxu0 0.0
        %2108 = vmatprep.subr.mxu0 0.0
        %2109 = vmatpush1.msra.mxu0 0.0
        %2110 = vmatprep.subr.mxu0 0.0
        %2111 = vmatpush1.msra.mxu0 0.0
        %2112 = vmatprep.subr.mxu0 0.0
        %2113 = vmatpush1.msra.mxu0 0.0
        %2114 = vmatprep.subr.mxu0 0.0
        %2115 = vmatpush1.msra.mxu0 0.0
        %2116 = vmatprep.subr.mxu0 0.0
        %2117 = vmatpush1.msra.mxu0 0.0
        %2118 = vmatprep.subr.mxu0 0.0
        %2119 = vmatpush1.msra.mxu0 0.0
        %2120 = vmatprep.subr.mxu0 0.0
        %2121 = vmatpush1.msra.mxu0 0.0
        %2122 = vmatprep.mubr.f32.mxu0 0.0
        %2123 = vmatmul.mubr.f32.gmra.mrb[0].mxu0 %v2056
        %v2124 = vpop.f32.mrb[0].mxu0
        %v2125 = vadd.f32 %v2051, %v2124
        %v2126 = vpop.f32.mrb[0].mxu0
        %v2127 = vadd.f32 %v2053, %v2126
        %2128 = vdwg.mxu0
        %2129 = vrot.lane.b32.xlu0 %v1961, 15
        %v2130 = vpop.permute.xlu0 %2129
        %2131 = vrot.lane.b32.xlu0 %v1962, 15
        %v2132 = vpop.permute.xlu0 %2131
        %v2133 = vsel %vm514, %v2130, %v2132
        %v2134 = vsel %vm514, %v2132, %v2130
        %v2135 = vsel %vm519, %v2134, 0.0
        %v2136 = vsel %vm520, %v2133, 0.0
        %v2137 = vld [vmem:[%s523] sm:$0xff]
        %v2139 = vsel %vm361, %v2137, 0
        %2141 = vmatprep.subr.mxu0 %v2136
        %2142 = vmatpush1.msra.mxu0 %v2135
        %2143 = vmatprep.subr.mxu0 0.0
        %2144 = vmatpush1.msra.mxu0 0.0
        %2145 = vmatprep.subr.mxu0 0.0
        %2146 = vmatpush1.msra.mxu0 0.0
        %2147 = vmatprep.subr.mxu0 0.0
        %2148 = vmatpush1.msra.mxu0 0.0
        %2149 = vmatprep.subr.mxu0 0.0
        %2150 = vmatpush1.msra.mxu0 0.0
        %2151 = vmatprep.subr.mxu0 0.0
        %2152 = vmatpush1.msra.mxu0 0.0
        %2153 = vmatprep.subr.mxu0 0.0
        %2154 = vmatpush1.msra.mxu0 0.0
        %2155 = vmatprep.subr.mxu0 0.0
        %2156 = vmatpush1.msra.mxu0 0.0
        %2157 = vmatprep.subr.mxu0 0.0
        %2158 = vmatpush1.msra.mxu0 0.0
        %2159 = vmatprep.subr.mxu0 0.0
        %2160 = vmatpush1.msra.mxu0 0.0
        %2161 = vmatprep.subr.mxu0 0.0
        %2162 = vmatpush1.msra.mxu0 0.0
        %2163 = vmatprep.subr.mxu0 0.0
        %2164 = vmatpush1.msra.mxu0 0.0
        %2165 = vmatprep.subr.mxu0 0.0
        %2166 = vmatpush1.msra.mxu0 0.0
        %2167 = vmatprep.subr.mxu0 0.0
        %2168 = vmatpush1.msra.mxu0 0.0
        %2169 = vmatprep.subr.mxu0 0.0
        %2170 = vmatpush1.msra.mxu0 0.0
        %2171 = vmatprep.subr.mxu0 0.0
        %2172 = vmatpush1.msra.mxu0 0.0
        %2173 = vmatprep.subr.mxu0 0.0
        %2174 = vmatpush1.msra.mxu0 0.0
        %2175 = vmatprep.subr.mxu0 0.0
        %2176 = vmatpush1.msra.mxu0 0.0
        %2177 = vmatprep.subr.mxu0 0.0
        %2178 = vmatpush1.msra.mxu0 0.0
        %2179 = vmatprep.subr.mxu0 0.0
        %2180 = vmatpush1.msra.mxu0 0.0
        %2181 = vmatprep.subr.mxu0 0.0
        %2182 = vmatpush1.msra.mxu0 0.0
        %2183 = vmatprep.subr.mxu0 0.0
        %2184 = vmatpush1.msra.mxu0 0.0
        %2185 = vmatprep.subr.mxu0 0.0
        %2186 = vmatpush1.msra.mxu0 0.0
        %2187 = vmatprep.subr.mxu0 0.0
        %2188 = vmatpush1.msra.mxu0 0.0
        %2189 = vmatprep.subr.mxu0 0.0
        %2190 = vmatpush1.msra.mxu0 0.0
        %2191 = vmatprep.subr.mxu0 0.0
        %2192 = vmatpush1.msra.mxu0 0.0
        %2193 = vmatprep.subr.mxu0 0.0
        %2194 = vmatpush1.msra.mxu0 0.0
        %2195 = vmatprep.subr.mxu0 0.0
        %2196 = vmatpush1.msra.mxu0 0.0
        %2197 = vmatprep.subr.mxu0 0.0
        %2198 = vmatpush1.msra.mxu0 0.0
        %2199 = vmatprep.subr.mxu0 0.0
        %2200 = vmatpush1.msra.mxu0 0.0
        %2201 = vmatprep.subr.mxu0 0.0
        %2202 = vmatpush1.msra.mxu0 0.0
        %2203 = vmatprep.subr.mxu0 0.0
        %2204 = vmatpush1.msra.mxu0 0.0
        %2205 = vmatprep.mubr.f32.mxu0 0.0
        %2206 = vmatmul.mubr.f32.gmra.mrb[0].mxu0 %v2139
        %v2207 = vpop.f32.mrb[0].mxu0
        %v2208 = vadd.f32 0.0, %v2207
        %v2209 = vpop.f32.mrb[0].mxu0
        %v2210 = vadd.f32 0.0, %v2209
        %2211 = vdwg.mxu0
        %v2212 = vadd.f32 %v2125, %v2208
        %v2213 = vadd.f32 %v2127, %v2210
        %2214 = vrot.lane.b32.xlu0 %v1961, 1
        %v2215 = vpop.permute.xlu0 %2214
        %2216 = vrot.lane.b32.xlu0 %v1962, 1
        %v2217 = vpop.permute.xlu0 %2216
        %v2218 = vsel %vm605, %v2215, %v2217
        %v2219 = vsel %vm605, %v2217, %v2215
        %v2220 = vsel %vm610, %v2219, 0.0
        %v2221 = vsel %vm611, %v2218, 0.0
        %v2222 = vld [vmem:[%s614] sm:$0xff]
        %v2224 = vsel %vm361, %v2222, 0
        %2226 = vmatprep.subr.mxu0 %v2221
        %2227 = vmatpush1.msra.mxu0 %v2220
        %2228 = vmatprep.subr.mxu0 0.0
        %2229 = vmatpush1.msra.mxu0 0.0
        %2230 = vmatprep.subr.mxu0 0.0
        %2231 = vmatpush1.msra.mxu0 0.0
        %2232 = vmatprep.subr.mxu0 0.0
        %2233 = vmatpush1.msra.mxu0 0.0
        %2234 = vmatprep.subr.mxu0 0.0
        %2235 = vmatpush1.msra.mxu0 0.0
        %2236 = vmatprep.subr.mxu0 0.0
        %2237 = vmatpush1.msra.mxu0 0.0
        %2238 = vmatprep.subr.mxu0 0.0
        %2239 = vmatpush1.msra.mxu0 0.0
        %2240 = vmatprep.subr.mxu0 0.0
        %2241 = vmatpush1.msra.mxu0 0.0
        %2242 = vmatprep.subr.mxu0 0.0
        %2243 = vmatpush1.msra.mxu0 0.0
        %2244 = vmatprep.subr.mxu0 0.0
        %2245 = vmatpush1.msra.mxu0 0.0
        %2246 = vmatprep.subr.mxu0 0.0
        %2247 = vmatpush1.msra.mxu0 0.0
        %2248 = vmatprep.subr.mxu0 0.0
        %2249 = vmatpush1.msra.mxu0 0.0
        %2250 = vmatprep.subr.mxu0 0.0
        %2251 = vmatpush1.msra.mxu0 0.0
        %2252 = vmatprep.subr.mxu0 0.0
        %2253 = vmatpush1.msra.mxu0 0.0
        %2254 = vmatprep.subr.mxu0 0.0
        %2255 = vmatpush1.msra.mxu0 0.0
        %2256 = vmatprep.subr.mxu0 0.0
        %2257 = vmatpush1.msra.mxu0 0.0
        %2258 = vmatprep.subr.mxu0 0.0
        %2259 = vmatpush1.msra.mxu0 0.0
        %2260 = vmatprep.subr.mxu0 0.0
        %2261 = vmatpush1.msra.mxu0 0.0
        %2262 = vmatprep.subr.mxu0 0.0
        %2263 = vmatpush1.msra.mxu0 0.0
        %2264 = vmatprep.subr.mxu0 0.0
        %2265 = vmatpush1.msra.mxu0 0.0
        %2266 = vmatprep.subr.mxu0 0.0
        %2267 = vmatpush1.msra.mxu0 0.0
        %2268 = vmatprep.subr.mxu0 0.0
        %2269 = vmatpush1.msra.mxu0 0.0
        %2270 = vmatprep.subr.mxu0 0.0
        %2271 = vmatpush1.msra.mxu0 0.0
        %2272 = vmatprep.subr.mxu0 0.0
        %2273 = vmatpush1.msra.mxu0 0.0
        %2274 = vmatprep.subr.mxu0 0.0
        %2275 = vmatpush1.msra.mxu0 0.0
        %2276 = vmatprep.subr.mxu0 0.0
        %2277 = vmatpush1.msra.mxu0 0.0
        %2278 = vmatprep.subr.mxu0 0.0
        %2279 = vmatpush1.msra.mxu0 0.0
        %2280 = vmatprep.subr.mxu0 0.0
        %2281 = vmatpush1.msra.mxu0 0.0
        %2282 = vmatprep.subr.mxu0 0.0
        %2283 = vmatpush1.msra.mxu0 0.0
        %2284 = vmatprep.subr.mxu0 0.0
        %2285 = vmatpush1.msra.mxu0 0.0
        %2286 = vmatprep.subr.mxu0 0.0
        %2287 = vmatpush1.msra.mxu0 0.0
        %2288 = vmatprep.subr.mxu0 0.0
        %2289 = vmatpush1.msra.mxu0 0.0
        %2290 = vmatprep.mubr.f32.mxu0 0.0
        %2291 = vmatmul.mubr.f32.gmra.mrb[0].mxu0 %v2224
        %v2292 = vpop.f32.mrb[0].mxu0
        %v2293 = vadd.f32 0.0, %v2292
        %v2294 = vpop.f32.mrb[0].mxu0
        %v2295 = vadd.f32 0.0, %v2294
        %2296 = vdwg.mxu0
        %v2297 = vadd.f32 %v2212, %v2293
        %v2298 = vadd.f32 %v2213, %v2295
        %v2299 = vld [vmem:[%s692] sm:$0xff]
        %v2301 = vsel %vm361, %v2299, 0
        %2303 = vmatprep.subr.mxu0 %v1962
        %2304 = vmatpush1.msra.mxu0 %v1961
        %2305 = vmatprep.subr.mxu0 0.0
        %2306 = vmatpush1.msra.mxu0 0.0
        %2307 = vmatprep.subr.mxu0 0.0
        %2308 = vmatpush1.msra.mxu0 0.0
        %2309 = vmatprep.subr.mxu0 0.0
        %2310 = vmatpush1.msra.mxu0 0.0
        %2311 = vmatprep.subr.mxu0 0.0
        %2312 = vmatpush1.msra.mxu0 0.0
        %2313 = vmatprep.subr.mxu0 0.0
        %2314 = vmatpush1.msra.mxu0 0.0
        %2315 = vmatprep.subr.mxu0 0.0
        %2316 = vmatpush1.msra.mxu0 0.0
        %2317 = vmatprep.subr.mxu0 0.0
        %2318 = vmatpush1.msra.mxu0 0.0
        %2319 = vmatprep.subr.mxu0 0.0
        %2320 = vmatpush1.msra.mxu0 0.0
        %2321 = vmatprep.subr.mxu0 0.0
        %2322 = vmatpush1.msra.mxu0 0.0
        %2323 = vmatprep.subr.mxu0 0.0
        %2324 = vmatpush1.msra.mxu0 0.0
        %2325 = vmatprep.subr.mxu0 0.0
        %2326 = vmatpush1.msra.mxu0 0.0
        %2327 = vmatprep.subr.mxu0 0.0
        %2328 = vmatpush1.msra.mxu0 0.0
        %2329 = vmatprep.subr.mxu0 0.0
        %2330 = vmatpush1.msra.mxu0 0.0
        %2331 = vmatprep.subr.mxu0 0.0
        %2332 = vmatpush1.msra.mxu0 0.0
        %2333 = vmatprep.subr.mxu0 0.0
        %2334 = vmatpush1.msra.mxu0 0.0
        %2335 = vmatprep.subr.mxu0 0.0
        %2336 = vmatpush1.msra.mxu0 0.0
        %2337 = vmatprep.subr.mxu0 0.0
        %2338 = vmatpush1.msra.mxu0 0.0
        %2339 = vmatprep.subr.mxu0 0.0
        %2340 = vmatpush1.msra.mxu0 0.0
        %2341 = vmatprep.subr.mxu0 0.0
        %2342 = vmatpush1.msra.mxu0 0.0
        %2343 = vmatprep.subr.mxu0 0.0
        %2344 = vmatpush1.msra.mxu0 0.0
        %2345 = vmatprep.subr.mxu0 0.0
        %2346 = vmatpush1.msra.mxu0 0.0
        %2347 = vmatprep.subr.mxu0 0.0
        %2348 = vmatpush1.msra.mxu0 0.0
        %2349 = vmatprep.subr.mxu0 0.0
        %2350 = vmatpush1.msra.mxu0 0.0
        %2351 = vmatprep.subr.mxu0 0.0
        %2352 = vmatpush1.msra.mxu0 0.0
        %2353 = vmatprep.subr.mxu0 0.0
        %2354 = vmatpush1.msra.mxu0 0.0
        %2355 = vmatprep.subr.mxu0 0.0
        %2356 = vmatpush1.msra.mxu0 0.0
        %2357 = vmatprep.subr.mxu0 0.0
        %2358 = vmatpush1.msra.mxu0 0.0
        %2359 = vmatprep.subr.mxu0 0.0
        %2360 = vmatpush1.msra.mxu0 0.0
        %2361 = vmatprep.subr.mxu0 0.0
        %2362 = vmatpush1.msra.mxu0 0.0
        %2363 = vmatprep.subr.mxu0 0.0
        %2364 = vmatpush1.msra.mxu0 0.0
        %2365 = vmatprep.subr.mxu0 0.0
        %2366 = vmatpush1.msra.mxu0 0.0
        %2367 = vmatprep.mubr.f32.mxu0 0.0
        %2368 = vmatmul.mubr.f32.gmra.mrb[0].mxu0 %v2301
        %v2369 = vpop.f32.mrb[0].mxu0
        %v2370 = vadd.f32 0.0, %v2369
        %v2371 = vpop.f32.mrb[0].mxu0
        %v2372 = vadd.f32 0.0, %v2371
        %2373 = vdwg.mxu0
        %v2374 = vadd.f32 %v2297, %v2370
        %v2375 = vadd.f32 %v2298, %v2372
        %2376 = vrot.lane.b32.xlu0 %v1961, 127
        %v2377 = vpop.permute.xlu0 %2376
        %2378 = vrot.lane.b32.xlu0 %v1962, 127
        %v2379 = vpop.permute.xlu0 %2378
        %v2380 = vsel %vm774, %v2377, %v2379
        %v2381 = vsel %vm774, %v2379, %v2377
        %v2382 = vsel %vm779, %v2380, 0.0
        %v2383 = vsel %vm780, %v2381, 0.0
        %v2384 = vld [vmem:[%s783] sm:$0xff]
        %v2386 = vsel %vm361, %v2384, 0
        %2388 = vmatprep.subr.mxu0 %v2383
        %2389 = vmatpush1.msra.mxu0 %v2382
        %2390 = vmatprep.subr.mxu0 0.0
        %2391 = vmatpush1.msra.mxu0 0.0
        %2392 = vmatprep.subr.mxu0 0.0
        %2393 = vmatpush1.msra.mxu0 0.0
        %2394 = vmatprep.subr.mxu0 0.0
        %2395 = vmatpush1.msra.mxu0 0.0
        %2396 = vmatprep.subr.mxu0 0.0
        %2397 = vmatpush1.msra.mxu0 0.0
        %2398 = vmatprep.subr.mxu0 0.0
        %2399 = vmatpush1.msra.mxu0 0.0
        %2400 = vmatprep.subr.mxu0 0.0
        %2401 = vmatpush1.msra.mxu0 0.0
        %2402 = vmatprep.subr.mxu0 0.0
        %2403 = vmatpush1.msra.mxu0 0.0
        %2404 = vmatprep.subr.mxu0 0.0
        %2405 = vmatpush1.msra.mxu0 0.0
        %2406 = vmatprep.subr.mxu0 0.0
        %2407 = vmatpush1.msra.mxu0 0.0
        %2408 = vmatprep.subr.mxu0 0.0
        %2409 = vmatpush1.msra.mxu0 0.0
        %2410 = vmatprep.subr.mxu0 0.0
        %2411 = vmatpush1.msra.mxu0 0.0
        %2412 = vmatprep.subr.mxu0 0.0
        %2413 = vmatpush1.msra.mxu0 0.0
        %2414 = vmatprep.subr.mxu0 0.0
        %2415 = vmatpush1.msra.mxu0 0.0
        %2416 = vmatprep.subr.mxu0 0.0
        %2417 = vmatpush1.msra.mxu0 0.0
        %2418 = vmatprep.subr.mxu0 0.0
        %2419 = vmatpush1.msra.mxu0 0.0
        %2420 = vmatprep.subr.mxu0 0.0
        %2421 = vmatpush1.msra.mxu0 0.0
        %2422 = vmatprep.subr.mxu0 0.0
        %2423 = vmatpush1.msra.mxu0 0.0
        %2424 = vmatprep.subr.mxu0 0.0
        %2425 = vmatpush1.msra.mxu0 0.0
        %2426 = vmatprep.subr.mxu0 0.0
        %2427 = vmatpush1.msra.mxu0 0.0
        %2428 = vmatprep.subr.mxu0 0.0
        %2429 = vmatpush1.msra.mxu0 0.0
        %2430 = vmatprep.subr.mxu0 0.0
        %2431 = vmatpush1.msra.mxu0 0.0
        %2432 = vmatprep.subr.mxu0 0.0
        %2433 = vmatpush1.msra.mxu0 0.0
        %2434 = vmatprep.subr.mxu0 0.0
        %2435 = vmatpush1.msra.mxu0 0.0
        %2436 = vmatprep.subr.mxu0 0.0
        %2437 = vmatpush1.msra.mxu0 0.0
        %2438 = vmatprep.subr.mxu0 0.0
        %2439 = vmatpush1.msra.mxu0 0.0
        %2440 = vmatprep.subr.mxu0 0.0
        %2441 = vmatpush1.msra.mxu0 0.0
        %2442 = vmatprep.subr.mxu0 0.0
        %2443 = vmatpush1.msra.mxu0 0.0
        %2444 = vmatprep.subr.mxu0 0.0
        %2445 = vmatpush1.msra.mxu0 0.0
        %2446 = vmatprep.subr.mxu0 0.0
        %2447 = vmatpush1.msra.mxu0 0.0
        %2448 = vmatprep.subr.mxu0 0.0
        %2449 = vmatpush1.msra.mxu0 0.0
        %2450 = vmatprep.subr.mxu0 0.0
        %2451 = vmatpush1.msra.mxu0 0.0
        %2452 = vmatprep.mubr.f32.mxu0 0.0
        %2453 = vmatmul.mubr.f32.gmra.mrb[0].mxu0 %v2386
        %v2454 = vpop.f32.mrb[0].mxu0
        %v2455 = vadd.f32 0.0, %v2454
        %v2456 = vpop.f32.mrb[0].mxu0
        %v2457 = vadd.f32 0.0, %v2456
        %2458 = vdwg.mxu0
        %v2459 = vadd.f32 %v2374, %v2455
        %v2460 = vadd.f32 %v2375, %v2457
        %2461 = vrot.lane.b32.xlu0 %v1961, 113
        %v2462 = vpop.permute.xlu0 %2461
        %2463 = vrot.lane.b32.xlu0 %v1962, 113
        %v2464 = vpop.permute.xlu0 %2463
        %v2465 = vsel %vm865, %v2462, %v2464
        %v2466 = vsel %vm865, %v2464, %v2462
        %v2467 = vsel %vm870, %v2465, 0.0
        %v2468 = vsel %vm871, %v2466, 0.0
        %v2469 = vld [vmem:[%s874] sm:$0xff]
        %v2471 = vsel %vm361, %v2469, 0
        %2473 = vmatprep.subr.mxu0 %v2468
        %2474 = vmatpush1.msra.mxu0 %v2467
        %2475 = vmatprep.subr.mxu0 0.0
        %2476 = vmatpush1.msra.mxu0 0.0
        %2477 = vmatprep.subr.mxu0 0.0
        %2478 = vmatpush1.msra.mxu0 0.0
        %2479 = vmatprep.subr.mxu0 0.0
        %2480 = vmatpush1.msra.mxu0 0.0
        %2481 = vmatprep.subr.mxu0 0.0
        %2482 = vmatpush1.msra.mxu0 0.0
        %2483 = vmatprep.subr.mxu0 0.0
        %2484 = vmatpush1.msra.mxu0 0.0
        %2485 = vmatprep.subr.mxu0 0.0
        %2486 = vmatpush1.msra.mxu0 0.0
        %2487 = vmatprep.subr.mxu0 0.0
        %2488 = vmatpush1.msra.mxu0 0.0
        %2489 = vmatprep.subr.mxu0 0.0
        %2490 = vmatpush1.msra.mxu0 0.0
        %2491 = vmatprep.subr.mxu0 0.0
        %2492 = vmatpush1.msra.mxu0 0.0
        %2493 = vmatprep.subr.mxu0 0.0
        %2494 = vmatpush1.msra.mxu0 0.0
        %2495 = vmatprep.subr.mxu0 0.0
        %2496 = vmatpush1.msra.mxu0 0.0
        %2497 = vmatprep.subr.mxu0 0.0
        %2498 = vmatpush1.msra.mxu0 0.0
        %2499 = vmatprep.subr.mxu0 0.0
        %2500 = vmatpush1.msra.mxu0 0.0
        %2501 = vmatprep.subr.mxu0 0.0
        %2502 = vmatpush1.msra.mxu0 0.0
        %2503 = vmatprep.subr.mxu0 0.0
        %2504 = vmatpush1.msra.mxu0 0.0
        %2505 = vmatprep.subr.mxu0 0.0
        %2506 = vmatpush1.msra.mxu0 0.0
        %2507 = vmatprep.subr.mxu0 0.0
        %2508 = vmatpush1.msra.mxu0 0.0
        %2509 = vmatprep.subr.mxu0 0.0
        %2510 = vmatpush1.msra.mxu0 0.0
        %2511 = vmatprep.subr.mxu0 0.0
        %2512 = vmatpush1.msra.mxu0 0.0
        %2513 = vmatprep.subr.mxu0 0.0
        %2514 = vmatpush1.msra.mxu0 0.0
        %2515 = vmatprep.subr.mxu0 0.0
        %2516 = vmatpush1.msra.mxu0 0.0
        %2517 = vmatprep.subr.mxu0 0.0
        %2518 = vmatpush1.msra.mxu0 0.0
        %2519 = vmatprep.subr.mxu0 0.0
        %2520 = vmatpush1.msra.mxu0 0.0
        %2521 = vmatprep.subr.mxu0 0.0
        %2522 = vmatpush1.msra.mxu0 0.0
        %2523 = vmatprep.subr.mxu0 0.0
        %2524 = vmatpush1.msra.mxu0 0.0
        %2525 = vmatprep.subr.mxu0 0.0
        %2526 = vmatpush1.msra.mxu0 0.0
        %2527 = vmatprep.subr.mxu0 0.0
        %2528 = vmatpush1.msra.mxu0 0.0
        %2529 = vmatprep.subr.mxu0 0.0
        %2530 = vmatpush1.msra.mxu0 0.0
        %2531 = vmatprep.subr.mxu0 0.0
        %2532 = vmatpush1.msra.mxu0 0.0
        %2533 = vmatprep.subr.mxu0 0.0
        %2534 = vmatpush1.msra.mxu0 0.0
        %2535 = vmatprep.subr.mxu0 0.0
        %2536 = vmatpush1.msra.mxu0 0.0
        %2537 = vmatprep.mubr.f32.mxu0 0.0
        %2538 = vmatmul.mubr.f32.gmra.mrb[0].mxu0 %v2471
        %v2539 = vpop.f32.mrb[0].mxu0
        %v2540 = vadd.f32 0.0, %v2539
        %v2541 = vpop.f32.mrb[0].mxu0
        %v2542 = vadd.f32 0.0, %v2541
        %2543 = vdwg.mxu0
        %v2544 = vadd.f32 %v2459, %v2540
        %v2545 = vadd.f32 %v2460, %v2542
        %2546 = vrot.lane.b32.xlu0 %v1961, 112
        %v2547 = vpop.permute.xlu0 %2546
        %2548 = vrot.lane.b32.xlu0 %v1962, 112
        %v2549 = vpop.permute.xlu0 %2548
        %v2550 = vsel %vm956, %v2547, %v2549
        %v2551 = vsel %vm956, %v2549, %v2547
        %v2552 = vsel %vm961, %v2550, 0.0
        %v2553 = vsel %vm962, %v2551, 0.0
        %v2554 = vld [vmem:[%s965] sm:$0xff]
        %v2556 = vsel %vm361, %v2554, 0
        %2558 = vmatprep.subr.mxu0 %v2553
        %2559 = vmatpush1.msra.mxu0 %v2552
        %2560 = vmatprep.subr.mxu0 0.0
        %2561 = vmatpush1.msra.mxu0 0.0
        %2562 = vmatprep.subr.mxu0 0.0
        %2563 = vmatpush1.msra.mxu0 0.0
        %2564 = vmatprep.subr.mxu0 0.0
        %2565 = vmatpush1.msra.mxu0 0.0
        %2566 = vmatprep.subr.mxu0 0.0
        %2567 = vmatpush1.msra.mxu0 0.0
        %2568 = vmatprep.subr.mxu0 0.0
        %2569 = vmatpush1.msra.mxu0 0.0
        %2570 = vmatprep.subr.mxu0 0.0
        %2571 = vmatpush1.msra.mxu0 0.0
        %2572 = vmatprep.subr.mxu0 0.0
        %2573 = vmatpush1.msra.mxu0 0.0
        %2574 = vmatprep.subr.mxu0 0.0
        %2575 = vmatpush1.msra.mxu0 0.0
        %2576 = vmatprep.subr.mxu0 0.0
        %2577 = vmatpush1.msra.mxu0 0.0
        %2578 = vmatprep.subr.mxu0 0.0
        %2579 = vmatpush1.msra.mxu0 0.0
        %2580 = vmatprep.subr.mxu0 0.0
        %2581 = vmatpush1.msra.mxu0 0.0
        %2582 = vmatprep.subr.mxu0 0.0
        %2583 = vmatpush1.msra.mxu0 0.0
        %2584 = vmatprep.subr.mxu0 0.0
        %2585 = vmatpush1.msra.mxu0 0.0
        %2586 = vmatprep.subr.mxu0 0.0
        %2587 = vmatpush1.msra.mxu0 0.0
        %2588 = vmatprep.subr.mxu0 0.0
        %2589 = vmatpush1.msra.mxu0 0.0
        %2590 = vmatprep.subr.mxu0 0.0
        %2591 = vmatpush1.msra.mxu0 0.0
        %2592 = vmatprep.subr.mxu0 0.0
        %2593 = vmatpush1.msra.mxu0 0.0
        %2594 = vmatprep.subr.mxu0 0.0
        %2595 = vmatpush1.msra.mxu0 0.0
        %2596 = vmatprep.subr.mxu0 0.0
        %2597 = vmatpush1.msra.mxu0 0.0
        %2598 = vmatprep.subr.mxu0 0.0
        %2599 = vmatpush1.msra.mxu0 0.0
        %2600 = vmatprep.subr.mxu0 0.0
        %2601 = vmatpush1.msra.mxu0 0.0
        %2602 = vmatprep.subr.mxu0 0.0
        %2603 = vmatpush1.msra.mxu0 0.0
        %2604 = vmatprep.subr.mxu0 0.0
        %2605 = vmatpush1.msra.mxu0 0.0
        %2606 = vmatprep.subr.mxu0 0.0
        %2607 = vmatpush1.msra.mxu0 0.0
        %2608 = vmatprep.subr.mxu0 0.0
        %2609 = vmatpush1.msra.mxu0 0.0
        %2610 = vmatprep.subr.mxu0 0.0
        %2611 = vmatpush1.msra.mxu0 0.0
        %2612 = vmatprep.subr.mxu0 0.0
        %2613 = vmatpush1.msra.mxu0 0.0
        %2614 = vmatprep.subr.mxu0 0.0
        %2615 = vmatpush1.msra.mxu0 0.0
        %2616 = vmatprep.subr.mxu0 0.0
        %2617 = vmatpush1.msra.mxu0 0.0
        %2618 = vmatprep.subr.mxu0 0.0
        %2619 = vmatpush1.msra.mxu0 0.0
        %2620 = vmatprep.subr.mxu0 0.0
        %2621 = vmatpush1.msra.mxu0 0.0
        %2622 = vmatprep.mubr.f32.mxu0 0.0
        %2623 = vmatmul.mubr.f32.gmra.mrb[0].mxu0 %v2556
        %v2624 = vpop.f32.mrb[0].mxu0
        %v2625 = vadd.f32 0.0, %v2624
        %v2626 = vpop.f32.mrb[0].mxu0
        %v2627 = vadd.f32 0.0, %v2626
        %2628 = vdwg.mxu0
        %v2629 = vadd.f32 %v2544, %v2625
        %v2630 = vadd.f32 %v2545, %v2627
        %2631 = vrot.lane.b32.xlu0 %v1961, 111
        %v2632 = vpop.permute.xlu0 %2631
        %2633 = vrot.lane.b32.xlu0 %v1962, 111
        %v2634 = vpop.permute.xlu0 %2633
        %v2635 = vsel %vm1047, %v2632, %v2634
        %v2636 = vsel %vm1047, %v2634, %v2632
        %v2637 = vsel %vm1052, %v2635, 0.0
        %v2638 = vsel %vm1053, %v2636, 0.0
        %v2639 = vld [vmem:[%s1056] sm:$0xff]
        %v2641 = vsel %vm361, %v2639, 0
        %2643 = vmatprep.subr.mxu0 %v2638
        %2644 = vmatpush1.msra.mxu0 %v2637
        %2645 = vmatprep.subr.mxu0 0.0
        %2646 = vmatpush1.msra.mxu0 0.0
        %2647 = vmatprep.subr.mxu0 0.0
        %2648 = vmatpush1.msra.mxu0 0.0
        %2649 = vmatprep.subr.mxu0 0.0
        %2650 = vmatpush1.msra.mxu0 0.0
        %2651 = vmatprep.subr.mxu0 0.0
        %2652 = vmatpush1.msra.mxu0 0.0
        %2653 = vmatprep.subr.mxu0 0.0
        %2654 = vmatpush1.msra.mxu0 0.0
        %2655 = vmatprep.subr.mxu0 0.0
        %2656 = vmatpush1.msra.mxu0 0.0
        %2657 = vmatprep.subr.mxu0 0.0
        %2658 = vmatpush1.msra.mxu0 0.0
        %2659 = vmatprep.subr.mxu0 0.0
        %2660 = vmatpush1.msra.mxu0 0.0
        %2661 = vmatprep.subr.mxu0 0.0
        %2662 = vmatpush1.msra.mxu0 0.0
        %2663 = vmatprep.subr.mxu0 0.0
        %2664 = vmatpush1.msra.mxu0 0.0
        %2665 = vmatprep.subr.mxu0 0.0
        %2666 = vmatpush1.msra.mxu0 0.0
        %2667 = vmatprep.subr.mxu0 0.0
        %2668 = vmatpush1.msra.mxu0 0.0
        %2669 = vmatprep.subr.mxu0 0.0
        %2670 = vmatpush1.msra.mxu0 0.0
        %2671 = vmatprep.subr.mxu0 0.0
        %2672 = vmatpush1.msra.mxu0 0.0
        %2673 = vmatprep.subr.mxu0 0.0
        %2674 = vmatpush1.msra.mxu0 0.0
        %2675 = vmatprep.subr.mxu0 0.0
        %2676 = vmatpush1.msra.mxu0 0.0
        %2677 = vmatprep.subr.mxu0 0.0
        %2678 = vmatpush1.msra.mxu0 0.0
        %2679 = vmatprep.subr.mxu0 0.0
        %2680 = vmatpush1.msra.mxu0 0.0
        %2681 = vmatprep.subr.mxu0 0.0
        %2682 = vmatpush1.msra.mxu0 0.0
        %2683 = vmatprep.subr.mxu0 0.0
        %2684 = vmatpush1.msra.mxu0 0.0
        %2685 = vmatprep.subr.mxu0 0.0
        %2686 = vmatpush1.msra.mxu0 0.0
        %2687 = vmatprep.subr.mxu0 0.0
        %2688 = vmatpush1.msra.mxu0 0.0
        %2689 = vmatprep.subr.mxu0 0.0
        %2690 = vmatpush1.msra.mxu0 0.0
        %2691 = vmatprep.subr.mxu0 0.0
        %2692 = vmatpush1.msra.mxu0 0.0
        %2693 = vmatprep.subr.mxu0 0.0
        %2694 = vmatpush1.msra.mxu0 0.0
        %2695 = vmatprep.subr.mxu0 0.0
        %2696 = vmatpush1.msra.mxu0 0.0
        %2697 = vmatprep.subr.mxu0 0.0
        %2698 = vmatpush1.msra.mxu0 0.0
        %2699 = vmatprep.subr.mxu0 0.0
        %2700 = vmatpush1.msra.mxu0 0.0
        %2701 = vmatprep.subr.mxu0 0.0
        %2702 = vmatpush1.msra.mxu0 0.0
        %2703 = vmatprep.subr.mxu0 0.0
        %2704 = vmatpush1.msra.mxu0 0.0
        %2705 = vmatprep.subr.mxu0 0.0
        %2706 = vmatpush1.msra.mxu0 0.0
        %2707 = vmatprep.mubr.f32.mxu0 0.0
        %2708 = vmatmul.mubr.f32.gmra.mrb[0].mxu0 %v2641
        %v2709 = vpop.f32.mrb[0].mxu0
        %v2710 = vadd.f32 0.0, %v2709
        %v2711 = vpop.f32.mrb[0].mxu0
        %v2712 = vadd.f32 0.0, %v2711
        %2713 = vdwg.mxu0
        %v2714 = vadd.f32 %v2629, %v2710
        %v2715 = vadd.f32 %v2630, %v2712
        %v2716 = vadd.f32 %v2714, %v2715
        %2717 = vadd.xlane.f32.xlu0 %v2716
        %v2718 = vpop.xlane.xlu0 %2717
        %v2719 = vmul.f32 %v2718, %v1137
        %v2720 = vsub.f32 %v2714, %v2719
        %v2721 = vsub.f32 %v2715, %v2719
        %v2722 = vmul.f32 %v2720, %v2720
        %v2723 = vmul.f32 %v2721, %v2721
        %v2724 = vadd.f32 %v2722, %v2723
        %2725 = vadd.xlane.f32.xlu0 %v2724
        %v2726 = vpop.xlane.xlu0 %2725
        %v2727 = vmul.f32 %v2726, %v1137
        %v2728 = vadd.f32 %v2727, 1e-05
        %v2729 = vrsqrt.pop %v2728
        %v2730 = vmul.f32 %v326, %v2729
        %2732 = vset.pattern.permute.xlu0 0
        %2733 = vperm.xlu0 %2732, %v2730
        %v2734 = vpop.permute.xlu0 %2733
        %v2736 = vmul.f32 %v2720, %v2734
        %v2737 = vmul.f32 %v2721, %v2734
        %v2738 = vadd.f32 %v2736, %v1160
        %v2739 = vadd.f32 %v2737, %v1160
        %v2740 = vmax.f32 %v2738, 0.0
        %v2741 = vmax.f32 %v2739, 0.0
        %2742 = vrot.lane.b32.xlu0 %v2740, 17
        %v2743 = vpop.permute.xlu0 %2742
        %2744 = vrot.lane.b32.xlu0 %v2741, 17
        %v2745 = vpop.permute.xlu0 %2744
        %v2746 = vsel %vm336, %v2743, %v2745
        %v2747 = vsel %vm336, %v2745, %v2743
        %v2748 = vsel %vm341, %v2747, 0.0
        %v2749 = vsel %vm342, %v2746, 0.0
        %v2750 = vld [vmem:[%s4] sm:$0xff]
        %2751 = vrot.lane.b32.xlu0 %v2740, 16
        %v2752 = vpop.permute.xlu0 %2751
        %2753 = vrot.lane.b32.xlu0 %v2741, 16
        %v2754 = vpop.permute.xlu0 %2753
        %v2755 = vsel %vm350, %v2752, %v2754
        %v2756 = vsel %vm350, %v2754, %v2752
        %v2757 = vsel %vm355, %v2756, 0.0
        %v2758 = vsel %vm356, %v2755, 0.0
        %v2759 = vld [vmem:[%s1183] sm:$0xff]
        %v2761 = vsel %vm361, %v2759, 0
        %2763 = vmatprep.subr.mxu0 %v2758
        %2764 = vmatpush1.msra.mxu0 %v2757
        %2765 = vmatprep.subr.mxu0 0.0
        %2766 = vmatpush1.msra.mxu0 0.0
        %2767 = vmatprep.subr.mxu0 0.0
        %2768 = vmatpush1.msra.mxu0 0.0
        %2769 = vmatprep.subr.mxu0 0.0
        %2770 = vmatpush1.msra.mxu0 0.0
        %2771 = vmatprep.subr.mxu0 0.0
        %2772 = vmatpush1.msra.mxu0 0.0
        %2773 = vmatprep.subr.mxu0 0.0
        %2774 = vmatpush1.msra.mxu0 0.0
        %2775 = vmatprep.subr.mxu0 0.0
        %2776 = vmatpush1.msra.mxu0 0.0
        %2777 = vmatprep.subr.mxu0 0.0
        %2778 = vmatpush1.msra.mxu0 0.0
        %2779 = vmatprep.subr.mxu0 0.0
        %2780 = vmatpush1.msra.mxu0 0.0
        %2781 = vmatprep.subr.mxu0 0.0
        %2782 = vmatpush1.msra.mxu0 0.0
        %2783 = vmatprep.subr.mxu0 0.0
        %2784 = vmatpush1.msra.mxu0 0.0
        %2785 = vmatprep.subr.mxu0 0.0
        %2786 = vmatpush1.msra.mxu0 0.0
        %2787 = vmatprep.subr.mxu0 0.0
        %2788 = vmatpush1.msra.mxu0 0.0
        %2789 = vmatprep.subr.mxu0 0.0
        %2790 = vmatpush1.msra.mxu0 0.0
        %2791 = vmatprep.subr.mxu0 0.0
        %2792 = vmatpush1.msra.mxu0 0.0
        %2793 = vmatprep.subr.mxu0 0.0
        %2794 = vmatpush1.msra.mxu0 0.0
        %2795 = vmatprep.subr.mxu0 0.0
        %2796 = vmatpush1.msra.mxu0 0.0
        %2797 = vmatprep.subr.mxu0 0.0
        %2798 = vmatpush1.msra.mxu0 0.0
        %2799 = vmatprep.subr.mxu0 0.0
        %2800 = vmatpush1.msra.mxu0 0.0
        %2801 = vmatprep.subr.mxu0 0.0
        %2802 = vmatpush1.msra.mxu0 0.0
        %2803 = vmatprep.subr.mxu0 0.0
        %2804 = vmatpush1.msra.mxu0 0.0
        %2805 = vmatprep.subr.mxu0 0.0
        %2806 = vmatpush1.msra.mxu0 0.0
        %2807 = vmatprep.subr.mxu0 0.0
        %2808 = vmatpush1.msra.mxu0 0.0
        %2809 = vmatprep.subr.mxu0 0.0
        %2810 = vmatpush1.msra.mxu0 0.0
        %2811 = vmatprep.subr.mxu0 0.0
        %2812 = vmatpush1.msra.mxu0 0.0
        %2813 = vmatprep.subr.mxu0 0.0
        %2814 = vmatpush1.msra.mxu0 0.0
        %2815 = vmatprep.subr.mxu0 0.0
        %2816 = vmatpush1.msra.mxu0 0.0
        %2817 = vmatprep.subr.mxu0 0.0
        %2818 = vmatpush1.msra.mxu0 0.0
        %2819 = vmatprep.subr.mxu0 0.0
        %2820 = vmatpush1.msra.mxu0 0.0
        %2821 = vmatprep.subr.mxu0 0.0
        %2822 = vmatpush1.msra.mxu0 0.0
        %2823 = vmatprep.subr.mxu0 0.0
        %2824 = vmatpush1.msra.mxu0 0.0
        %2825 = vmatprep.subr.mxu0 0.0
        %2826 = vmatpush1.msra.mxu0 0.0
        %2827 = vmatprep.mubr.f32.mxu0 0.0
        %2828 = vmatmul.mubr.f32.gmra.mrb[0].mxu0 %v2761
        %v2829 = vpop.f32.mrb[0].mxu0
        %v2830 = vadd.f32 0.0, %v2829
        %v2831 = vpop.f32.mrb[0].mxu0
        %v2832 = vadd.f32 0.0, %v2831
        %2833 = vdwg.mxu0
        %v2835 = vsel %vm361, %v2750, 0
        %2837 = vmatprep.subr.mxu0 %v2749
        %2838 = vmatpush1.msra.mxu0 %v2748
        %2839 = vmatprep.subr.mxu0 0.0
        %2840 = vmatpush1.msra.mxu0 0.0
        %2841 = vmatprep.subr.mxu0 0.0
        %2842 = vmatpush1.msra.mxu0 0.0
        %2843 = vmatprep.subr.mxu0 0.0
        %2844 = vmatpush1.msra.mxu0 0.0
        %2845 = vmatprep.subr.mxu0 0.0
        %2846 = vmatpush1.msra.mxu0 0.0
        %2847 = vmatprep.subr.mxu0 0.0
        %2848 = vmatpush1.msra.mxu0 0.0
        %2849 = vmatprep.subr.mxu0 0.0
        %2850 = vmatpush1.msra.mxu0 0.0
        %2851 = vmatprep.subr.mxu0 0.0
        %2852 = vmatpush1.msra.mxu0 0.0
        %2853 = vmatprep.subr.mxu0 0.0
        %2854 = vmatpush1.msra.mxu0 0.0
        %2855 = vmatprep.subr.mxu0 0.0
        %2856 = vmatpush1.msra.mxu0 0.0
        %2857 = vmatprep.subr.mxu0 0.0
        %2858 = vmatpush1.msra.mxu0 0.0
        %2859 = vmatprep.subr.mxu0 0.0
        %2860 = vmatpush1.msra.mxu0 0.0
        %2861 = vmatprep.subr.mxu0 0.0
        %2862 = vmatpush1.msra.mxu0 0.0
        %2863 = vmatprep.subr.mxu0 0.0
        %2864 = vmatpush1.msra.mxu0 0.0
        %2865 = vmatprep.subr.mxu0 0.0
        %2866 = vmatpush1.msra.mxu0 0.0
        %2867 = vmatprep.subr.mxu0 0.0
        %2868 = vmatpush1.msra.mxu0 0.0
        %2869 = vmatprep.subr.mxu0 0.0
        %2870 = vmatpush1.msra.mxu0 0.0
        %2871 = vmatprep.subr.mxu0 0.0
        %2872 = vmatpush1.msra.mxu0 0.0
        %2873 = vmatprep.subr.mxu0 0.0
        %2874 = vmatpush1.msra.mxu0 0.0
        %2875 = vmatprep.subr.mxu0 0.0
        %2876 = vmatpush1.msra.mxu0 0.0
        %2877 = vmatprep.subr.mxu0 0.0
        %2878 = vmatpush1.msra.mxu0 0.0
        %2879 = vmatprep.subr.mxu0 0.0
        %2880 = vmatpush1.msra.mxu0 0.0
        %2881 = vmatprep.subr.mxu0 0.0
        %2882 = vmatpush1.msra.mxu0 0.0
        %2883 = vmatprep.subr.mxu0 0.0
        %2884 = vmatpush1.msra.mxu0 0.0
        %2885 = vmatprep.subr.mxu0 0.0
        %2886 = vmatpush1.msra.mxu0 0.0
        %2887 = vmatprep.subr.mxu0 0.0
        %2888 = vmatpush1.msra.mxu0 0.0
        %2889 = vmatprep.subr.mxu0 0.0
        %2890 = vmatpush1.msra.mxu0 0.0
        %2891 = vmatprep.subr.mxu0 0.0
        %2892 = vmatpush1.msra.mxu0 0.0
        %2893 = vmatprep.subr.mxu0 0.0
        %2894 = vmatpush1.msra.mxu0 0.0
        %2895 = vmatprep.subr.mxu0 0.0
        %2896 = vmatpush1.msra.mxu0 0.0
        %2897 = vmatprep.subr.mxu0 0.0
        %2898 = vmatpush1.msra.mxu0 0.0
        %2899 = vmatprep.subr.mxu0 0.0
        %2900 = vmatpush1.msra.mxu0 0.0
        %2901 = vmatprep.mubr.f32.mxu0 0.0
        %2902 = vmatmul.mubr.f32.gmra.mrb[0].mxu0 %v2835
        %v2903 = vpop.f32.mrb[0].mxu0
        %v2904 = vadd.f32 %v2830, %v2903
        %v2905 = vpop.f32.mrb[0].mxu0
        %v2906 = vadd.f32 %v2832, %v2905
        %2907 = vdwg.mxu0
        %2908 = vrot.lane.b32.xlu0 %v2740, 15
        %v2909 = vpop.permute.xlu0 %2908
        %2910 = vrot.lane.b32.xlu0 %v2741, 15
        %v2911 = vpop.permute.xlu0 %2910
        %v2912 = vsel %vm514, %v2909, %v2911
        %v2913 = vsel %vm514, %v2911, %v2909
        %v2914 = vsel %vm519, %v2913, 0.0
        %v2915 = vsel %vm520, %v2912, 0.0
        %v2916 = vld [vmem:[%s1341] sm:$0xff]
        %v2918 = vsel %vm361, %v2916, 0
        %2920 = vmatprep.subr.mxu0 %v2915
        %2921 = vmatpush1.msra.mxu0 %v2914
        %2922 = vmatprep.subr.mxu0 0.0
        %2923 = vmatpush1.msra.mxu0 0.0
        %2924 = vmatprep.subr.mxu0 0.0
        %2925 = vmatpush1.msra.mxu0 0.0
        %2926 = vmatprep.subr.mxu0 0.0
        %2927 = vmatpush1.msra.mxu0 0.0
        %2928 = vmatprep.subr.mxu0 0.0
        %2929 = vmatpush1.msra.mxu0 0.0
        %2930 = vmatprep.subr.mxu0 0.0
        %2931 = vmatpush1.msra.mxu0 0.0
        %2932 = vmatprep.subr.mxu0 0.0
        %2933 = vmatpush1.msra.mxu0 0.0
        %2934 = vmatprep.subr.mxu0 0.0
        %2935 = vmatpush1.msra.mxu0 0.0
        %2936 = vmatprep.subr.mxu0 0.0
        %2937 = vmatpush1.msra.mxu0 0.0
        %2938 = vmatprep.subr.mxu0 0.0
        %2939 = vmatpush1.msra.mxu0 0.0
        %2940 = vmatprep.subr.mxu0 0.0
        %2941 = vmatpush1.msra.mxu0 0.0
        %2942 = vmatprep.subr.mxu0 0.0
        %2943 = vmatpush1.msra.mxu0 0.0
        %2944 = vmatprep.subr.mxu0 0.0
        %2945 = vmatpush1.msra.mxu0 0.0
        %2946 = vmatprep.subr.mxu0 0.0
        %2947 = vmatpush1.msra.mxu0 0.0
        %2948 = vmatprep.subr.mxu0 0.0
        %2949 = vmatpush1.msra.mxu0 0.0
        %2950 = vmatprep.subr.mxu0 0.0
        %2951 = vmatpush1.msra.mxu0 0.0
        %2952 = vmatprep.subr.mxu0 0.0
        %2953 = vmatpush1.msra.mxu0 0.0
        %2954 = vmatprep.subr.mxu0 0.0
        %2955 = vmatpush1.msra.mxu0 0.0
        %2956 = vmatprep.subr.mxu0 0.0
        %2957 = vmatpush1.msra.mxu0 0.0
        %2958 = vmatprep.subr.mxu0 0.0
        %2959 = vmatpush1.msra.mxu0 0.0
        %2960 = vmatprep.subr.mxu0 0.0
        %2961 = vmatpush1.msra.mxu0 0.0
        %2962 = vmatprep.subr.mxu0 0.0
        %2963 = vmatpush1.msra.mxu0 0.0
        %2964 = vmatprep.subr.mxu0 0.0
        %2965 = vmatpush1.msra.mxu0 0.0
        %2966 = vmatprep.subr.mxu0 0.0
        %2967 = vmatpush1.msra.mxu0 0.0
        %2968 = vmatprep.subr.mxu0 0.0
        %2969 = vmatpush1.msra.mxu0 0.0
        %2970 = vmatprep.subr.mxu0 0.0
        %2971 = vmatpush1.msra.mxu0 0.0
        %2972 = vmatprep.subr.mxu0 0.0
        %2973 = vmatpush1.msra.mxu0 0.0
        %2974 = vmatprep.subr.mxu0 0.0
        %2975 = vmatpush1.msra.mxu0 0.0
        %2976 = vmatprep.subr.mxu0 0.0
        %2977 = vmatpush1.msra.mxu0 0.0
        %2978 = vmatprep.subr.mxu0 0.0
        %2979 = vmatpush1.msra.mxu0 0.0
        %2980 = vmatprep.subr.mxu0 0.0
        %2981 = vmatpush1.msra.mxu0 0.0
        %2982 = vmatprep.subr.mxu0 0.0
        %2983 = vmatpush1.msra.mxu0 0.0
        %2984 = vmatprep.mubr.f32.mxu0 0.0
        %2985 = vmatmul.mubr.f32.gmra.mrb[0].mxu0 %v2918
        %v2986 = vpop.f32.mrb[0].mxu0
        %v2987 = vadd.f32 0.0, %v2986
        %v2988 = vpop.f32.mrb[0].mxu0
        %v2989 = vadd.f32 0.0, %v2988
        %2990 = vdwg.mxu0
        %v2991 = vadd.f32 %v2904, %v2987
        %v2992 = vadd.f32 %v2906, %v2989
        %2993 = vrot.lane.b32.xlu0 %v2740, 1
        %v2994 = vpop.permute.xlu0 %2993
        %2995 = vrot.lane.b32.xlu0 %v2741, 1
        %v2996 = vpop.permute.xlu0 %2995
        %v2997 = vsel %vm605, %v2994, %v2996
        %v2998 = vsel %vm605, %v2996, %v2994
        %v2999 = vsel %vm610, %v2998, 0.0
        %v3000 = vsel %vm611, %v2997, 0.0
        %v3001 = vld [vmem:[%s1427] sm:$0xff]
        %v3003 = vsel %vm361, %v3001, 0
        %3005 = vmatprep.subr.mxu0 %v3000
        %3006 = vmatpush1.msra.mxu0 %v2999
        %3007 = vmatprep.subr.mxu0 0.0
        %3008 = vmatpush1.msra.mxu0 0.0
        %3009 = vmatprep.subr.mxu0 0.0
        %3010 = vmatpush1.msra.mxu0 0.0
        %3011 = vmatprep.subr.mxu0 0.0
        %3012 = vmatpush1.msra.mxu0 0.0
        %3013 = vmatprep.subr.mxu0 0.0
        %3014 = vmatpush1.msra.mxu0 0.0
        %3015 = vmatprep.subr.mxu0 0.0
        %3016 = vmatpush1.msra.mxu0 0.0
        %3017 = vmatprep.subr.mxu0 0.0
        %3018 = vmatpush1.msra.mxu0 0.0
        %3019 = vmatprep.subr.mxu0 0.0
        %3020 = vmatpush1.msra.mxu0 0.0
        %3021 = vmatprep.subr.mxu0 0.0
        %3022 = vmatpush1.msra.mxu0 0.0
        %3023 = vmatprep.subr.mxu0 0.0
        %3024 = vmatpush1.msra.mxu0 0.0
        %3025 = vmatprep.subr.mxu0 0.0
        %3026 = vmatpush1.msra.mxu0 0.0
        %3027 = vmatprep.subr.mxu0 0.0
        %3028 = vmatpush1.msra.mxu0 0.0
        %3029 = vmatprep.subr.mxu0 0.0
        %3030 = vmatpush1.msra.mxu0 0.0
        %3031 = vmatprep.subr.mxu0 0.0
        %3032 = vmatpush1.msra.mxu0 0.0
        %3033 = vmatprep.subr.mxu0 0.0
        %3034 = vmatpush1.msra.mxu0 0.0
        %3035 = vmatprep.subr.mxu0 0.0
        %3036 = vmatpush1.msra.mxu0 0.0
        %3037 = vmatprep.subr.mxu0 0.0
        %3038 = vmatpush1.msra.mxu0 0.0
        %3039 = vmatprep.subr.mxu0 0.0
        %3040 = vmatpush1.msra.mxu0 0.0
        %3041 = vmatprep.subr.mxu0 0.0
        %3042 = vmatpush1.msra.mxu0 0.0
        %3043 = vmatprep.subr.mxu0 0.0
        %3044 = vmatpush1.msra.mxu0 0.0
        %3045 = vmatprep.subr.mxu0 0.0
        %3046 = vmatpush1.msra.mxu0 0.0
        %3047 = vmatprep.subr.mxu0 0.0
        %3048 = vmatpush1.msra.mxu0 0.0
        %3049 = vmatprep.subr.mxu0 0.0
        %3050 = vmatpush1.msra.mxu0 0.0
        %3051 = vmatprep.subr.mxu0 0.0
        %3052 = vmatpush1.msra.mxu0 0.0
        %3053 = vmatprep.subr.mxu0 0.0
        %3054 = vmatpush1.msra.mxu0 0.0
        %3055 = vmatprep.subr.mxu0 0.0
        %3056 = vmatpush1.msra.mxu0 0.0
        %3057 = vmatprep.subr.mxu0 0.0
        %3058 = vmatpush1.msra.mxu0 0.0
        %3059 = vmatprep.subr.mxu0 0.0
        %3060 = vmatpush1.msra.mxu0 0.0
        %3061 = vmatprep.subr.mxu0 0.0
        %3062 = vmatpush1.msra.mxu0 0.0
        %3063 = vmatprep.subr.mxu0 0.0
        %3064 = vmatpush1.msra.mxu0 0.0
        %3065 = vmatprep.subr.mxu0 0.0
        %3066 = vmatpush1.msra.mxu0 0.0
        %3067 = vmatprep.subr.mxu0 0.0
        %3068 = vmatpush1.msra.mxu0 0.0
        %3069 = vmatprep.mubr.f32.mxu0 0.0
        %3070 = vmatmul.mubr.f32.gmra.mrb[0].mxu0 %v3003
        %v3071 = vpop.f32.mrb[0].mxu0
        %v3072 = vadd.f32 0.0, %v3071
        %v3073 = vpop.f32.mrb[0].mxu0
        %v3074 = vadd.f32 0.0, %v3073
        %3075 = vdwg.mxu0
        %v3076 = vadd.f32 %v2991, %v3072
        %v3077 = vadd.f32 %v2992, %v3074
        %v3078 = vld [vmem:[%s1505] sm:$0xff]
        %v3080 = vsel %vm361, %v3078, 0
        %3082 = vmatprep.subr.mxu0 %v2741
        %3083 = vmatpush1.msra.mxu0 %v2740
        %3084 = vmatprep.subr.mxu0 0.0
        %3085 = vmatpush1.msra.mxu0 0.0
        %3086 = vmatprep.subr.mxu0 0.0
        %3087 = vmatpush1.msra.mxu0 0.0
        %3088 = vmatprep.subr.mxu0 0.0
        %3089 = vmatpush1.msra.mxu0 0.0
        %3090 = vmatprep.subr.mxu0 0.0
        %3091 = vmatpush1.msra.mxu0 0.0
        %3092 = vmatprep.subr.mxu0 0.0
        %3093 = vmatpush1.msra.mxu0 0.0
        %3094 = vmatprep.subr.mxu0 0.0
        %3095 = vmatpush1.msra.mxu0 0.0
        %3096 = vmatprep.subr.mxu0 0.0
        %3097 = vmatpush1.msra.mxu0 0.0
        %3098 = vmatprep.subr.mxu0 0.0
        %3099 = vmatpush1.msra.mxu0 0.0
        %3100 = vmatprep.subr.mxu0 0.0
        %3101 = vmatpush1.msra.mxu0 0.0
        %3102 = vmatprep.subr.mxu0 0.0
        %3103 = vmatpush1.msra.mxu0 0.0
        %3104 = vmatprep.subr.mxu0 0.0
        %3105 = vmatpush1.msra.mxu0 0.0
        %3106 = vmatprep.subr.mxu0 0.0
        %3107 = vmatpush1.msra.mxu0 0.0
        %3108 = vmatprep.subr.mxu0 0.0
        %3109 = vmatpush1.msra.mxu0 0.0
        %3110 = vmatprep.subr.mxu0 0.0
        %3111 = vmatpush1.msra.mxu0 0.0
        %3112 = vmatprep.subr.mxu0 0.0
        %3113 = vmatpush1.msra.mxu0 0.0
        %3114 = vmatprep.subr.mxu0 0.0
        %3115 = vmatpush1.msra.mxu0 0.0
        %3116 = vmatprep.subr.mxu0 0.0
        %3117 = vmatpush1.msra.mxu0 0.0
        %3118 = vmatprep.subr.mxu0 0.0
        %3119 = vmatpush1.msra.mxu0 0.0
        %3120 = vmatprep.subr.mxu0 0.0
        %3121 = vmatpush1.msra.mxu0 0.0
        %3122 = vmatprep.subr.mxu0 0.0
        %3123 = vmatpush1.msra.mxu0 0.0
        %3124 = vmatprep.subr.mxu0 0.0
        %3125 = vmatpush1.msra.mxu0 0.0
        %3126 = vmatprep.subr.mxu0 0.0
        %3127 = vmatpush1.msra.mxu0 0.0
        %3128 = vmatprep.subr.mxu0 0.0
        %3129 = vmatpush1.msra.mxu0 0.0
        %3130 = vmatprep.subr.mxu0 0.0
        %3131 = vmatpush1.msra.mxu0 0.0
        %3132 = vmatprep.subr.mxu0 0.0
        %3133 = vmatpush1.msra.mxu0 0.0
        %3134 = vmatprep.subr.mxu0 0.0
        %3135 = vmatpush1.msra.mxu0 0.0
        %3136 = vmatprep.subr.mxu0 0.0
        %3137 = vmatpush1.msra.mxu0 0.0
        %3138 = vmatprep.subr.mxu0 0.0
        %3139 = vmatpush1.msra.mxu0 0.0
        %3140 = vmatprep.subr.mxu0 0.0
        %3141 = vmatpush1.msra.mxu0 0.0
        %3142 = vmatprep.subr.mxu0 0.0
        %3143 = vmatpush1.msra.mxu0 0.0
        %3144 = vmatprep.subr.mxu0 0.0
        %3145 = vmatpush1.msra.mxu0 0.0
        %3146 = vmatprep.mubr.f32.mxu0 0.0
        %3147 = vmatmul.mubr.f32.gmra.mrb[0].mxu0 %v3080
        %v3148 = vpop.f32.mrb[0].mxu0
        %v3149 = vadd.f32 0.0, %v3148
        %v3150 = vpop.f32.mrb[0].mxu0
        %v3151 = vadd.f32 0.0, %v3150
        %3152 = vdwg.mxu0
        %v3153 = vadd.f32 %v3076, %v3149
        %v3154 = vadd.f32 %v3077, %v3151
        %3155 = vrot.lane.b32.xlu0 %v2740, 127
        %v3156 = vpop.permute.xlu0 %3155
        %3157 = vrot.lane.b32.xlu0 %v2741, 127
        %v3158 = vpop.permute.xlu0 %3157
        %v3159 = vsel %vm774, %v3156, %v3158
        %v3160 = vsel %vm774, %v3158, %v3156
        %v3161 = vsel %vm779, %v3159, 0.0
        %v3162 = vsel %vm780, %v3160, 0.0
        %v3163 = vld [vmem:[%s1591] sm:$0xff]
        %v3165 = vsel %vm361, %v3163, 0
        %3167 = vmatprep.subr.mxu0 %v3162
        %3168 = vmatpush1.msra.mxu0 %v3161
        %3169 = vmatprep.subr.mxu0 0.0
        %3170 = vmatpush1.msra.mxu0 0.0
        %3171 = vmatprep.subr.mxu0 0.0
        %3172 = vmatpush1.msra.mxu0 0.0
        %3173 = vmatprep.subr.mxu0 0.0
        %3174 = vmatpush1.msra.mxu0 0.0
        %3175 = vmatprep.subr.mxu0 0.0
        %3176 = vmatpush1.msra.mxu0 0.0
        %3177 = vmatprep.subr.mxu0 0.0
        %3178 = vmatpush1.msra.mxu0 0.0
        %3179 = vmatprep.subr.mxu0 0.0
        %3180 = vmatpush1.msra.mxu0 0.0
        %3181 = vmatprep.subr.mxu0 0.0
        %3182 = vmatpush1.msra.mxu0 0.0
        %3183 = vmatprep.subr.mxu0 0.0
        %3184 = vmatpush1.msra.mxu0 0.0
        %3185 = vmatprep.subr.mxu0 0.0
        %3186 = vmatpush1.msra.mxu0 0.0
        %3187 = vmatprep.subr.mxu0 0.0
        %3188 = vmatpush1.msra.mxu0 0.0
        %3189 = vmatprep.subr.mxu0 0.0
        %3190 = vmatpush1.msra.mxu0 0.0
        %3191 = vmatprep.subr.mxu0 0.0
        %3192 = vmatpush1.msra.mxu0 0.0
        %3193 = vmatprep.subr.mxu0 0.0
        %3194 = vmatpush1.msra.mxu0 0.0
        %3195 = vmatprep.subr.mxu0 0.0
        %3196 = vmatpush1.msra.mxu0 0.0
        %3197 = vmatprep.subr.mxu0 0.0
        %3198 = vmatpush1.msra.mxu0 0.0
        %3199 = vmatprep.subr.mxu0 0.0
        %3200 = vmatpush1.msra.mxu0 0.0
        %3201 = vmatprep.subr.mxu0 0.0
        %3202 = vmatpush1.msra.mxu0 0.0
        %3203 = vmatprep.subr.mxu0 0.0
        %3204 = vmatpush1.msra.mxu0 0.0
        %3205 = vmatprep.subr.mxu0 0.0
        %3206 = vmatpush1.msra.mxu0 0.0
        %3207 = vmatprep.subr.mxu0 0.0
        %3208 = vmatpush1.msra.mxu0 0.0
        %3209 = vmatprep.subr.mxu0 0.0
        %3210 = vmatpush1.msra.mxu0 0.0
        %3211 = vmatprep.subr.mxu0 0.0
        %3212 = vmatpush1.msra.mxu0 0.0
        %3213 = vmatprep.subr.mxu0 0.0
        %3214 = vmatpush1.msra.mxu0 0.0
        %3215 = vmatprep.subr.mxu0 0.0
        %3216 = vmatpush1.msra.mxu0 0.0
        %3217 = vmatprep.subr.mxu0 0.0
        %3218 = vmatpush1.msra.mxu0 0.0
        %3219 = vmatprep.subr.mxu0 0.0
        %3220 = vmatpush1.msra.mxu0 0.0
        %3221 = vmatprep.subr.mxu0 0.0
        %3222 = vmatpush1.msra.mxu0 0.0
        %3223 = vmatprep.subr.mxu0 0.0
        %3224 = vmatpush1.msra.mxu0 0.0
        %3225 = vmatprep.subr.mxu0 0.0
        %3226 = vmatpush1.msra.mxu0 0.0
        %3227 = vmatprep.subr.mxu0 0.0
        %3228 = vmatpush1.msra.mxu0 0.0
        %3229 = vmatprep.subr.mxu0 0.0
        %3230 = vmatpush1.msra.mxu0 0.0
        %3231 = vmatprep.mubr.f32.mxu0 0.0
        %3232 = vmatmul.mubr.f32.gmra.mrb[0].mxu0 %v3165
        %v3233 = vpop.f32.mrb[0].mxu0
        %v3234 = vadd.f32 0.0, %v3233
        %v3235 = vpop.f32.mrb[0].mxu0
        %v3236 = vadd.f32 0.0, %v3235
        %3237 = vdwg.mxu0
        %v3238 = vadd.f32 %v3153, %v3234
        %v3239 = vadd.f32 %v3154, %v3236
        %3240 = vrot.lane.b32.xlu0 %v2740, 113
        %v3241 = vpop.permute.xlu0 %3240
        %3242 = vrot.lane.b32.xlu0 %v2741, 113
        %v3243 = vpop.permute.xlu0 %3242
        %v3244 = vsel %vm865, %v3241, %v3243
        %v3245 = vsel %vm865, %v3243, %v3241
        %v3246 = vsel %vm870, %v3244, 0.0
        %v3247 = vsel %vm871, %v3245, 0.0
        %v3248 = vld [vmem:[%s1677] sm:$0xff]
        %v3250 = vsel %vm361, %v3248, 0
        %3252 = vmatprep.subr.mxu0 %v3247
        %3253 = vmatpush1.msra.mxu0 %v3246
        %3254 = vmatprep.subr.mxu0 0.0
        %3255 = vmatpush1.msra.mxu0 0.0
        %3256 = vmatprep.subr.mxu0 0.0
        %3257 = vmatpush1.msra.mxu0 0.0
        %3258 = vmatprep.subr.mxu0 0.0
        %3259 = vmatpush1.msra.mxu0 0.0
        %3260 = vmatprep.subr.mxu0 0.0
        %3261 = vmatpush1.msra.mxu0 0.0
        %3262 = vmatprep.subr.mxu0 0.0
        %3263 = vmatpush1.msra.mxu0 0.0
        %3264 = vmatprep.subr.mxu0 0.0
        %3265 = vmatpush1.msra.mxu0 0.0
        %3266 = vmatprep.subr.mxu0 0.0
        %3267 = vmatpush1.msra.mxu0 0.0
        %3268 = vmatprep.subr.mxu0 0.0
        %3269 = vmatpush1.msra.mxu0 0.0
        %3270 = vmatprep.subr.mxu0 0.0
        %3271 = vmatpush1.msra.mxu0 0.0
        %3272 = vmatprep.subr.mxu0 0.0
        %3273 = vmatpush1.msra.mxu0 0.0
        %3274 = vmatprep.subr.mxu0 0.0
        %3275 = vmatpush1.msra.mxu0 0.0
        %3276 = vmatprep.subr.mxu0 0.0
        %3277 = vmatpush1.msra.mxu0 0.0
        %3278 = vmatprep.subr.mxu0 0.0
        %3279 = vmatpush1.msra.mxu0 0.0
        %3280 = vmatprep.subr.mxu0 0.0
        %3281 = vmatpush1.msra.mxu0 0.0
        %3282 = vmatprep.subr.mxu0 0.0
        %3283 = vmatpush1.msra.mxu0 0.0
        %3284 = vmatprep.subr.mxu0 0.0
        %3285 = vmatpush1.msra.mxu0 0.0
        %3286 = vmatprep.subr.mxu0 0.0
        %3287 = vmatpush1.msra.mxu0 0.0
        %3288 = vmatprep.subr.mxu0 0.0
        %3289 = vmatpush1.msra.mxu0 0.0
        %3290 = vmatprep.subr.mxu0 0.0
        %3291 = vmatpush1.msra.mxu0 0.0
        %3292 = vmatprep.subr.mxu0 0.0
        %3293 = vmatpush1.msra.mxu0 0.0
        %3294 = vmatprep.subr.mxu0 0.0
        %3295 = vmatpush1.msra.mxu0 0.0
        %3296 = vmatprep.subr.mxu0 0.0
        %3297 = vmatpush1.msra.mxu0 0.0
        %3298 = vmatprep.subr.mxu0 0.0
        %3299 = vmatpush1.msra.mxu0 0.0
        %3300 = vmatprep.subr.mxu0 0.0
        %3301 = vmatpush1.msra.mxu0 0.0
        %3302 = vmatprep.subr.mxu0 0.0
        %3303 = vmatpush1.msra.mxu0 0.0
        %3304 = vmatprep.subr.mxu0 0.0
        %3305 = vmatpush1.msra.mxu0 0.0
        %3306 = vmatprep.subr.mxu0 0.0
        %3307 = vmatpush1.msra.mxu0 0.0
        %3308 = vmatprep.subr.mxu0 0.0
        %3309 = vmatpush1.msra.mxu0 0.0
        %3310 = vmatprep.subr.mxu0 0.0
        %3311 = vmatpush1.msra.mxu0 0.0
        %3312 = vmatprep.subr.mxu0 0.0
        %3313 = vmatpush1.msra.mxu0 0.0
        %3314 = vmatprep.subr.mxu0 0.0
        %3315 = vmatpush1.msra.mxu0 0.0
        %3316 = vmatprep.mubr.f32.mxu0 0.0
        %3317 = vmatmul.mubr.f32.gmra.mrb[0].mxu0 %v3250
        %v3318 = vpop.f32.mrb[0].mxu0
        %v3319 = vadd.f32 0.0, %v3318
        %v3320 = vpop.f32.mrb[0].mxu0
        %v3321 = vadd.f32 0.0, %v3320
        %3322 = vdwg.mxu0
        %v3323 = vadd.f32 %v3238, %v3319
        %v3324 = vadd.f32 %v3239, %v3321
        %3325 = vrot.lane.b32.xlu0 %v2740, 112
        %v3326 = vpop.permute.xlu0 %3325
        %3327 = vrot.lane.b32.xlu0 %v2741, 112
        %v3328 = vpop.permute.xlu0 %3327
        %v3329 = vsel %vm956, %v3326, %v3328
        %v3330 = vsel %vm956, %v3328, %v3326
        %v3331 = vsel %vm961, %v3329, 0.0
        %v3332 = vsel %vm962, %v3330, 0.0
        %v3333 = vld [vmem:[%s1763] sm:$0xff]
        %v3335 = vsel %vm361, %v3333, 0
        %3337 = vmatprep.subr.mxu0 %v3332
        %3338 = vmatpush1.msra.mxu0 %v3331
        %3339 = vmatprep.subr.mxu0 0.0
        %3340 = vmatpush1.msra.mxu0 0.0
        %3341 = vmatprep.subr.mxu0 0.0
        %3342 = vmatpush1.msra.mxu0 0.0
        %3343 = vmatprep.subr.mxu0 0.0
        %3344 = vmatpush1.msra.mxu0 0.0
        %3345 = vmatprep.subr.mxu0 0.0
        %3346 = vmatpush1.msra.mxu0 0.0
        %3347 = vmatprep.subr.mxu0 0.0
        %3348 = vmatpush1.msra.mxu0 0.0
        %3349 = vmatprep.subr.mxu0 0.0
        %3350 = vmatpush1.msra.mxu0 0.0
        %3351 = vmatprep.subr.mxu0 0.0
        %3352 = vmatpush1.msra.mxu0 0.0
        %3353 = vmatprep.subr.mxu0 0.0
        %3354 = vmatpush1.msra.mxu0 0.0
        %3355 = vmatprep.subr.mxu0 0.0
        %3356 = vmatpush1.msra.mxu0 0.0
        %3357 = vmatprep.subr.mxu0 0.0
        %3358 = vmatpush1.msra.mxu0 0.0
        %3359 = vmatprep.subr.mxu0 0.0
        %3360 = vmatpush1.msra.mxu0 0.0
        %3361 = vmatprep.subr.mxu0 0.0
        %3362 = vmatpush1.msra.mxu0 0.0
        %3363 = vmatprep.subr.mxu0 0.0
        %3364 = vmatpush1.msra.mxu0 0.0
        %3365 = vmatprep.subr.mxu0 0.0
        %3366 = vmatpush1.msra.mxu0 0.0
        %3367 = vmatprep.subr.mxu0 0.0
        %3368 = vmatpush1.msra.mxu0 0.0
        %3369 = vmatprep.subr.mxu0 0.0
        %3370 = vmatpush1.msra.mxu0 0.0
        %3371 = vmatprep.subr.mxu0 0.0
        %3372 = vmatpush1.msra.mxu0 0.0
        %3373 = vmatprep.subr.mxu0 0.0
        %3374 = vmatpush1.msra.mxu0 0.0
        %3375 = vmatprep.subr.mxu0 0.0
        %3376 = vmatpush1.msra.mxu0 0.0
        %3377 = vmatprep.subr.mxu0 0.0
        %3378 = vmatpush1.msra.mxu0 0.0
        %3379 = vmatprep.subr.mxu0 0.0
        %3380 = vmatpush1.msra.mxu0 0.0
        %3381 = vmatprep.subr.mxu0 0.0
        %3382 = vmatpush1.msra.mxu0 0.0
        %3383 = vmatprep.subr.mxu0 0.0
        %3384 = vmatpush1.msra.mxu0 0.0
        %3385 = vmatprep.subr.mxu0 0.0
        %3386 = vmatpush1.msra.mxu0 0.0
        %3387 = vmatprep.subr.mxu0 0.0
        %3388 = vmatpush1.msra.mxu0 0.0
        %3389 = vmatprep.subr.mxu0 0.0
        %3390 = vmatpush1.msra.mxu0 0.0
        %3391 = vmatprep.subr.mxu0 0.0
        %3392 = vmatpush1.msra.mxu0 0.0
        %3393 = vmatprep.subr.mxu0 0.0
        %3394 = vmatpush1.msra.mxu0 0.0
        %3395 = vmatprep.subr.mxu0 0.0
        %3396 = vmatpush1.msra.mxu0 0.0
        %3397 = vmatprep.subr.mxu0 0.0
        %3398 = vmatpush1.msra.mxu0 0.0
        %3399 = vmatprep.subr.mxu0 0.0
        %3400 = vmatpush1.msra.mxu0 0.0
        %3401 = vmatprep.mubr.f32.mxu0 0.0
        %3402 = vmatmul.mubr.f32.gmra.mrb[0].mxu0 %v3335
        %v3403 = vpop.f32.mrb[0].mxu0
        %v3404 = vadd.f32 0.0, %v3403
        %v3405 = vpop.f32.mrb[0].mxu0
        %v3406 = vadd.f32 0.0, %v3405
        %3407 = vdwg.mxu0
        %v3408 = vadd.f32 %v3323, %v3404
        %v3409 = vadd.f32 %v3324, %v3406
        %3410 = vrot.lane.b32.xlu0 %v2740, 111
        %v3411 = vpop.permute.xlu0 %3410
        %3412 = vrot.lane.b32.xlu0 %v2741, 111
        %v3413 = vpop.permute.xlu0 %3412
        %v3414 = vsel %vm1047, %v3411, %v3413
        %v3415 = vsel %vm1047, %v3413, %v3411
        %v3416 = vsel %vm1052, %v3414, 0.0
        %v3417 = vsel %vm1053, %v3415, 0.0
        %v3418 = vld [vmem:[%s1849] sm:$0xff]
        %v3420 = vsel %vm361, %v3418, 0
        %3422 = vmatprep.subr.mxu0 %v3417
        %3423 = vmatpush1.msra.mxu0 %v3416
        %3424 = vmatprep.subr.mxu0 0.0
        %3425 = vmatpush1.msra.mxu0 0.0
        %3426 = vmatprep.subr.mxu0 0.0
        %3427 = vmatpush1.msra.mxu0 0.0
        %3428 = vmatprep.subr.mxu0 0.0
        %3429 = vmatpush1.msra.mxu0 0.0
        %3430 = vmatprep.subr.mxu0 0.0
        %3431 = vmatpush1.msra.mxu0 0.0
        %3432 = vmatprep.subr.mxu0 0.0
        %3433 = vmatpush1.msra.mxu0 0.0
        %3434 = vmatprep.subr.mxu0 0.0
        %3435 = vmatpush1.msra.mxu0 0.0
        %3436 = vmatprep.subr.mxu0 0.0
        %3437 = vmatpush1.msra.mxu0 0.0
        %3438 = vmatprep.subr.mxu0 0.0
        %3439 = vmatpush1.msra.mxu0 0.0
        %3440 = vmatprep.subr.mxu0 0.0
        %3441 = vmatpush1.msra.mxu0 0.0
        %3442 = vmatprep.subr.mxu0 0.0
        %3443 = vmatpush1.msra.mxu0 0.0
        %3444 = vmatprep.subr.mxu0 0.0
        %3445 = vmatpush1.msra.mxu0 0.0
        %3446 = vmatprep.subr.mxu0 0.0
        %3447 = vmatpush1.msra.mxu0 0.0
        %3448 = vmatprep.subr.mxu0 0.0
        %3449 = vmatpush1.msra.mxu0 0.0
        %3450 = vmatprep.subr.mxu0 0.0
        %3451 = vmatpush1.msra.mxu0 0.0
        %3452 = vmatprep.subr.mxu0 0.0
        %3453 = vmatpush1.msra.mxu0 0.0
        %3454 = vmatprep.subr.mxu0 0.0
        %3455 = vmatpush1.msra.mxu0 0.0
        %3456 = vmatprep.subr.mxu0 0.0
        %3457 = vmatpush1.msra.mxu0 0.0
        %3458 = vmatprep.subr.mxu0 0.0
        %3459 = vmatpush1.msra.mxu0 0.0
        %3460 = vmatprep.subr.mxu0 0.0
        %3461 = vmatpush1.msra.mxu0 0.0
        %3462 = vmatprep.subr.mxu0 0.0
        %3463 = vmatpush1.msra.mxu0 0.0
        %3464 = vmatprep.subr.mxu0 0.0
        %3465 = vmatpush1.msra.mxu0 0.0
        %3466 = vmatprep.subr.mxu0 0.0
        %3467 = vmatpush1.msra.mxu0 0.0
        %3468 = vmatprep.subr.mxu0 0.0
        %3469 = vmatpush1.msra.mxu0 0.0
        %3470 = vmatprep.subr.mxu0 0.0
        %3471 = vmatpush1.msra.mxu0 0.0
        %3472 = vmatprep.subr.mxu0 0.0
        %3473 = vmatpush1.msra.mxu0 0.0
        %3474 = vmatprep.subr.mxu0 0.0
        %3475 = vmatpush1.msra.mxu0 0.0
        %3476 = vmatprep.subr.mxu0 0.0
        %3477 = vmatpush1.msra.mxu0 0.0
        %3478 = vmatprep.subr.mxu0 0.0
        %3479 = vmatpush1.msra.mxu0 0.0
        %3480 = vmatprep.subr.mxu0 0.0
        %3481 = vmatpush1.msra.mxu0 0.0
        %3482 = vmatprep.subr.mxu0 0.0
        %3483 = vmatpush1.msra.mxu0 0.0
        %3484 = vmatprep.subr.mxu0 0.0
        %3485 = vmatpush1.msra.mxu0 0.0
        %3486 = vmatprep.mubr.f32.mxu0 0.0
        %3487 = vmatmul.mubr.f32.gmra.mrb[0].mxu0 %v3420
        %v3488 = vpop.f32.mrb[0].mxu0
        %v3489 = vadd.f32 0.0, %v3488
        %v3490 = vpop.f32.mrb[0].mxu0
        %v3491 = vadd.f32 0.0, %v3490
        %3492 = vdwg.mxu0
        %v3493 = vadd.f32 %v3408, %v3489
        %v3494 = vadd.f32 %v3409, %v3491
        %v3495 = vadd.f32 %v3493, %v3494
        %3496 = vadd.xlane.f32.xlu0 %v3495
        %v3497 = vpop.xlane.xlu0 %3496
        %v3498 = vmul.f32 %v3497, %v1137
        %v3499 = vsub.f32 %v3493, %v3498
        %v3500 = vsub.f32 %v3494, %v3498
        %v3501 = vmul.f32 %v3499, %v3499
        %v3502 = vmul.f32 %v3500, %v3500
        %v3503 = vadd.f32 %v3501, %v3502
        %3504 = vadd.xlane.f32.xlu0 %v3503
        %v3505 = vpop.xlane.xlu0 %3504
        %v3506 = vmul.f32 %v3505, %v1137
        %v3507 = vadd.f32 %v3506, 1e-05
        %v3508 = vrsqrt.pop %v3507
        %v3509 = vmul.f32 %v328, %v3508
        %3511 = vset.pattern.permute.xlu0 0
        %3512 = vperm.xlu0 %3511, %v3509
        %v3513 = vpop.permute.xlu0 %3512
        %v3515 = vmul.f32 %v3499, %v3513
        %v3516 = vmul.f32 %v3500, %v3513
        %v3517 = vadd.f32 %v3515, %v1952
        %v3518 = vadd.f32 %v3516, %v1952
        %v3519 = vadd.f32 %v1961, %v3517
        %v3520 = vadd.f32 %v1962, %v3518
        %s3521 = scalar_lea.vmem %s274, 16 [#allocation2]
        %3522 = vst [vmem:[%s3521] sm:$0xff] %v3519
        %3523 = vst [vmem:[%s3521 + $0x8] sm:$0xff] %v3520
        %s3524 = sand.u32 %s181, 1
        %s3525 = scalar_lea.sflag [#allocation3], %s3524
        %s3526 = sand.u32 %s181, 1
        %s3527 = smul.addr %s3526, 32
        %s3528 = scalar_lea.vmem [#allocation2], %s3527
        // Predicated region
        $region49: #{tpu_custom_call.1} parent=47 // pred_check
          %p3529 = pneg %p191
        $region50: #{tpu_custom_call.1} parent=47 // pred_check_branch
          %3531 = sbr.rel (%p3529) target = $region52
        $region51: #{tpu_custom_call.1} parent=47 // pred_region
          %s3532 = smul.u32 2, %s21
          %s3534 = ssub.s32 512, 512
          %3535 = vsyncadd %s3525, %s3534
          %s3536 = smul.addr %s3532, 2
          %s3537 = smul.addr %s3536, 128
          %s3538 = scalar_lea.hbm %s7, %s3537
          %s3539 = sshll.u32 %s3528, 4
          %s3540 = int_to_ptr.vmem [resolvable:$true] %s3539
          %3545 = dma.vmem_to_hbm [thread:$0]  %s3540, 512, %s3538, %s3525, 256, 256, 16
        $region52: #{tpu_custom_call.1} parent=47 // pred_fallthru
          _
      $region48: #{tpu_custom_call.1} parent=5 // pred_fallthru
        _
      %p3546 = scmp.le.s32.totalorder 2, %s16
      // Predicated region
      $region53: #{tpu_custom_call.1} parent=5 // pred_check
        %p3547 = pneg %p3546
      $region54: #{tpu_custom_call.1} parent=5 // pred_check_branch
        %3549 = sbr.rel (%p3547) target = $region56
      $region55: #{tpu_custom_call.1} parent=5 // pred_region
        %s3550 = ssub.s32 %s16, 2
        // Predicated region
        $region57: #{tpu_custom_call.1} parent=55 // pred_check
          %p3551 = pneg %p197
        $region58: #{tpu_custom_call.1} parent=55 // pred_check_branch
          %3553 = sbr.rel (%p3551) target = $region60
        $region59: #{tpu_custom_call.1} parent=55 // pred_region
          %s3554 = sand.u32 %s182, 1
          %s3555 = scalar_lea.sflag [#allocation3], %s3554
          %s3556 = sand.u32 %s182, 1
          %s3557 = smul.addr %s3556, 32
          %s3558 = scalar_lea.vmem [#allocation2], %s3557
          %3559 = dma.done %s3555, 512
        $region60: #{tpu_custom_call.1} parent=55 // pred_fallthru
          _
      $region56: #{tpu_custom_call.1} parent=5 // pred_fallthru
        _
    $region6: #{tpu_custom_call.1} parent=1 // loop_footer
      %s20 = sadd.s32 1, %s16
    $region7: #{tpu_custom_call.1} parent=1 // loop_footer_branch
      %15 = sbr.rel target = $region3
    $region8: #{tpu_custom_call.1} parent=1 // loop_exit
      _
    %3560 = vsyncpa [#allocation3], 1
    %s3561 = scalar_lea.sflag [#allocation3], 1
    %3562 = vsyncpa %s3561, 1

</llo_original>
